<compile_context>
chip_gen: v7x
topology: tpu7x:2x2x1
jax: 0.10.0
libtpu: 0.0.40
codegen_flags: <defaults>
</compile_context>

<pallas_src>
import functools
import math

import jax
import jax.numpy as jnp
from jax.experimental import pallas as pl
from jax.experimental.pallas import tpu as pltpu

BN_EPS = 1e-5


# ---------------------------------------------------------------------------
# Fused conv + BN(+residual)(+ReLU) Pallas kernel
# ---------------------------------------------------------------------------

def _conv_bn_kernel(x_ref, w_ref, scale_ref, shift_ref, *rest,
                    kh_taps, kw_taps, stride, ho, wo, act, has_residual):
    """One grid step = one full sample image.

    x_ref:     (s*s, Hq, Wq, Cin)  bf16 -- phase-decomposed, zero-padded activation
    w_ref:     (KH, KW*Cin, Cout)  bf16 -- whole weight tensor, resident (constant idx)
    scale/shift: (1, Cout)         f32  -- folded eval-mode BatchNorm
    res_ref:   (Ho*Wo, Cout)            -- optional residual (fused add)
    o_ref:     (Ho*Wo, Cout)            -- written exactly once in the epilogue
    """
    if has_residual:
        res_ref, o_ref = rest
    else:
        (o_ref,) = rest

    s = stride
    cin = x_ref.shape[-1]
    cout = o_ref.shape[-1]

    # Load each phase sub-image once.  For stride=1 this is just the padded image.
    phases = [x_ref[p] for p in range(s * s)]          # each (Hq, Wq, cin) bf16

    acc = None
    for kh in range(kh_taps):                          # KH unrolled in-kernel
        pieces = []
        for kw in range(kw_taps):
            ph = phases[(kh % s) * s + (kw % s)]
            # unit-stride static slices only (striding was handled in the wrapper)
            pieces.append(ph[kh // s: kh // s + ho, kw // s: kw // s + wo, :])
        # Fold the KW taps into the contraction: K = KW*Cin per dot.
        a = pieces[0] if kw_taps == 1 else jnp.concatenate(pieces, axis=-1)
        a = a.reshape(ho * wo, kw_taps * cin)          # (M, K) bf16, M = Ho*Wo
        part = jnp.dot(a, w_ref[kh], preferred_element_type=jnp.float32)
        acc = part if acc is None else acc + part      # f32 accumulation

    y = acc * scale_ref[...] + shift_ref[...]          # BN affine (eval mode)
    if has_residual:
        y = y + res_ref[...].astype(jnp.float32)
    if act == "relu":
        y = jnp.maximum(y, 0.0)
    o_ref[...] = y.astype(o_ref.dtype)                 # single store


def conv_bn_act(x, w, scale, shift, *, stride=1, padding=1, act=None,
                residual=None, out_dtype=jnp.float32):
    """NHWC conv (bias=False) + eval BN affine [+ residual add] [+ ReLU], fused.

    x: (N, H, W, Cin);  w: (Cout, Cin, KH, KW) (PyTorch OIHW);
    residual (optional): (N, Ho, Wo, Cout);  returns (N, Ho, Wo, Cout) of `out_dtype`.
    """
    N, H, W, Cin = x.shape
    Cout, Cin2, KH, KW = w.shape
    assert Cin == Cin2
    Ho = (H + 2 * padding - KH) // stride + 1
    Wo = (W + 2 * padding - KW) // stride + 1

    # bf16 MXU operands; cast + pad is a single fused XLA pass over the activation.
    xp = x.astype(jnp.bfloat16)
    if padding:
        xp = jnp.pad(xp, ((0, 0), (padding, padding), (padding, padding), (0, 0)))
    Hp, Wp = xp.shape[1], xp.shape[2]

    # Phase-decompose for strided convs so the kernel only needs unit-stride slices.
    s = stride
    pad_h, pad_w = (-Hp) % s, (-Wp) % s
    if pad_h or pad_w:
        xp = jnp.pad(xp, ((0, 0), (0, pad_h), (0, pad_w), (0, 0)))
    Hq, Wq = xp.shape[1] // s, xp.shape[2] // s
    if s == 1:
        xq = xp.reshape(N, 1, Hq, Wq, Cin)                       # free metadata reshape
    else:
        xq = (xp.reshape(N, Hq, s, Wq, s, Cin)
                .transpose(0, 2, 4, 1, 3, 5)
                .reshape(N, s * s, Hq, Wq, Cin))                 # one-time deinterleave

    # (Cout, Cin, KH, KW) -> (KH, KW*Cin, Cout): K index = kw*Cin + c, matching the
    # in-kernel concat order.  Whole tensor resident in VMEM (constant index_map).
    w_r = jnp.transpose(w, (2, 3, 1, 0)).reshape(KH, KW * Cin, Cout).astype(jnp.bfloat16)
    scale2 = scale.reshape(1, Cout).astype(jnp.float32)
    shift2 = shift.reshape(1, Cout).astype(jnp.float32)

    has_residual = residual is not None
    in_specs = [
        pl.BlockSpec((None, s * s, Hq, Wq, Cin), lambda n: (n, 0, 0, 0, 0)),
        pl.BlockSpec((KH, KW * Cin, Cout), lambda n: (0, 0, 0)),   # resident weights
        pl.BlockSpec((1, Cout), lambda n: (0, 0)),
        pl.BlockSpec((1, Cout), lambda n: (0, 0)),
    ]
    inputs = [xq, w_r, scale2, shift2]
    if has_residual:
        in_specs.append(pl.BlockSpec((None, Ho * Wo, Cout), lambda n: (n, 0, 0)))
        inputs.append(residual.reshape(N, Ho * Wo, Cout))

    out_bytes = N * Ho * Wo * Cout * jnp.dtype(out_dtype).itemsize
    bytes_accessed = int(xq.size * 2 + w_r.size * 2 + scale2.size * 4 + shift2.size * 4
                         + (residual.size * residual.dtype.itemsize if has_residual else 0)
                         + out_bytes)
    cost = pl.CostEstimate(flops=2 * N * Ho * Wo * KH * KW * Cin * Cout,
                           transcendentals=0, bytes_accessed=bytes_accessed)

    out = pl.pallas_call(
        functools.partial(_conv_bn_kernel, kh_taps=KH, kw_taps=KW, stride=stride,
                          ho=Ho, wo=Wo, act=act, has_residual=has_residual),
        out_shape=jax.ShapeDtypeStruct((N, Ho * Wo, Cout), out_dtype),
        grid=(N,),
        in_specs=in_specs,
        out_specs=pl.BlockSpec((None, Ho * Wo, Cout), lambda n: (n, 0, 0)),
        compiler_params=pltpu.CompilerParams(
            dimension_semantics=("parallel",),          # shardable across v7x's 2 TCs
            vmem_limit_bytes=48 * 1024 * 1024),         # headroom vs v7x 64 MiB VMEM
        cost_estimate=cost,
    )(*inputs)
    return out.reshape(N, Ho, Wo, Cout)                 # free reshape (row-major)


# ---------------------------------------------------------------------------
# BasicBlock forward
# ---------------------------------------------------------------------------

def basic_block_forward(x_nchw, params):
    """BasicBlock forward (eval-mode BN). x: (N, Cin, H, W) -> (N, planes, Ho, Wo)."""
    # NCHW <-> NHWC transposes kept only to match the PyTorch interface; a real
    # network should stay NHWC end-to-end to avoid these HBM passes.
    x = jnp.transpose(x_nchw, (0, 2, 3, 1)).astype(jnp.float32)
    stride = params["stride"]

    # conv1(stride) + bn1 + relu, emitted directly as bf16 (feeds conv2's MXU).
    out = conv_bn_act(x, params["conv1_w"], *params["bn1"],
                      stride=stride, padding=1, act="relu", out_dtype=jnp.bfloat16)

    # residual path: identity, or the canonical downsample = conv1x1(stride) + BN.
    # TODO(synk): `downsample` is an arbitrary caller-supplied nn.Module in PyTorch;
    # only the standard conv1x1+BN variant is implemented here.
    if params.get("down_w") is not None:
        residual = conv_bn_act(x, params["down_w"], *params["down_bn"],
                               stride=stride, padding=0, act=None,
                               out_dtype=jnp.bfloat16)
    else:
        residual = x   # f32 identity; added in f32 inside conv2's epilogue

    # conv2 + bn2 + residual-add + relu, all fused into one kernel epilogue.
    out = conv_bn_act(out, params["conv2_w"], *params["bn2"],
                      stride=1, padding=1, act="relu", residual=residual,
                      out_dtype=jnp.float32)
    return jnp.transpose(out, (0, 3, 1, 2))             # NHWC -> NCHW


# ---------------------------------------------------------------------------
# Pure-JAX reference (correctness check) and parameter construction
# ---------------------------------------------------------------------------

def ref_basic_block(x_nchw, params):
    x = jnp.transpose(x_nchw, (0, 2, 3, 1)).astype(jnp.float32)
    s = params["stride"]

    def conv(h, w, stride, pad):
        return jax.lax.conv_general_dilated(
            h, jnp.transpose(w, (2, 3, 1, 0)), (stride, stride),
            ((pad, pad), (pad, pad)),
            dimension_numbers=("NHWC", "HWIO", "NHWC"))

    sc1, sh1 = params["bn1"]
    out = jnp.maximum(conv(x, params["conv1_w"], s, 1) * sc1 + sh1, 0.0)
    if params.get("down_w") is not None:
        scd, shd = params["down_bn"]
        residual = conv(x, params["down_w"], s, 0) * scd + shd
    else:
        residual = x
    sc2, sh2 = params["bn2"]
    out = conv(out, params["conv2_w"], 1, 1) * sc2 + sh2 + residual
    return jnp.transpose(jnp.maximum(out, 0.0), (0, 3, 1, 2))


def make_bn(key, c):
    """Eval-mode BatchNorm folded to per-channel scale/shift (non-trivial stats)."""
    k1, k2, k3, k4 = jax.random.split(key, 4)
    gamma = 1.0 + 0.1 * jax.random.normal(k1, (c,), jnp.float32)
    beta = 0.1 * jax.random.normal(k2, (c,), jnp.float32)
    mean = 0.1 * jax.random.normal(k3, (c,), jnp.float32)
    var = jnp.abs(1.0 + 0.1 * jax.random.normal(k4, (c,), jnp.float32))
    scale = gamma / jnp.sqrt(var + BN_EPS)
    shift = beta - mean * scale
    return scale, shift


if __name__ == "__main__":
    key = jax.random.PRNGKey(0)
    kx, kw1, kw2, kb1, kb2, kw3, kw4, kb3, kb4, kwd, kbd = jax.random.split(key, 11)

    N, C, H, W = 2, 64, 16, 16
    x = jax.random.normal(kx, (N, C, H, W), jnp.float32)
    std = math.sqrt(2.0 / (C * 9))

    # Case 1: module defaults -- stride=1, downsample=None, inplanes == planes.
    params1 = {
        "stride": 1,
        "conv1_w": std * jax.random.normal(kw1, (C, C, 3, 3), jnp.float32),
        "conv2_w": std * jax.random.normal(kw2, (C, C, 3, 3), jnp.float32),
        "bn1": make_bn(kb1, C),
        "bn2": make_bn(kb2, C),
        "down_w": None,
    }
    # Case 2: stride=2 with the canonical conv1x1+BN downsample, 64 -> 128 planes.
    P = 128
    std2 = math.sqrt(2.0 / (P * 9))
    params2 = {
        "stride": 2,
        "conv1_w": std * jax.random.normal(kw3, (P, C, 3, 3), jnp.float32),
        "conv2_w": std2 * jax.random.normal(kw4, (P, P, 3, 3), jnp.float32),
        "bn1": make_bn(kb3, P),
        "bn2": make_bn(kb4, P),
        "down_w": std * jax.random.normal(kwd, (P, C, 1, 1), jnp.float32),
        "down_bn": make_bn(kbd, P),
    }

    for name, params, expect in (("identity", params1, (N, C, H, W)),
                                 ("downsample", params2, (N, P, H // 2, W // 2))):
        fwd = jax.jit(lambda inp, p=params: basic_block_forward(inp, p))
        out = jax.block_until_ready(fwd(x))
        assert out.shape == expect, (name, out.shape)
        assert bool(jnp.all(jnp.isfinite(out))), name
        ref = ref_basic_block(x, params)
        rel_err = float(jnp.linalg.norm(out - ref) / (jnp.linalg.norm(ref) + 1e-8))
        assert rel_err < 5e-2, f"{name}: relative error too large: {rel_err}"

    print("KERNEL_OK")
</pallas_src>

<mosaic_0001>
module attributes {stable_mosaic.version = 11 : i64} {
  func.func @_conv_bn_kernel(%arg0: i32, %arg1: memref<1x1x18x18x64xbf16, #tpu.memory_space<vmem>>, %arg2: memref<3x192x64xbf16, #tpu.memory_space<vmem>>, %arg3: memref<1x64xf32, #tpu.memory_space<vmem>>, %arg4: memref<1x64xf32, #tpu.memory_space<vmem>>, %arg5: memref<1x256x64xf32, #tpu.memory_space<vmem>>, %arg6: memref<1x256x64xf32, #tpu.memory_space<vmem>>) attributes {dimension_semantics = [#tpu.dimension_semantics<parallel>], iteration_bounds = array<i64: 2>, scalar_prefetch = 0 : i64, scratch_operands = 0 : i64, tpu.core_type = #tpu.core_type<tc>, window_params = [{transform_indices = @transform_0, window_bounds = array<i64: 1, 1, 18, 18, 64>}, {pipeline_mode = #tpu.pipeline_mode<synchronous>, transform_indices = @transform_1, window_bounds = array<i64: 3, 192, 64>}, {pipeline_mode = #tpu.pipeline_mode<synchronous>, transform_indices = @transform_2, window_bounds = array<i64: 1, 64>}, {pipeline_mode = #tpu.pipeline_mode<synchronous>, transform_indices = @transform_3, window_bounds = array<i64: 1, 64>}, {transform_indices = @transform_4, window_bounds = array<i64: 1, 256, 64>}, {transform_indices = @transform_5, window_bounds = array<i64: 1, 256, 64>}]} {
    %c0 = arith.constant 0 : index
    %c0_0 = arith.constant 0 : index
    %c0_1 = arith.constant 0 : index
    %c0_2 = arith.constant 0 : index
    %c0_3 = arith.constant 0 : index
    %0 = vector.load %arg1[%c0, %c0_0, %c0_1, %c0_2, %c0_3] : memref<1x1x18x18x64xbf16, #tpu.memory_space<vmem>>, vector<1x1x18x18x64xbf16>
    %1 = vector.shape_cast %0 : vector<1x1x18x18x64xbf16> to vector<18x18x64xbf16>
    %2 = vector.extract_strided_slice %1 {offsets = [0, 0, 0], sizes = [16, 16, 64], strides = [1, 1, 1]} : vector<18x18x64xbf16> to vector<16x16x64xbf16>
    %3 = vector.extract_strided_slice %1 {offsets = [0, 1, 0], sizes = [16, 16, 64], strides = [1, 1, 1]} : vector<18x18x64xbf16> to vector<16x16x64xbf16>
    %4 = vector.extract_strided_slice %1 {offsets = [0, 2, 0], sizes = [16, 16, 64], strides = [1, 1, 1]} : vector<18x18x64xbf16> to vector<16x16x64xbf16>
    %5 = tpu.concatenate %2, %3, %4 in 2 : vector<16x16x64xbf16>, vector<16x16x64xbf16>, vector<16x16x64xbf16> -> vector<16x16x192xbf16>
    %6 = vector.shape_cast %5 : vector<16x16x192xbf16> to vector<256x192xbf16>
    %c0_4 = arith.constant 0 : index
    %c0_5 = arith.constant 0 : index
    %c0_6 = arith.constant 0 : index
    %7 = vector.load %arg2[%c0_4, %c0_5, %c0_6] : memref<3x192x64xbf16, #tpu.memory_space<vmem>>, vector<1x192x64xbf16>
    %8 = vector.shape_cast %7 : vector<1x192x64xbf16> to vector<192x64xbf16>
    %cst = arith.constant dense<0.000000e+00> : vector<256x64xf32>
    %9 = tpu.matmul %6, %8, %cst {dimension_numbers = #tpu.dot_dimension_numbers<[1], [0], [0], [1], [0, 0, 1, 1], [], []>} : vector<256x192xbf16>, vector<192x64xbf16>, vector<256x64xf32> -> vector<256x64xf32>
    %10 = vector.extract_strided_slice %1 {offsets = [1, 0, 0], sizes = [16, 16, 64], strides = [1, 1, 1]} : vector<18x18x64xbf16> to vector<16x16x64xbf16>
    %11 = vector.extract_strided_slice %1 {offsets = [1, 1, 0], sizes = [16, 16, 64], strides = [1, 1, 1]} : vector<18x18x64xbf16> to vector<16x16x64xbf16>
    %12 = vector.extract_strided_slice %1 {offsets = [1, 2, 0], sizes = [16, 16, 64], strides = [1, 1, 1]} : vector<18x18x64xbf16> to vector<16x16x64xbf16>
    %13 = tpu.concatenate %10, %11, %12 in 2 : vector<16x16x64xbf16>, vector<16x16x64xbf16>, vector<16x16x64xbf16> -> vector<16x16x192xbf16>
    %14 = vector.shape_cast %13 : vector<16x16x192xbf16> to vector<256x192xbf16>
    %c1 = arith.constant 1 : index
    %c0_7 = arith.constant 0 : index
    %c0_8 = arith.constant 0 : index
    %15 = vector.load %arg2[%c1, %c0_7, %c0_8] : memref<3x192x64xbf16, #tpu.memory_space<vmem>>, vector<1x192x64xbf16>
    %16 = vector.shape_cast %15 : vector<1x192x64xbf16> to vector<192x64xbf16>
    %cst_9 = arith.constant dense<0.000000e+00> : vector<256x64xf32>
    %17 = tpu.matmul %14, %16, %cst_9 {dimension_numbers = #tpu.dot_dimension_numbers<[1], [0], [0], [1], [0, 0, 1, 1], [], []>} : vector<256x192xbf16>, vector<192x64xbf16>, vector<256x64xf32> -> vector<256x64xf32>
    %18 = arith.addf %9, %17 : vector<256x64xf32>
    %19 = vector.extract_strided_slice %1 {offsets = [2, 0, 0], sizes = [16, 16, 64], strides = [1, 1, 1]} : vector<18x18x64xbf16> to vector<16x16x64xbf16>
    %20 = vector.extract_strided_slice %1 {offsets = [2, 1, 0], sizes = [16, 16, 64], strides = [1, 1, 1]} : vector<18x18x64xbf16> to vector<16x16x64xbf16>
    %21 = vector.extract_strided_slice %1 {offsets = [2, 2, 0], sizes = [16, 16, 64], strides = [1, 1, 1]} : vector<18x18x64xbf16> to vector<16x16x64xbf16>
    %22 = tpu.concatenate %19, %20, %21 in 2 : vector<16x16x64xbf16>, vector<16x16x64xbf16>, vector<16x16x64xbf16> -> vector<16x16x192xbf16>
    %23 = vector.shape_cast %22 : vector<16x16x192xbf16> to vector<256x192xbf16>
    %c2 = arith.constant 2 : index
    %c0_10 = arith.constant 0 : index
    %c0_11 = arith.constant 0 : index
    %24 = vector.load %arg2[%c2, %c0_10, %c0_11] : memref<3x192x64xbf16, #tpu.memory_space<vmem>>, vector<1x192x64xbf16>
    %25 = vector.shape_cast %24 : vector<1x192x64xbf16> to vector<192x64xbf16>
    %cst_12 = arith.constant dense<0.000000e+00> : vector<256x64xf32>
    %26 = tpu.matmul %23, %25, %cst_12 {dimension_numbers = #tpu.dot_dimension_numbers<[1], [0], [0], [1], [0, 0, 1, 1], [], []>} : vector<256x192xbf16>, vector<192x64xbf16>, vector<256x64xf32> -> vector<256x64xf32>
    %27 = arith.addf %18, %26 : vector<256x64xf32>
    %c0_13 = arith.constant 0 : index
    %c0_14 = arith.constant 0 : index
    %28 = vector.load %arg3[%c0_13, %c0_14] : memref<1x64xf32, #tpu.memory_space<vmem>>, vector<1x64xf32>
    %29 = vector.broadcast %28 : vector<1x64xf32> to vector<256x64xf32>
    %30 = arith.mulf %27, %29 : vector<256x64xf32>
    %c0_15 = arith.constant 0 : index
    %c0_16 = arith.constant 0 : index
    %31 = vector.load %arg4[%c0_15, %c0_16] : memref<1x64xf32, #tpu.memory_space<vmem>>, vector<1x64xf32>
    %32 = vector.broadcast %31 : vector<1x64xf32> to vector<256x64xf32>
    %33 = arith.addf %30, %32 : vector<256x64xf32>
    %c0_17 = arith.constant 0 : index
    %c0_18 = arith.constant 0 : index
    %c0_19 = arith.constant 0 : index
    %34 = vector.load %arg5[%c0_17, %c0_18, %c0_19] : memref<1x256x64xf32, #tpu.memory_space<vmem>>, vector<1x256x64xf32>
    %35 = vector.shape_cast %34 : vector<1x256x64xf32> to vector<256x64xf32>
    %36 = arith.addf %33, %35 : vector<256x64xf32>
    %cst_20 = arith.constant 0.000000e+00 : f32
    %37 = vector.broadcast %cst_20 : f32 to vector<256x64xf32>
    %38 = arith.maximumf %36, %37 : vector<256x64xf32>
    %c0_21 = arith.constant 0 : index
    %c0_22 = arith.constant 0 : index
    %c0_23 = arith.constant 0 : index
    %39 = vector.load %arg6[%c0_21, %c0_22, %c0_23] : memref<1x256x64xf32, #tpu.memory_space<vmem>>, vector<1x256x64xf32>
    %40 = vector.shape_cast %39 : vector<1x256x64xf32> to vector<256x64xf32>
    %41 = vector.shape_cast %38 : vector<256x64xf32> to vector<1x256x64xf32>
    tpu.vector_store %arg6[%c0_21, %c0_22, %c0_23], %41 {strides = array<i32>} : memref<1x256x64xf32, #tpu.memory_space<vmem>>, vector<1x256x64xf32>,
    return
  }
  func.func @transform_0(%arg0: i32) -> (i32, i32, i32, i32, i32) {
    %c0_i32 = arith.constant 0 : i32
    %c0_i32_0 = arith.constant 0 : i32
    %c0_i32_1 = arith.constant 0 : i32
    %c0_i32_2 = arith.constant 0 : i32
    %c0_i32_3 = arith.constant 0 : i32
    return %arg0, %c0_i32, %c0_i32_0, %c0_i32_1, %c0_i32_2 : i32, i32, i32, i32, i32
  }
  func.func @transform_1(%arg0: i32) -> (i32, i32, i32) {
    %c0_i32 = arith.constant 0 : i32
    %c0_i32_0 = arith.constant 0 : i32
    %c0_i32_1 = arith.constant 0 : i32
    %c0_i32_2 = arith.constant 0 : i32
    return %c0_i32, %c0_i32_0, %c0_i32_1 : i32, i32, i32
  }
  func.func @transform_2(%arg0: i32) -> (i32, i32) {
    %c0_i32 = arith.constant 0 : i32
    %c0_i32_0 = arith.constant 0 : i32
    %c0_i32_1 = arith.constant 0 : i32
    return %c0_i32, %c0_i32_0 : i32, i32
  }
  func.func @transform_3(%arg0: i32) -> (i32, i32) {
    %c0_i32 = arith.constant 0 : i32
    %c0_i32_0 = arith.constant 0 : i32
    %c0_i32_1 = arith.constant 0 : i32
    return %c0_i32, %c0_i32_0 : i32, i32
  }
  func.func @transform_4(%arg0: i32) -> (i32, i32, i32) {
    %c0_i32 = arith.constant 0 : i32
    %c0_i32_0 = arith.constant 0 : i32
    %c0_i32_1 = arith.constant 0 : i32
    return %arg0, %c0_i32, %c0_i32_0 : i32, i32, i32
  }
  func.func @transform_5(%arg0: i32) -> (i32, i32, i32) {
    %c0_i32 = arith.constant 0 : i32
    %c0_i32_0 = arith.constant 0 : i32
    %c0_i32_1 = arith.constant 0 : i32
    return %arg0, %c0_i32, %c0_i32_0 : i32, i32, i32
  }
}

module attributes {stable_mosaic.version = 11 : i64} {
  func.func @_conv_bn_kernel(%arg0: i32, %arg1: memref<1x1x18x18x64xbf16, #tpu.memory_space<vmem>>, %arg2: memref<3x192x64xbf16, #tpu.memory_space<vmem>>, %arg3: memref<1x64xf32, #tpu.memory_space<vmem>>, %arg4: memref<1x64xf32, #tpu.memory_space<vmem>>, %arg5: memref<1x256x64xbf16, #tpu.memory_space<vmem>>) attributes {dimension_semantics = [#tpu.dimension_semantics<parallel>], iteration_bounds = array<i64: 2>, scalar_prefetch = 0 : i64, scratch_operands = 0 : i64, tpu.core_type = #tpu.core_type<tc>, window_params = [{transform_indices = @transform_0, window_bounds = array<i64: 1, 1, 18, 18, 64>}, {pipeline_mode = #tpu.pipeline_mode<synchronous>, transform_indices = @transform_1, window_bounds = array<i64: 3, 192, 64>}, {pipeline_mode = #tpu.pipeline_mode<synchronous>, transform_indices = @transform_2, window_bounds = array<i64: 1, 64>}, {pipeline_mode = #tpu.pipeline_mode<synchronous>, transform_indices = @transform_3, window_bounds = array<i64: 1, 64>}, {transform_indices = @transform_4, window_bounds = array<i64: 1, 256, 64>}]} {
    %c0 = arith.constant 0 : index
    %c0_0 = arith.constant 0 : index
    %c0_1 = arith.constant 0 : index
    %c0_2 = arith.constant 0 : index
    %c0_3 = arith.constant 0 : index
    %0 = vector.load %arg1[%c0, %c0_0, %c0_1, %c0_2, %c0_3] : memref<1x1x18x18x64xbf16, #tpu.memory_space<vmem>>, vector<1x1x18x18x64xbf16>
    %1 = vector.shape_cast %0 : vector<1x1x18x18x64xbf16> to vector<18x18x64xbf16>
    %2 = vector.extract_strided_slice %1 {offsets = [0, 0, 0], sizes = [16, 16, 64], strides = [1, 1, 1]} : vector<18x18x64xbf16> to vector<16x16x64xbf16>
    %3 = vector.extract_strided_slice %1 {offsets = [0, 1, 0], sizes = [16, 16, 64], strides = [1, 1, 1]} : vector<18x18x64xbf16> to vector<16x16x64xbf16>
    %4 = vector.extract_strided_slice %1 {offsets = [0, 2, 0], sizes = [16, 16, 64], strides = [1, 1, 1]} : vector<18x18x64xbf16> to vector<16x16x64xbf16>
    %5 = tpu.concatenate %2, %3, %4 in 2 : vector<16x16x64xbf16>, vector<16x16x64xbf16>, vector<16x16x64xbf16> -> vector<16x16x192xbf16>
    %6 = vector.shape_cast %5 : vector<16x16x192xbf16> to vector<256x192xbf16>
    %c0_4 = arith.constant 0 : index
    %c0_5 = arith.constant 0 : index
    %c0_6 = arith.constant 0 : index
    %7 = vector.load %arg2[%c0_4, %c0_5, %c0_6] : memref<3x192x64xbf16, #tpu.memory_space<vmem>>, vector<1x192x64xbf16>
    %8 = vector.shape_cast %7 : vector<1x192x64xbf16> to vector<192x64xbf16>
    %cst = arith.constant dense<0.000000e+00> : vector<256x64xf32>
    %9 = tpu.matmul %6, %8, %cst {dimension_numbers = #tpu.dot_dimension_numbers<[1], [0], [0], [1], [0, 0, 1, 1], [], []>} : vector<256x192xbf16>, vector<192x64xbf16>, vector<256x64xf32> -> vector<256x64xf32>
    %10 = vector.extract_strided_slice %1 {offsets = [1, 0, 0], sizes = [16, 16, 64], strides = [1, 1, 1]} : vector<18x18x64xbf16> to vector<16x16x64xbf16>
    %11 = vector.extract_strided_slice %1 {offsets = [1, 1, 0], sizes = [16, 16, 64], strides = [1, 1, 1]} : vector<18x18x64xbf16> to vector<16x16x64xbf16>
    %12 = vector.extract_strided_slice %1 {offsets = [1, 2, 0], sizes = [16, 16, 64], strides = [1, 1, 1]} : vector<18x18x64xbf16> to vector<16x16x64xbf16>
    %13 = tpu.concatenate %10, %11, %12 in 2 : vector<16x16x64xbf16>, vector<16x16x64xbf16>, vector<16x16x64xbf16> -> vector<16x16x192xbf16>
    %14 = vector.shape_cast %13 : vector<16x16x192xbf16> to vector<256x192xbf16>
    %c1 = arith.constant 1 : index
    %c0_7 = arith.constant 0 : index
    %c0_8 = arith.constant 0 : index
    %15 = vector.load %arg2[%c1, %c0_7, %c0_8] : memref<3x192x64xbf16, #tpu.memory_space<vmem>>, vector<1x192x64xbf16>
    %16 = vector.shape_cast %15 : vector<1x192x64xbf16> to vector<192x64xbf16>
    %cst_9 = arith.constant dense<0.000000e+00> : vector<256x64xf32>
    %17 = tpu.matmul %14, %16, %cst_9 {dimension_numbers = #tpu.dot_dimension_numbers<[1], [0], [0], [1], [0, 0, 1, 1], [], []>} : vector<256x192xbf16>, vector<192x64xbf16>, vector<256x64xf32> -> vector<256x64xf32>
    %18 = arith.addf %9, %17 : vector<256x64xf32>
    %19 = vector.extract_strided_slice %1 {offsets = [2, 0, 0], sizes = [16, 16, 64], strides = [1, 1, 1]} : vector<18x18x64xbf16> to vector<16x16x64xbf16>
    %20 = vector.extract_strided_slice %1 {offsets = [2, 1, 0], sizes = [16, 16, 64], strides = [1, 1, 1]} : vector<18x18x64xbf16> to vector<16x16x64xbf16>
    %21 = vector.extract_strided_slice %1 {offsets = [2, 2, 0], sizes = [16, 16, 64], strides = [1, 1, 1]} : vector<18x18x64xbf16> to vector<16x16x64xbf16>
    %22 = tpu.concatenate %19, %20, %21 in 2 : vector<16x16x64xbf16>, vector<16x16x64xbf16>, vector<16x16x64xbf16> -> vector<16x16x192xbf16>
    %23 = vector.shape_cast %22 : vector<16x16x192xbf16> to vector<256x192xbf16>
    %c2 = arith.constant 2 : index
    %c0_10 = arith.constant 0 : index
    %c0_11 = arith.constant 0 : index
    %24 = vector.load %arg2[%c2, %c0_10, %c0_11] : memref<3x192x64xbf16, #tpu.memory_space<vmem>>, vector<1x192x64xbf16>
    %25 = vector.shape_cast %24 : vector<1x192x64xbf16> to vector<192x64xbf16>
    %cst_12 = arith.constant dense<0.000000e+00> : vector<256x64xf32>
    %26 = tpu.matmul %23, %25, %cst_12 {dimension_numbers = #tpu.dot_dimension_numbers<[1], [0], [0], [1], [0, 0, 1, 1], [], []>} : vector<256x192xbf16>, vector<192x64xbf16>, vector<256x64xf32> -> vector<256x64xf32>
    %27 = arith.addf %18, %26 : vector<256x64xf32>
    %c0_13 = arith.constant 0 : index
    %c0_14 = arith.constant 0 : index
    %28 = vector.load %arg3[%c0_13, %c0_14] : memref<1x64xf32, #tpu.memory_space<vmem>>, vector<1x64xf32>
    %29 = vector.broadcast %28 : vector<1x64xf32> to vector<256x64xf32>
    %30 = arith.mulf %27, %29 : vector<256x64xf32>
    %c0_15 = arith.constant 0 : index
    %c0_16 = arith.constant 0 : index
    %31 = vector.load %arg4[%c0_15, %c0_16] : memref<1x64xf32, #tpu.memory_space<vmem>>, vector<1x64xf32>
    %32 = vector.broadcast %31 : vector<1x64xf32> to vector<256x64xf32>
    %33 = arith.addf %30, %32 : vector<256x64xf32>
    %cst_17 = arith.constant 0.000000e+00 : f32
    %34 = vector.broadcast %cst_17 : f32 to vector<256x64xf32>
    %35 = arith.maximumf %33, %34 : vector<256x64xf32>
    %36 = arith.truncf %35 : vector<256x64xf32> to vector<256x64xbf16>
    %c0_18 = arith.constant 0 : index
    %c0_19 = arith.constant 0 : index
    %c0_20 = arith.constant 0 : index
    %37 = vector.load %arg5[%c0_18, %c0_19, %c0_20] : memref<1x256x64xbf16, #tpu.memory_space<vmem>>, vector<1x256x64xbf16>
    %38 = vector.shape_cast %37 : vector<1x256x64xbf16> to vector<256x64xbf16>
    %39 = vector.shape_cast %36 : vector<256x64xbf16> to vector<1x256x64xbf16>
    tpu.vector_store %arg5[%c0_18, %c0_19, %c0_20], %39 {strides = array<i32>} : memref<1x256x64xbf16, #tpu.memory_space<vmem>>, vector<1x256x64xbf16>,
    return
  }
  func.func @transform_0(%arg0: i32) -> (i32, i32, i32, i32, i32) {
    %c0_i32 = arith.constant 0 : i32
    %c0_i32_0 = arith.constant 0 : i32
    %c0_i32_1 = arith.constant 0 : i32
    %c0_i32_2 = arith.constant 0 : i32
    %c0_i32_3 = arith.constant 0 : i32
    return %arg0, %c0_i32, %c0_i32_0, %c0_i32_1, %c0_i32_2 : i32, i32, i32, i32, i32
  }
  func.func @transform_1(%arg0: i32) -> (i32, i32, i32) {
    %c0_i32 = arith.constant 0 : i32
    %c0_i32_0 = arith.constant 0 : i32
    %c0_i32_1 = arith.constant 0 : i32
    %c0_i32_2 = arith.constant 0 : i32
    return %c0_i32, %c0_i32_0, %c0_i32_1 : i32, i32, i32
  }
  func.func @transform_2(%arg0: i32) -> (i32, i32) {
    %c0_i32 = arith.constant 0 : i32
    %c0_i32_0 = arith.constant 0 : i32
    %c0_i32_1 = arith.constant 0 : i32
    return %c0_i32, %c0_i32_0 : i32, i32
  }
  func.func @transform_3(%arg0: i32) -> (i32, i32) {
    %c0_i32 = arith.constant 0 : i32
    %c0_i32_0 = arith.constant 0 : i32
    %c0_i32_1 = arith.constant 0 : i32
    return %c0_i32, %c0_i32_0 : i32, i32
  }
  func.func @transform_4(%arg0: i32) -> (i32, i32, i32) {
    %c0_i32 = arith.constant 0 : i32
    %c0_i32_0 = arith.constant 0 : i32
    %c0_i32_1 = arith.constant 0 : i32
    return %arg0, %c0_i32, %c0_i32_0 : i32, i32, i32
  }
}

</mosaic_0001>

<llo_original>
// kernel: _lambda_.2
$region0: #{_lambda_.2}
  #allocation0 [shape = 'u32[]', space=smem, size = 0x4, offset = 0x4, fixed_abs, tag = 'smem constant byte address 0x4 - core index']
  #allocation1 [shape = 'u32[144,128]{1,0:T(1,128)}', space=vmem, size = 0x12000, scoped, tag = 'internal scratch']
  %s0 = inlined_call_operand.vmem [shape: bf16[2,1,18,18,64], index: 0, kind: input, shape index: {}]
  %s1 = inlined_call_operand.vmem [shape: bf16[3,192,64], index: 1, kind: input, shape index: {}]
  %s2 = inlined_call_operand.vmem [shape: f32[1,64], index: 2, kind: input, shape index: {}]
  %s3 = inlined_call_operand.vmem [shape: f32[1,64], index: 3, kind: input, shape index: {}]
  %s4 = inlined_call_operand.vmem [shape: bf16[2,256,64], index: 4, kind: output, shape index: {}]
  %s5 = sld [smem:[#allocation0]]
  $region49: #{_lambda_.2} parent=0
    _
  %s7 = ssub.s32 1, %s5
  %s8 = scalar_select 0, %s7, %s5
  loop: start=0, step=1, limit=4
  $region2: #{_lambda_.2} parent=0 // loop_pre_header
    _
  $region3: #{_lambda_.2} parent=0 // loop_header
    %s10 = sphi 0, %s14
    %p11 = scmp.ge.s32.totalorder %s10, 4
    %s20 = sphi 0, %s22
    %s23 = sphi 0, %s20
    %s24 = sphi 0, %s23
    %s40 = sphi 0, %s24
    %s44 = sphi 0, %s44
    %s46 = sphi 0, %s44
    %s47 = sphi 0, %s46
    %s61 = sphi 0, %s47
    %s65 = sphi 0, %s65
    %s67 = sphi 0, %s65
    %s68 = sphi 0, %s67
    %s82 = sphi 0, %s68
    %s86 = sphi 0, %s86
    %s88 = sphi 0, %s86
    %s89 = sphi 0, %s88
    %s103 = sphi 0, %s89
    %s109 = sphi 0, %s111
    %s112 = sphi 0, %s109
    %s113 = sphi 0, %s112
    %s129 = sphi 0, %s113
  $region4: #{_lambda_.2} parent=0 // loop_header_branch
    %13 = sbr.rel (%p11) target = $region8
  $region5: #{_lambda_.2} parent=0 // loop_body
    %s15 = ssub.s32 %s10, 1
    %s16 = ssub.s32 %s10, 2
    %s17 = sadd.s32 %s10, 1
    %s18 = ssub.s32 %s10, %s17
    %p19 = scmp.eq.s32.totalorder %s18, 0
    %s21 = sadd.s32 %s20, 1
    %s22 = scalar_select %p19, %s20, %s21
    %p25 = pneg %p19
    %p26 = scmp.eq.s32.totalorder %s10, 1
    %p27 = por %p25, %p26
    %p28 = scmp.ne.s32.totalorder %s20, %s23
    %p29 = scmp.eq.s32.totalorder %s10, 0
    %p30 = por %p28, %p29
    %p31 = scmp.ne.s32.totalorder %s20, %s23
    %p32 = scmp.eq.s32.totalorder %s15, 1
    %p33 = por %p31, %p32
    %p34 = scmp.ne.s32.totalorder %s23, %s24
    %p35 = scmp.eq.s32.totalorder %s15, 0
    %p36 = por %p34, %p35
    %p37 = scmp.ne.s32.totalorder %s23, %s24
    %p38 = scmp.eq.s32.totalorder %s16, 1
    %p39 = por %p37, %p38
    %p41 = scmp.ne.s32.totalorder %s24, %s40
    %p42 = scmp.eq.s32.totalorder %s16, 0
    %p43 = por %p41, %p42
    %s45 = sadd.s32 %s44, 1
    %p48 = scmp.eq.s32.totalorder %s10, 1
    %p49 = scmp.ne.s32.totalorder %s44, %s46
    %p50 = scmp.eq.s32.totalorder %s10, 0
    %p51 = por %p49, %p50
    %p52 = scmp.ne.s32.totalorder %s44, %s46
    %p53 = scmp.eq.s32.totalorder %s15, 1
    %p54 = por %p52, %p53
    %p55 = scmp.ne.s32.totalorder %s46, %s47
    %p56 = scmp.eq.s32.totalorder %s15, 0
    %p57 = por %p55, %p56
    %p58 = scmp.ne.s32.totalorder %s46, %s47
    %p59 = scmp.eq.s32.totalorder %s16, 1
    %p60 = por %p58, %p59
    %p62 = scmp.ne.s32.totalorder %s47, %s61
    %p63 = scmp.eq.s32.totalorder %s16, 0
    %p64 = por %p62, %p63
    %s66 = sadd.s32 %s65, 1
    %p69 = scmp.eq.s32.totalorder %s10, 1
    %p70 = scmp.ne.s32.totalorder %s65, %s67
    %p71 = scmp.eq.s32.totalorder %s10, 0
    %p72 = por %p70, %p71
    %p73 = scmp.ne.s32.totalorder %s65, %s67
    %p74 = scmp.eq.s32.totalorder %s15, 1
    %p75 = por %p73, %p74
    %p76 = scmp.ne.s32.totalorder %s67, %s68
    %p77 = scmp.eq.s32.totalorder %s15, 0
    %p78 = por %p76, %p77
    %p79 = scmp.ne.s32.totalorder %s67, %s68
    %p80 = scmp.eq.s32.totalorder %s16, 1
    %p81 = por %p79, %p80
    %p83 = scmp.ne.s32.totalorder %s68, %s82
    %p84 = scmp.eq.s32.totalorder %s16, 0
    %p85 = por %p83, %p84
    %s87 = sadd.s32 %s86, 1
    %p90 = scmp.eq.s32.totalorder %s10, 1
    %p91 = scmp.ne.s32.totalorder %s86, %s88
    %p92 = scmp.eq.s32.totalorder %s10, 0
    %p93 = por %p91, %p92
    %p94 = scmp.ne.s32.totalorder %s86, %s88
    %p95 = scmp.eq.s32.totalorder %s15, 1
    %p96 = por %p94, %p95
    %p97 = scmp.ne.s32.totalorder %s88, %s89
    %p98 = scmp.eq.s32.totalorder %s15, 0
    %p99 = por %p97, %p98
    %p100 = scmp.ne.s32.totalorder %s88, %s89
    %p101 = scmp.eq.s32.totalorder %s16, 1
    %p102 = por %p100, %p101
    %p104 = scmp.ne.s32.totalorder %s89, %s103
    %p105 = scmp.eq.s32.totalorder %s16, 0
    %p106 = por %p104, %p105
    %s107 = ssub.s32 %s10, %s17
    %p108 = scmp.eq.s32.totalorder %s107, 0
    %s110 = sadd.s32 %s109, 1
    %s111 = scalar_select %p108, %s109, %s110
    %p114 = pneg %p108
    %p115 = scmp.eq.s32.totalorder %s10, 1
    %p116 = por %p114, %p115
    %p117 = scmp.ne.s32.totalorder %s109, %s112
    %p118 = scmp.eq.s32.totalorder %s10, 0
    %p119 = por %p117, %p118
    %p120 = scmp.ne.s32.totalorder %s109, %s112
    %p121 = scmp.eq.s32.totalorder %s15, 1
    %p122 = por %p120, %p121
    %p123 = scmp.ne.s32.totalorder %s112, %s113
    %p124 = scmp.eq.s32.totalorder %s15, 0
    %p125 = por %p123, %p124
    %p126 = scmp.ne.s32.totalorder %s112, %s113
    %p127 = scmp.eq.s32.totalorder %s16, 1
    %p128 = por %p126, %p127
    %p130 = scmp.ne.s32.totalorder %s113, %s129
    %p131 = scmp.eq.s32.totalorder %s16, 0
    %p132 = por %p130, %p131
    %p133 = scmp.le.s32.totalorder 1, %s10
    %p134 = scmp.lt.s32.totalorder %s10, 3
    %p135 = pnand %p133, %p134
    %p136 = pneg %p135
    // Predicated region
    $region9: #{_lambda_.2} parent=5 // pred_check
      _
    $region10: #{_lambda_.2} parent=5 // pred_check_branch
      %138 = sbr.rel (%p135) target = $region12
    $region11: #{_lambda_.2} parent=5 // pred_region
      %s139 = ssub.s32 %s10, 1
      // Predicated region
      $region13: #{_lambda_.2} parent=11 // pred_check
        %p140 = pneg %p57
      $region14: #{_lambda_.2} parent=11 // pred_check_branch
        %142 = sbr.rel (%p140) target = $region16
      $region15: #{_lambda_.2} parent=11 // pred_region
        _
      $region16: #{_lambda_.2} parent=11 // pred_fallthru
        _
      // Predicated region
      $region17: #{_lambda_.2} parent=11 // pred_check
        %p143 = pneg %p78
      $region18: #{_lambda_.2} parent=11 // pred_check_branch
        %145 = sbr.rel (%p143) target = $region20
      $region19: #{_lambda_.2} parent=11 // pred_region
        _
      $region20: #{_lambda_.2} parent=11 // pred_fallthru
        _
      // Predicated region
      $region21: #{_lambda_.2} parent=11 // pred_check
        %p146 = pneg %p99
      $region22: #{_lambda_.2} parent=11 // pred_check_branch
        %148 = sbr.rel (%p146) target = $region24
      $region23: #{_lambda_.2} parent=11 // pred_region
        _
      $region24: #{_lambda_.2} parent=11 // pred_fallthru
        _
    $region12: #{_lambda_.2} parent=5 // pred_fallthru
      _
    %p149 = scmp.lt.s32.totalorder %s10, 2
    // Predicated region
    $region25: #{_lambda_.2} parent=5 // pred_check
      %p150 = pneg %p149
    $region26: #{_lambda_.2} parent=5 // pred_check_branch
      %152 = sbr.rel (%p150) target = $region28
    $region27: #{_lambda_.2} parent=5 // pred_region
      // Predicated region
      $region29: #{_lambda_.2} parent=27 // pred_check
        %p153 = pneg %p30
      $region30: #{_lambda_.2} parent=27 // pred_check_branch
        %155 = sbr.rel (%p153) target = $region32
      $region31: #{_lambda_.2} parent=27 // pred_region
        %p156 = scmp.lt.s32.totalorder %s10, 1
        %s157 = scalar_select %p156, %s10, 1
        %s158 = smul.addr %s157, 54
        %s159 = smul.addr %s158, 4
        %s160 = scalar_lea.vmem %s0, %s159
      $region32: #{_lambda_.2} parent=27 // pred_fallthru
        _
    $region28: #{_lambda_.2} parent=5 // pred_fallthru
      _
    %p161 = scmp.le.s32.totalorder 1, %s10
    %p162 = scmp.lt.s32.totalorder %s10, 3
    %p163 = pnand %p161, %p162
    %p164 = pneg %p163
    // Predicated region
    $region33: #{_lambda_.2} parent=5 // pred_check
      _
    $region34: #{_lambda_.2} parent=5 // pred_check_branch
      %166 = sbr.rel (%p163) target = $region36
    $region35: #{_lambda_.2} parent=5 // pred_region
      %s167 = ssub.s32 %s10, 1
      %p168 = scmp.lt.s32.totalorder %s15, 1
      %s169 = scalar_select %p168, %s15, 1
      %s170 = smul.addr %s169, 54
      %s171 = smul.addr %s170, 4
      %s172 = scalar_lea.vmem %s0, %s171
      %p173 = pneg %p36
      %p174 = pneg %p33
      %p175 = pneg %p57
      %p176 = pneg %p54
      %p177 = pneg %p78
      %p178 = pneg %p75
      %p179 = pneg %p99
      %p180 = pneg %p96
      %p181 = pneg %p125
      %p182 = pneg %p122
      %p183 = scmp.lt.s32.totalorder %s15, 1
      %s184 = scalar_select %p183, %s15, 1
      %s185 = smul.addr %s184, 32
      %s186 = smul.addr %s185, 4
      %s187 = scalar_lea.vmem %s4, %s186
      %p188 = scmp.lt.s32.totalorder %s15, 1
      %s189 = scalar_select %p188, %s15, 1
      %s190 = smul.addr %s189, 54
      %s191 = smul.addr %s190, 4
      %s192 = scalar_lea.vmem %s0, %s191
      %p193 = scmp.lt.s32.totalorder %s15, 1
      %s194 = scalar_select %p193, %s15, 1
      %s195 = smul.addr %s194, 32
      %s196 = smul.addr %s195, 4
      %s197 = scalar_lea.vmem %s4, %s196
      %v199 = vld [vmem:[%s192] sm:$0xf]
      %v200 = vld [vmem:[%s192 + $0x4] sm:$0xf]
      %v201 = vld [vmem:[%s192 + $0x8] sm:$0x1]
      %v202 = vld [vmem:[%s192 + $0xc] sm:$0xf]
      %v203 = vld [vmem:[%s192 + $0x10] sm:$0xf]
      %v204 = vld [vmem:[%s192 + $0x14] sm:$0x1]
      %v205 = vld [vmem:[%s192 + $0x18] sm:$0xf]
      %v206 = vld [vmem:[%s192 + $0x1c] sm:$0xf]
      %v207 = vld [vmem:[%s192 + $0x20] sm:$0x1]
      %v208 = vld [vmem:[%s192 + $0x24] sm:$0xf]
      %v209 = vld [vmem:[%s192 + $0x28] sm:$0xf]
      %v210 = vld [vmem:[%s192 + $0x2c] sm:$0x1]
      %v211 = vld [vmem:[%s192 + $0x30] sm:$0xf]
      %v212 = vld [vmem:[%s192 + $0x34] sm:$0xf]
      %v213 = vld [vmem:[%s192 + $0x38] sm:$0x1]
      %v214 = vld [vmem:[%s192 + $0x3c] sm:$0xf]
      %v215 = vld [vmem:[%s192 + $0x40] sm:$0xf]
      %v216 = vld [vmem:[%s192 + $0x44] sm:$0x1]
      %v217 = vld [vmem:[%s192 + $0x48] sm:$0xf]
      %v218 = vld [vmem:[%s192 + $0x4c] sm:$0xf]
      %v219 = vld [vmem:[%s192 + $0x50] sm:$0x1]
      %v220 = vld [vmem:[%s192 + $0x54] sm:$0xf]
      %v221 = vld [vmem:[%s192 + $0x58] sm:$0xf]
      %v222 = vld [vmem:[%s192 + $0x5c] sm:$0x1]
      %v223 = vld [vmem:[%s192 + $0x60] sm:$0xf]
      %v224 = vld [vmem:[%s192 + $0x64] sm:$0xf]
      %v225 = vld [vmem:[%s192 + $0x68] sm:$0x1]
      %v226 = vld [vmem:[%s192 + $0x6c] sm:$0xf]
      %v227 = vld [vmem:[%s192 + $0x70] sm:$0xf]
      %v228 = vld [vmem:[%s192 + $0x74] sm:$0x1]
      %v229 = vld [vmem:[%s192 + $0x78] sm:$0xf]
      %v230 = vld [vmem:[%s192 + $0x7c] sm:$0xf]
      %v231 = vld [vmem:[%s192 + $0x80] sm:$0x1]
      %v232 = vld [vmem:[%s192 + $0x84] sm:$0xf]
      %v233 = vld [vmem:[%s192 + $0x88] sm:$0xf]
      %v234 = vld [vmem:[%s192 + $0x8c] sm:$0x1]
      %v235 = vld [vmem:[%s192 + $0x90] sm:$0xf]
      %v236 = vld [vmem:[%s192 + $0x94] sm:$0xf]
      %v237 = vld [vmem:[%s192 + $0x98] sm:$0x1]
      %v238 = vld [vmem:[%s192 + $0x9c] sm:$0xf]
      %v239 = vld [vmem:[%s192 + $0xa0] sm:$0xf]
      %v240 = vld [vmem:[%s192 + $0xa4] sm:$0x1]
      %v241 = vld [vmem:[%s192 + $0xa8] sm:$0xf]
      %v242 = vld [vmem:[%s192 + $0xac] sm:$0xf]
      %v243 = vld [vmem:[%s192 + $0xb0] sm:$0x1]
      %v244 = vld [vmem:[%s192 + $0xb4] sm:$0xf]
      %v245 = vld [vmem:[%s192 + $0xb8] sm:$0xf]
      %v246 = vld [vmem:[%s192 + $0xbc] sm:$0x1]
      %v247 = vld [vmem:[%s192 + $0xc0] sm:$0xf]
      %v248 = vld [vmem:[%s192 + $0xc4] sm:$0xf]
      %v249 = vld [vmem:[%s192 + $0xc8] sm:$0x1]
      %v250 = vld [vmem:[%s192 + $0xcc] sm:$0xf]
      %v251 = vld [vmem:[%s192 + $0xd0] sm:$0xf]
      %v252 = vld [vmem:[%s192 + $0xd4] sm:$0x1]
      %v285 = vunpack.c.l.b16 %v199
      %v286 = vunpack.c.l.b16 %v200
      %v287 = vunpack.c.l.b16 %v202
      %v288 = vunpack.c.l.b16 %v203
      %v289 = vunpack.c.l.b16 %v205
      %v290 = vunpack.c.l.b16 %v206
      %v291 = vunpack.c.l.b16 %v208
      %v292 = vunpack.c.l.b16 %v209
      %v293 = vunpack.c.l.b16 %v211
      %v294 = vunpack.c.l.b16 %v212
      %v295 = vunpack.c.l.b16 %v214
      %v296 = vunpack.c.l.b16 %v215
      %v297 = vunpack.c.l.b16 %v217
      %v298 = vunpack.c.l.b16 %v218
      %v299 = vunpack.c.l.b16 %v220
      %v300 = vunpack.c.l.b16 %v221
      %v301 = vunpack.c.l.b16 %v223
      %v302 = vunpack.c.l.b16 %v224
      %v303 = vunpack.c.l.b16 %v226
      %v304 = vunpack.c.l.b16 %v227
      %v305 = vunpack.c.l.b16 %v229
      %v306 = vunpack.c.l.b16 %v230
      %v307 = vunpack.c.l.b16 %v232
      %v308 = vunpack.c.l.b16 %v233
      %v309 = vunpack.c.l.b16 %v235
      %v310 = vunpack.c.l.b16 %v236
      %v311 = vunpack.c.l.b16 %v238
      %v312 = vunpack.c.l.b16 %v239
      %v313 = vunpack.c.l.b16 %v241
      %v314 = vunpack.c.l.b16 %v242
      %v315 = vunpack.c.l.b16 %v244
      %v316 = vunpack.c.l.b16 %v245
      %v317 = vpack.c.b16 %v286, %v285
      %v318 = vpack.c.b16 %v288, %v287
      %v319 = vpack.c.b16 %v290, %v289
      %v320 = vpack.c.b16 %v292, %v291
      %v321 = vpack.c.b16 %v294, %v293
      %v322 = vpack.c.b16 %v296, %v295
      %v323 = vpack.c.b16 %v298, %v297
      %v324 = vpack.c.b16 %v300, %v299
      %v325 = vpack.c.b16 %v302, %v301
      %v326 = vpack.c.b16 %v304, %v303
      %v327 = vpack.c.b16 %v306, %v305
      %v328 = vpack.c.b16 %v308, %v307
      %v329 = vpack.c.b16 %v310, %v309
      %v330 = vpack.c.b16 %v312, %v311
      %v331 = vpack.c.b16 %v314, %v313
      %v332 = vpack.c.b16 %v316, %v315
      %v349 = vunpack.c.l.b16 %v201
      %v350 = vunpack.c.l.b16 %v204
      %v351 = vunpack.c.l.b16 %v207
      %v352 = vunpack.c.l.b16 %v210
      %v353 = vunpack.c.l.b16 %v213
      %v354 = vunpack.c.l.b16 %v216
      %v355 = vunpack.c.l.b16 %v219
      %v356 = vunpack.c.l.b16 %v222
      %v357 = vunpack.c.l.b16 %v225
      %v358 = vunpack.c.l.b16 %v228
      %v359 = vunpack.c.l.b16 %v231
      %v360 = vunpack.c.l.b16 %v234
      %v361 = vunpack.c.l.b16 %v237
      %v362 = vunpack.c.l.b16 %v240
      %v363 = vunpack.c.l.b16 %v243
      %v364 = vunpack.c.l.b16 %v246
      %v365 = vpack.c.b16 %v349, %v349
      %v366 = vpack.c.b16 %v350, %v350
      %v367 = vpack.c.b16 %v351, %v351
      %v368 = vpack.c.b16 %v352, %v352
      %v369 = vpack.c.b16 %v353, %v353
      %v370 = vpack.c.b16 %v354, %v354
      %v371 = vpack.c.b16 %v355, %v355
      %v372 = vpack.c.b16 %v356, %v356
      %v373 = vpack.c.b16 %v357, %v357
      %v374 = vpack.c.b16 %v358, %v358
      %v375 = vpack.c.b16 %v359, %v359
      %v376 = vpack.c.b16 %v360, %v360
      %v377 = vpack.c.b16 %v361, %v361
      %v378 = vpack.c.b16 %v362, %v362
      %v379 = vpack.c.b16 %v363, %v363
      %v380 = vpack.c.b16 %v364, %v364
      %vm381 = vsmask.f32 7424
      %v383 = vshrl.u32 %v317, 16
      %v385 = vshll.u32 %v317, 16
      %v387 = vrot.slane %v385, 1
      %v388 = vor.u32 %v383, %v387
      %v390 = vshll.u32 %v365, 16
      %v392 = vrot.slane %v390, 1
      %v393 = vsel %vm381, %v388, %v392
      %v395 = vshrl.u32 %v318, 16
      %v397 = vshll.u32 %v318, 16
      %v399 = vrot.slane %v397, 1
      %v400 = vor.u32 %v395, %v399
      %v402 = vshll.u32 %v366, 16
      %v404 = vrot.slane %v402, 1
      %v405 = vsel %vm381, %v400, %v404
      %v407 = vshrl.u32 %v319, 16
      %v409 = vshll.u32 %v319, 16
      %v411 = vrot.slane %v409, 1
      %v412 = vor.u32 %v407, %v411
      %v414 = vshll.u32 %v367, 16
      %v416 = vrot.slane %v414, 1
      %v417 = vsel %vm381, %v412, %v416
      %v419 = vshrl.u32 %v320, 16
      %v421 = vshll.u32 %v320, 16
      %v423 = vrot.slane %v421, 1
      %v424 = vor.u32 %v419, %v423
      %v426 = vshll.u32 %v368, 16
      %v428 = vrot.slane %v426, 1
      %v429 = vsel %vm381, %v424, %v428
      %v431 = vshrl.u32 %v321, 16
      %v433 = vshll.u32 %v321, 16
      %v435 = vrot.slane %v433, 1
      %v436 = vor.u32 %v431, %v435
      %v438 = vshll.u32 %v369, 16
      %v440 = vrot.slane %v438, 1
      %v441 = vsel %vm381, %v436, %v440
      %v443 = vshrl.u32 %v322, 16
      %v445 = vshll.u32 %v322, 16
      %v447 = vrot.slane %v445, 1
      %v448 = vor.u32 %v443, %v447
      %v450 = vshll.u32 %v370, 16
      %v452 = vrot.slane %v450, 1
      %v453 = vsel %vm381, %v448, %v452
      %v455 = vshrl.u32 %v323, 16
      %v457 = vshll.u32 %v323, 16
      %v459 = vrot.slane %v457, 1
      %v460 = vor.u32 %v455, %v459
      %v462 = vshll.u32 %v371, 16
      %v464 = vrot.slane %v462, 1
      %v465 = vsel %vm381, %v460, %v464
      %v467 = vshrl.u32 %v324, 16
      %v469 = vshll.u32 %v324, 16
      %v471 = vrot.slane %v469, 1
      %v472 = vor.u32 %v467, %v471
      %v474 = vshll.u32 %v372, 16
      %v476 = vrot.slane %v474, 1
      %v477 = vsel %vm381, %v472, %v476
      %v479 = vshrl.u32 %v325, 16
      %v481 = vshll.u32 %v325, 16
      %v483 = vrot.slane %v481, 1
      %v484 = vor.u32 %v479, %v483
      %v486 = vshll.u32 %v373, 16
      %v488 = vrot.slane %v486, 1
      %v489 = vsel %vm381, %v484, %v488
      %v491 = vshrl.u32 %v326, 16
      %v493 = vshll.u32 %v326, 16
      %v495 = vrot.slane %v493, 1
      %v496 = vor.u32 %v491, %v495
      %v498 = vshll.u32 %v374, 16
      %v500 = vrot.slane %v498, 1
      %v501 = vsel %vm381, %v496, %v500
      %v503 = vshrl.u32 %v327, 16
      %v505 = vshll.u32 %v327, 16
      %v507 = vrot.slane %v505, 1
      %v508 = vor.u32 %v503, %v507
      %v510 = vshll.u32 %v375, 16
      %v512 = vrot.slane %v510, 1
      %v513 = vsel %vm381, %v508, %v512
      %v515 = vshrl.u32 %v328, 16
      %v517 = vshll.u32 %v328, 16
      %v519 = vrot.slane %v517, 1
      %v520 = vor.u32 %v515, %v519
      %v522 = vshll.u32 %v376, 16
      %v524 = vrot.slane %v522, 1
      %v525 = vsel %vm381, %v520, %v524
      %v527 = vshrl.u32 %v329, 16
      %v529 = vshll.u32 %v329, 16
      %v531 = vrot.slane %v529, 1
      %v532 = vor.u32 %v527, %v531
      %v534 = vshll.u32 %v377, 16
      %v536 = vrot.slane %v534, 1
      %v537 = vsel %vm381, %v532, %v536
      %v539 = vshrl.u32 %v330, 16
      %v541 = vshll.u32 %v330, 16
      %v543 = vrot.slane %v541, 1
      %v544 = vor.u32 %v539, %v543
      %v546 = vshll.u32 %v378, 16
      %v548 = vrot.slane %v546, 1
      %v549 = vsel %vm381, %v544, %v548
      %v551 = vshrl.u32 %v331, 16
      %v553 = vshll.u32 %v331, 16
      %v555 = vrot.slane %v553, 1
      %v556 = vor.u32 %v551, %v555
      %v558 = vshll.u32 %v379, 16
      %v560 = vrot.slane %v558, 1
      %v561 = vsel %vm381, %v556, %v560
      %v563 = vshrl.u32 %v332, 16
      %v565 = vshll.u32 %v332, 16
      %v567 = vrot.slane %v565, 1
      %v568 = vor.u32 %v563, %v567
      %v570 = vshll.u32 %v380, 16
      %v572 = vrot.slane %v570, 1
      %v573 = vsel %vm381, %v568, %v572
      %574 = vrot.lane.b32.xlu0 %v393, 64
      %v575 = vpop.permute.xlu0 %574
      %576 = vrot.lane.b32.xlu0 %v405, 64
      %v577 = vpop.permute.xlu0 %576
      %578 = vrot.lane.b32.xlu0 %v417, 64
      %v579 = vpop.permute.xlu0 %578
      %580 = vrot.lane.b32.xlu0 %v429, 64
      %v581 = vpop.permute.xlu0 %580
      %582 = vrot.lane.b32.xlu0 %v441, 64
      %v583 = vpop.permute.xlu0 %582
      %584 = vrot.lane.b32.xlu0 %v453, 64
      %v585 = vpop.permute.xlu0 %584
      %586 = vrot.lane.b32.xlu0 %v465, 64
      %v587 = vpop.permute.xlu0 %586
      %588 = vrot.lane.b32.xlu0 %v477, 64
      %v589 = vpop.permute.xlu0 %588
      %590 = vrot.lane.b32.xlu0 %v489, 64
      %v591 = vpop.permute.xlu0 %590
      %592 = vrot.lane.b32.xlu0 %v501, 64
      %v593 = vpop.permute.xlu0 %592
      %594 = vrot.lane.b32.xlu0 %v513, 64
      %v595 = vpop.permute.xlu0 %594
      %596 = vrot.lane.b32.xlu0 %v525, 64
      %v597 = vpop.permute.xlu0 %596
      %598 = vrot.lane.b32.xlu0 %v537, 64
      %v599 = vpop.permute.xlu0 %598
      %600 = vrot.lane.b32.xlu0 %v549, 64
      %v601 = vpop.permute.xlu0 %600
      %602 = vrot.lane.b32.xlu0 %v561, 64
      %v603 = vpop.permute.xlu0 %602
      %604 = vrot.lane.b32.xlu0 %v573, 64
      %v605 = vpop.permute.xlu0 %604
      %vm606 = vcmask 1046528
      %v607 = vrot.slane %v317, 1
      %v608 = vrot.slane %v365, 1
      %v609 = vsel %vm606, %v607, %v608
      %v610 = vrot.slane %v318, 1
      %v611 = vrot.slane %v366, 1
      %v612 = vsel %vm606, %v610, %v611
      %v613 = vrot.slane %v319, 1
      %v614 = vrot.slane %v367, 1
      %v615 = vsel %vm606, %v613, %v614
      %v616 = vrot.slane %v320, 1
      %v617 = vrot.slane %v368, 1
      %v618 = vsel %vm606, %v616, %v617
      %v619 = vrot.slane %v321, 1
      %v620 = vrot.slane %v369, 1
      %v621 = vsel %vm606, %v619, %v620
      %v622 = vrot.slane %v322, 1
      %v623 = vrot.slane %v370, 1
      %v624 = vsel %vm606, %v622, %v623
      %v625 = vrot.slane %v323, 1
      %v626 = vrot.slane %v371, 1
      %v627 = vsel %vm606, %v625, %v626
      %v628 = vrot.slane %v324, 1
      %v629 = vrot.slane %v372, 1
      %v630 = vsel %vm606, %v628, %v629
      %v631 = vrot.slane %v325, 1
      %v632 = vrot.slane %v373, 1
      %v633 = vsel %vm606, %v631, %v632
      %v634 = vrot.slane %v326, 1
      %v635 = vrot.slane %v374, 1
      %v636 = vsel %vm606, %v634, %v635
      %v637 = vrot.slane %v327, 1
      %v638 = vrot.slane %v375, 1
      %v639 = vsel %vm606, %v637, %v638
      %v640 = vrot.slane %v328, 1
      %v641 = vrot.slane %v376, 1
      %v642 = vsel %vm606, %v640, %v641
      %v643 = vrot.slane %v329, 1
      %v644 = vrot.slane %v377, 1
      %v645 = vsel %vm606, %v643, %v644
      %v646 = vrot.slane %v330, 1
      %v647 = vrot.slane %v378, 1
      %v648 = vsel %vm606, %v646, %v647
      %v649 = vrot.slane %v331, 1
      %v650 = vrot.slane %v379, 1
      %v651 = vsel %vm606, %v649, %v650
      %v652 = vrot.slane %v332, 1
      %v653 = vrot.slane %v380, 1
      %v654 = vsel %vm606, %v652, %v653
      %vm655 = vcmask 523264
      %v657 = vsel %vm655, %v317, %v575
      %v660 = vsel %vm655, %v318, %v577
      %v663 = vsel %vm655, %v319, %v579
      %v666 = vsel %vm655, %v320, %v581
      %v669 = vsel %vm655, %v321, %v583
      %v672 = vsel %vm655, %v322, %v585
      %v675 = vsel %vm655, %v323, %v587
      %v678 = vsel %vm655, %v324, %v589
      %v681 = vsel %vm655, %v325, %v591
      %v684 = vsel %vm655, %v326, %v593
      %v687 = vsel %vm655, %v327, %v595
      %v690 = vsel %vm655, %v328, %v597
      %v693 = vsel %vm655, %v329, %v599
      %v696 = vsel %vm655, %v330, %v601
      %v699 = vsel %vm655, %v331, %v603
      %v702 = vsel %vm655, %v332, %v605
      %v704 = vld [vmem:[%s1] sm:$0xf]
      %v705 = vld [vmem:[%s1 + $0x4] sm:$0xf]
      %v706 = vld [vmem:[%s1 + $0x8] sm:$0xf]
      %v707 = vld [vmem:[%s1 + $0xc] sm:$0xf]
      %v708 = vld [vmem:[%s1 + $0x10] sm:$0xf]
      %v709 = vld [vmem:[%s1 + $0x14] sm:$0xf]
      %v710 = vld [vmem:[%s1 + $0x18] sm:$0xf]
      %v711 = vld [vmem:[%s1 + $0x1c] sm:$0xf]
      %v712 = vld [vmem:[%s1 + $0x20] sm:$0xf]
      %v713 = vld [vmem:[%s1 + $0x24] sm:$0xf]
      %v714 = vld [vmem:[%s1 + $0x28] sm:$0xf]
      %v715 = vld [vmem:[%s1 + $0x2c] sm:$0xf]
      %v716 = vld [vmem:[%s1 + $0x30] sm:$0xf]
      %v717 = vld [vmem:[%s1 + $0x34] sm:$0xf]
      %v718 = vld [vmem:[%s1 + $0x38] sm:$0xf]
      %v719 = vld [vmem:[%s1 + $0x3c] sm:$0xf]
      %v720 = vld [vmem:[%s1 + $0x40] sm:$0xf]
      %v721 = vld [vmem:[%s1 + $0x44] sm:$0xf]
      %v722 = vld [vmem:[%s1 + $0x48] sm:$0xf]
      %v723 = vld [vmem:[%s1 + $0x4c] sm:$0xf]
      %v724 = vld [vmem:[%s1 + $0x50] sm:$0xf]
      %v725 = vld [vmem:[%s1 + $0x54] sm:$0xf]
      %v726 = vld [vmem:[%s1 + $0x58] sm:$0xf]
      %v727 = vld [vmem:[%s1 + $0x5c] sm:$0xf]
      %v730 = vunpack.c.l.b16 %v247
      %v731 = vunpack.c.l.b16 %v248
      %v732 = vpack.c.b16 %v731, %v730
      %v734 = vunpack.c.l.b16 %v249
      %v735 = vpack.c.b16 %v734, %v734
      %v737 = vshrl.u32 %v732, 16
      %v739 = vshll.u32 %v732, 16
      %v741 = vrot.slane %v739, 1
      %v742 = vor.u32 %v737, %v741
      %v744 = vshll.u32 %v735, 16
      %v746 = vrot.slane %v744, 1
      %v747 = vsel %vm381, %v742, %v746
      %748 = vrot.lane.b32.xlu0 %v747, 64
      %v749 = vpop.permute.xlu0 %748
      %v750 = vrot.slane %v732, 1
      %v751 = vrot.slane %v735, 1
      %v752 = vsel %vm606, %v750, %v751
      %v754 = vsel %vm655, %v732, %v749
      %s756 = scalar_lea.vmem %s1, 96
      %v757 = vld [vmem:[%s756] sm:$0xf]
      %v758 = vld [vmem:[%s756 + $0x4] sm:$0xf]
      %v759 = vld [vmem:[%s756 + $0x8] sm:$0xf]
      %v760 = vld [vmem:[%s756 + $0xc] sm:$0xf]
      %v761 = vld [vmem:[%s756 + $0x10] sm:$0xf]
      %v762 = vld [vmem:[%s756 + $0x14] sm:$0xf]
      %v763 = vld [vmem:[%s756 + $0x18] sm:$0xf]
      %v764 = vld [vmem:[%s756 + $0x1c] sm:$0xf]
      %v765 = vld [vmem:[%s756 + $0x20] sm:$0xf]
      %v766 = vld [vmem:[%s756 + $0x24] sm:$0xf]
      %v767 = vld [vmem:[%s756 + $0x28] sm:$0xf]
      %v768 = vld [vmem:[%s756 + $0x2c] sm:$0xf]
      %v769 = vld [vmem:[%s756 + $0x30] sm:$0xf]
      %v770 = vld [vmem:[%s756 + $0x34] sm:$0xf]
      %v771 = vld [vmem:[%s756 + $0x38] sm:$0xf]
      %v772 = vld [vmem:[%s756 + $0x3c] sm:$0xf]
      %v773 = vld [vmem:[%s756 + $0x40] sm:$0xf]
      %v774 = vld [vmem:[%s756 + $0x44] sm:$0xf]
      %v775 = vld [vmem:[%s756 + $0x48] sm:$0xf]
      %v776 = vld [vmem:[%s756 + $0x4c] sm:$0xf]
      %v777 = vld [vmem:[%s756 + $0x50] sm:$0xf]
      %v778 = vld [vmem:[%s756 + $0x54] sm:$0xf]
      %v779 = vld [vmem:[%s756 + $0x58] sm:$0xf]
      %v780 = vld [vmem:[%s756 + $0x5c] sm:$0xf]
      %v805 = vunpack.c.l.b16 %v757
      %v806 = vunpack.c.l.b16 %v758
      %v807 = vunpack.c.l.b16 %v759
      %v808 = vunpack.c.l.b16 %v760
      %v809 = vunpack.c.l.b16 %v761
      %v810 = vunpack.c.l.b16 %v762
      %v811 = vunpack.c.l.b16 %v763
      %v812 = vunpack.c.l.b16 %v764
      %v813 = vunpack.c.l.b16 %v765
      %v814 = vunpack.c.l.b16 %v766
      %v815 = vunpack.c.l.b16 %v767
      %v816 = vunpack.c.l.b16 %v768
      %v817 = vunpack.c.l.b16 %v769
      %v818 = vunpack.c.l.b16 %v770
      %v819 = vunpack.c.l.b16 %v771
      %v820 = vunpack.c.l.b16 %v772
      %v821 = vunpack.c.l.b16 %v773
      %v822 = vunpack.c.l.b16 %v774
      %v823 = vunpack.c.l.b16 %v775
      %v824 = vunpack.c.l.b16 %v776
      %v825 = vunpack.c.l.b16 %v777
      %v826 = vunpack.c.l.b16 %v778
      %v827 = vunpack.c.l.b16 %v779
      %v828 = vunpack.c.l.b16 %v780
      %v829 = vpack.c.b16 %v806, %v805
      %v830 = vpack.c.b16 %v808, %v807
      %v831 = vpack.c.b16 %v810, %v809
      %v832 = vpack.c.b16 %v812, %v811
      %v833 = vpack.c.b16 %v814, %v813
      %v834 = vpack.c.b16 %v816, %v815
      %v835 = vpack.c.b16 %v818, %v817
      %v836 = vpack.c.b16 %v820, %v819
      %v837 = vpack.c.b16 %v822, %v821
      %v838 = vpack.c.b16 %v824, %v823
      %v839 = vpack.c.b16 %v826, %v825
      %v840 = vpack.c.b16 %v828, %v827
      %v854 = vsel %vm655, %v612, 0
      %v857 = vsel %vm655, %v615, 0
      %v860 = vsel %vm655, %v618, 0
      %v863 = vsel %vm655, %v621, 0
      %v866 = vsel %vm655, %v624, 0
      %v869 = vsel %vm655, %v627, 0
      %v872 = vsel %vm655, %v630, 0
      %v875 = vsel %vm655, %v633, 0
      %v878 = vsel %vm655, %v636, 0
      %v881 = vsel %vm655, %v639, 0
      %v884 = vsel %vm655, %v642, 0
      %v887 = vsel %vm655, %v645, 0
      %v890 = vsel %vm655, %v648, 0
      %v893 = vsel %vm655, %v651, 0
      %v896 = vsel %vm655, %v654, 0
      %v899 = vsel %vm655, %v752, 0
      %901 = vmatprep.subr.bf16.mxu0 0
      %902 = vmatpush1.bf16.msra.mxu0 %v829
      %903 = vmatprep.subr.bf16.mxu0 0
      %904 = vmatpush1.bf16.msra.mxu0 %v830
      %905 = vmatprep.subr.bf16.mxu0 0
      %906 = vmatpush1.bf16.msra.mxu0 %v831
      %907 = vmatprep.subr.bf16.mxu0 0
      %908 = vmatpush1.bf16.msra.mxu0 %v832
      %909 = vmatprep.subr.bf16.mxu0 0
      %910 = vmatpush1.bf16.msra.mxu0 %v833
      %911 = vmatprep.subr.bf16.mxu0 0
      %912 = vmatpush1.bf16.msra.mxu0 %v834
      %913 = vmatprep.subr.bf16.mxu0 0
      %914 = vmatpush1.bf16.msra.mxu0 %v835
      %915 = vmatprep.subr.bf16.mxu0 0
      %916 = vmatpush1.bf16.msra.mxu0 %v836
      %917 = vmatprep.subr.bf16.mxu0 0
      %918 = vmatpush1.bf16.msra.mxu0 %v837
      %919 = vmatprep.subr.bf16.mxu0 0
      %920 = vmatpush1.bf16.msra.mxu0 %v838
      %921 = vmatprep.subr.bf16.mxu0 0
      %922 = vmatpush1.bf16.msra.mxu0 %v839
      %923 = vmatprep.subr.bf16.mxu0 0
      %924 = vmatpush1.bf16.msra.mxu0 %v840
      %925 = vmatprep.subr.bf16.mxu0 0
      %926 = vmatpush1.bf16.msra.mxu0 0
      %927 = vmatprep.subr.bf16.mxu0 0
      %928 = vmatpush1.bf16.msra.mxu0 0
      %929 = vmatprep.subr.bf16.mxu0 0
      %930 = vmatpush1.bf16.msra.mxu0 0
      %931 = vmatprep.subr.bf16.mxu0 0
      %932 = vmatpush1.bf16.msra.mxu0 0
      %933 = vmatprep.mubr.bf16.mxu0 %v854
      %934 = vmatmul.mubr.bf16.gmra.mrb[0].mxu0 %v660
      %v935 = vpop.f32.mrb[0].mxu0
      %v936 = vadd.f32 0.0, %v935
      %v937 = vpop.f32.mrb[0].mxu0
      %v938 = vpop.f32.mrb[0].mxu0
      %v939 = vadd.f32 0.0, %v938
      %v940 = vpop.f32.mrb[0].mxu0
      %941 = vmatprep.mubr.bf16.mxu0 %v857
      %942 = vmatmul.mubr.bf16.gmra.mrb[0].mxu0 %v663
      %v943 = vpop.f32.mrb[0].mxu0
      %v944 = vadd.f32 0.0, %v943
      %v945 = vpop.f32.mrb[0].mxu0
      %v946 = vpop.f32.mrb[0].mxu0
      %v947 = vadd.f32 0.0, %v946
      %v948 = vpop.f32.mrb[0].mxu0
      %949 = vmatprep.mubr.bf16.mxu0 %v860
      %950 = vmatmul.mubr.bf16.gmra.mrb[0].mxu0 %v666
      %v951 = vpop.f32.mrb[0].mxu0
      %v952 = vadd.f32 0.0, %v951
      %v953 = vpop.f32.mrb[0].mxu0
      %v954 = vpop.f32.mrb[0].mxu0
      %v955 = vadd.f32 0.0, %v954
      %v956 = vpop.f32.mrb[0].mxu0
      %957 = vmatprep.mubr.bf16.mxu0 %v863
      %958 = vmatmul.mubr.bf16.gmra.mrb[0].mxu0 %v669
      %v959 = vpop.f32.mrb[0].mxu0
      %v960 = vadd.f32 0.0, %v959
      %v961 = vpop.f32.mrb[0].mxu0
      %v962 = vpop.f32.mrb[0].mxu0
      %v963 = vadd.f32 0.0, %v962
      %v964 = vpop.f32.mrb[0].mxu0
      %965 = vmatprep.mubr.bf16.mxu0 %v866
      %966 = vmatmul.mubr.bf16.gmra.mrb[0].mxu0 %v672
      %v967 = vpop.f32.mrb[0].mxu0
      %v968 = vadd.f32 0.0, %v967
      %v969 = vpop.f32.mrb[0].mxu0
      %v970 = vpop.f32.mrb[0].mxu0
      %v971 = vadd.f32 0.0, %v970
      %v972 = vpop.f32.mrb[0].mxu0
      %973 = vmatprep.mubr.bf16.mxu0 %v869
      %974 = vmatmul.mubr.bf16.gmra.mrb[0].mxu0 %v675
      %v975 = vpop.f32.mrb[0].mxu0
      %v976 = vadd.f32 0.0, %v975
      %v977 = vpop.f32.mrb[0].mxu0
      %v978 = vpop.f32.mrb[0].mxu0
      %v979 = vadd.f32 0.0, %v978
      %v980 = vpop.f32.mrb[0].mxu0
      %981 = vmatprep.mubr.bf16.mxu0 %v872
      %982 = vmatmul.mubr.bf16.gmra.mrb[0].mxu0 %v678
      %v983 = vpop.f32.mrb[0].mxu0
      %v984 = vadd.f32 0.0, %v983
      %v985 = vpop.f32.mrb[0].mxu0
      %v986 = vpop.f32.mrb[0].mxu0
      %v987 = vadd.f32 0.0, %v986
      %v988 = vpop.f32.mrb[0].mxu0
      %989 = vmatprep.mubr.bf16.mxu0 %v875
      %990 = vmatmul.mubr.bf16.gmra.mrb[0].mxu0 %v681
      %v991 = vpop.f32.mrb[0].mxu0
      %v992 = vadd.f32 0.0, %v991
      %v993 = vpop.f32.mrb[0].mxu0
      %v994 = vpop.f32.mrb[0].mxu0
      %v995 = vadd.f32 0.0, %v994
      %v996 = vpop.f32.mrb[0].mxu0
      %997 = vmatprep.mubr.bf16.mxu0 %v878
      %998 = vmatmul.mubr.bf16.gmra.mrb[0].mxu0 %v684
      %v999 = vpop.f32.mrb[0].mxu0
      %v1000 = vadd.f32 0.0, %v999
      %v1001 = vpop.f32.mrb[0].mxu0
      %v1002 = vpop.f32.mrb[0].mxu0
      %v1003 = vadd.f32 0.0, %v1002
      %v1004 = vpop.f32.mrb[0].mxu0
      %1005 = vmatprep.mubr.bf16.mxu0 %v881
      %1006 = vmatmul.mubr.bf16.gmra.mrb[0].mxu0 %v687
      %v1007 = vpop.f32.mrb[0].mxu0
      %v1008 = vadd.f32 0.0, %v1007
      %v1009 = vpop.f32.mrb[0].mxu0
      %v1010 = vpop.f32.mrb[0].mxu0
      %v1011 = vadd.f32 0.0, %v1010
      %v1012 = vpop.f32.mrb[0].mxu0
      %1013 = vmatprep.mubr.bf16.mxu0 %v884
      %1014 = vmatmul.mubr.bf16.gmra.mrb[0].mxu0 %v690
      %v1015 = vpop.f32.mrb[0].mxu0
      %v1016 = vadd.f32 0.0, %v1015
      %v1017 = vpop.f32.mrb[0].mxu0
      %v1018 = vpop.f32.mrb[0].mxu0
      %v1019 = vadd.f32 0.0, %v1018
      %v1020 = vpop.f32.mrb[0].mxu0
      %1021 = vmatprep.mubr.bf16.mxu0 %v887
      %1022 = vmatmul.mubr.bf16.gmra.mrb[0].mxu0 %v693
      %v1023 = vpop.f32.mrb[0].mxu0
      %v1024 = vadd.f32 0.0, %v1023
      %v1025 = vpop.f32.mrb[0].mxu0
      %v1026 = vpop.f32.mrb[0].mxu0
      %v1027 = vadd.f32 0.0, %v1026
      %v1028 = vpop.f32.mrb[0].mxu0
      %1029 = vmatprep.mubr.bf16.mxu0 %v890
      %1030 = vmatmul.mubr.bf16.gmra.mrb[0].mxu0 %v696
      %v1031 = vpop.f32.mrb[0].mxu0
      %v1032 = vadd.f32 0.0, %v1031
      %v1033 = vpop.f32.mrb[0].mxu0
      %v1034 = vpop.f32.mrb[0].mxu0
      %v1035 = vadd.f32 0.0, %v1034
      %v1036 = vpop.f32.mrb[0].mxu0
      %1037 = vmatprep.mubr.bf16.mxu0 %v893
      %1038 = vmatmul.mubr.bf16.gmra.mrb[0].mxu0 %v699
      %v1039 = vpop.f32.mrb[0].mxu0
      %v1040 = vadd.f32 0.0, %v1039
      %v1041 = vpop.f32.mrb[0].mxu0
      %v1042 = vpop.f32.mrb[0].mxu0
      %v1043 = vadd.f32 0.0, %v1042
      %v1044 = vpop.f32.mrb[0].mxu0
      %1045 = vmatprep.mubr.bf16.mxu0 %v896
      %1046 = vmatmul.mubr.bf16.gmra.mrb[0].mxu0 %v702
      %v1047 = vpop.f32.mrb[0].mxu0
      %v1048 = vadd.f32 0.0, %v1047
      %v1049 = vpop.f32.mrb[0].mxu0
      %v1050 = vpop.f32.mrb[0].mxu0
      %v1051 = vadd.f32 0.0, %v1050
      %v1052 = vpop.f32.mrb[0].mxu0
      %1053 = vmatprep.mubr.bf16.mxu0 %v899
      %1054 = vmatmul.mubr.bf16.gmra.mrb[0].mxu0 %v754
      %v1055 = vpop.f32.mrb[0].mxu0
      %v1056 = vadd.f32 0.0, %v1055
      %v1057 = vpop.f32.mrb[0].mxu0
      %v1058 = vpop.f32.mrb[0].mxu0
      %v1059 = vadd.f32 0.0, %v1058
      %v1060 = vpop.f32.mrb[0].mxu0
      %1061 = vdwg.mxu0
      %v1086 = vunpack.c.l.b16 %v704
      %v1087 = vunpack.c.l.b16 %v705
      %v1088 = vunpack.c.l.b16 %v706
      %v1089 = vunpack.c.l.b16 %v707
      %v1090 = vunpack.c.l.b16 %v708
      %v1091 = vunpack.c.l.b16 %v709
      %v1092 = vunpack.c.l.b16 %v710
      %v1093 = vunpack.c.l.b16 %v711
      %v1094 = vunpack.c.l.b16 %v712
      %v1095 = vunpack.c.l.b16 %v713
      %v1096 = vunpack.c.l.b16 %v714
      %v1097 = vunpack.c.l.b16 %v715
      %v1098 = vunpack.c.l.b16 %v716
      %v1099 = vunpack.c.l.b16 %v717
      %v1100 = vunpack.c.l.b16 %v718
      %v1101 = vunpack.c.l.b16 %v719
      %v1102 = vunpack.c.l.b16 %v720
      %v1103 = vunpack.c.l.b16 %v721
      %v1104 = vunpack.c.l.b16 %v722
      %v1105 = vunpack.c.l.b16 %v723
      %v1106 = vunpack.c.l.b16 %v724
      %v1107 = vunpack.c.l.b16 %v725
      %v1108 = vunpack.c.l.b16 %v726
      %v1109 = vunpack.c.l.b16 %v727
      %v1110 = vpack.c.b16 %v1087, %v1086
      %v1111 = vpack.c.b16 %v1089, %v1088
      %v1112 = vpack.c.b16 %v1091, %v1090
      %v1113 = vpack.c.b16 %v1093, %v1092
      %v1114 = vpack.c.b16 %v1095, %v1094
      %v1115 = vpack.c.b16 %v1097, %v1096
      %v1116 = vpack.c.b16 %v1099, %v1098
      %v1117 = vpack.c.b16 %v1101, %v1100
      %v1118 = vpack.c.b16 %v1103, %v1102
      %v1119 = vpack.c.b16 %v1105, %v1104
      %v1120 = vpack.c.b16 %v1107, %v1106
      %v1121 = vpack.c.b16 %v1109, %v1108
      %v1135 = vsel %vm655, %v609, 0
      %1137 = vmatprep.subr.bf16.mxu0 0
      %1138 = vmatpush1.bf16.msra.mxu0 %v1110
      %1139 = vmatprep.subr.bf16.mxu0 0
      %1140 = vmatpush1.bf16.msra.mxu0 %v1111
      %1141 = vmatprep.subr.bf16.mxu0 0
      %1142 = vmatpush1.bf16.msra.mxu0 %v1112
      %1143 = vmatprep.subr.bf16.mxu0 0
      %1144 = vmatpush1.bf16.msra.mxu0 %v1113
      %1145 = vmatprep.subr.bf16.mxu0 0
      %1146 = vmatpush1.bf16.msra.mxu0 %v1114
      %1147 = vmatprep.subr.bf16.mxu0 0
      %1148 = vmatpush1.bf16.msra.mxu0 %v1115
      %1149 = vmatprep.subr.bf16.mxu0 0
      %1150 = vmatpush1.bf16.msra.mxu0 %v1116
      %1151 = vmatprep.subr.bf16.mxu0 0
      %1152 = vmatpush1.bf16.msra.mxu0 %v1117
      %1153 = vmatprep.subr.bf16.mxu0 0
      %1154 = vmatpush1.bf16.msra.mxu0 %v1118
      %1155 = vmatprep.subr.bf16.mxu0 0
      %1156 = vmatpush1.bf16.msra.mxu0 %v1119
      %1157 = vmatprep.subr.bf16.mxu0 0
      %1158 = vmatpush1.bf16.msra.mxu0 %v1120
      %1159 = vmatprep.subr.bf16.mxu0 0
      %1160 = vmatpush1.bf16.msra.mxu0 %v1121
      %1161 = vmatprep.subr.bf16.mxu0 0
      %1162 = vmatpush1.bf16.msra.mxu0 0
      %1163 = vmatprep.subr.bf16.mxu0 0
      %1164 = vmatpush1.bf16.msra.mxu0 0
      %1165 = vmatprep.subr.bf16.mxu0 0
      %1166 = vmatpush1.bf16.msra.mxu0 0
      %1167 = vmatprep.subr.bf16.mxu0 0
      %1168 = vmatpush1.bf16.msra.mxu0 0
      %1169 = vmatprep.mubr.bf16.mxu0 %v1135
      %1170 = vmatmul.mubr.bf16.gmra.mrb[0].mxu0 %v657
      %v1171 = vpop.f32.mrb[0].mxu0
      %v1172 = vadd.f32 %v936, %v1171
      %v1173 = vpop.f32.mrb[0].mxu0
      %v1174 = vpop.f32.mrb[0].mxu0
      %v1175 = vadd.f32 %v939, %v1174
      %v1176 = vpop.f32.mrb[0].mxu0
      %1177 = vmatprep.mubr.bf16.mxu0 %v854
      %1178 = vmatmul.mubr.bf16.gmra.mrb[0].mxu0 %v660
      %v1179 = vpop.f32.mrb[0].mxu0
      %v1180 = vadd.f32 %v944, %v1179
      %v1181 = vpop.f32.mrb[0].mxu0
      %v1182 = vpop.f32.mrb[0].mxu0
      %v1183 = vadd.f32 %v947, %v1182
      %v1184 = vpop.f32.mrb[0].mxu0
      %1185 = vmatprep.mubr.bf16.mxu0 %v857
      %1186 = vmatmul.mubr.bf16.gmra.mrb[0].mxu0 %v663
      %v1187 = vpop.f32.mrb[0].mxu0
      %v1188 = vadd.f32 %v952, %v1187
      %v1189 = vpop.f32.mrb[0].mxu0
      %v1190 = vpop.f32.mrb[0].mxu0
      %v1191 = vadd.f32 %v955, %v1190
      %v1192 = vpop.f32.mrb[0].mxu0
      %1193 = vmatprep.mubr.bf16.mxu0 %v860
      %1194 = vmatmul.mubr.bf16.gmra.mrb[0].mxu0 %v666
      %v1195 = vpop.f32.mrb[0].mxu0
      %v1196 = vadd.f32 %v960, %v1195
      %v1197 = vpop.f32.mrb[0].mxu0
      %v1198 = vpop.f32.mrb[0].mxu0
      %v1199 = vadd.f32 %v963, %v1198
      %v1200 = vpop.f32.mrb[0].mxu0
      %1201 = vmatprep.mubr.bf16.mxu0 %v863
      %1202 = vmatmul.mubr.bf16.gmra.mrb[0].mxu0 %v669
      %v1203 = vpop.f32.mrb[0].mxu0
      %v1204 = vadd.f32 %v968, %v1203
      %v1205 = vpop.f32.mrb[0].mxu0
      %v1206 = vpop.f32.mrb[0].mxu0
      %v1207 = vadd.f32 %v971, %v1206
      %v1208 = vpop.f32.mrb[0].mxu0
      %1209 = vmatprep.mubr.bf16.mxu0 %v866
      %1210 = vmatmul.mubr.bf16.gmra.mrb[0].mxu0 %v672
      %v1211 = vpop.f32.mrb[0].mxu0
      %v1212 = vadd.f32 %v976, %v1211
      %v1213 = vpop.f32.mrb[0].mxu0
      %v1214 = vpop.f32.mrb[0].mxu0
      %v1215 = vadd.f32 %v979, %v1214
      %v1216 = vpop.f32.mrb[0].mxu0
      %1217 = vmatprep.mubr.bf16.mxu0 %v869
      %1218 = vmatmul.mubr.bf16.gmra.mrb[0].mxu0 %v675
      %v1219 = vpop.f32.mrb[0].mxu0
      %v1220 = vadd.f32 %v984, %v1219
      %v1221 = vpop.f32.mrb[0].mxu0
      %v1222 = vpop.f32.mrb[0].mxu0
      %v1223 = vadd.f32 %v987, %v1222
      %v1224 = vpop.f32.mrb[0].mxu0
      %1225 = vmatprep.mubr.bf16.mxu0 %v872
      %1226 = vmatmul.mubr.bf16.gmra.mrb[0].mxu0 %v678
      %v1227 = vpop.f32.mrb[0].mxu0
      %v1228 = vadd.f32 %v992, %v1227
      %v1229 = vpop.f32.mrb[0].mxu0
      %v1230 = vpop.f32.mrb[0].mxu0
      %v1231 = vadd.f32 %v995, %v1230
      %v1232 = vpop.f32.mrb[0].mxu0
      %1233 = vmatprep.mubr.bf16.mxu0 %v875
      %1234 = vmatmul.mubr.bf16.gmra.mrb[0].mxu0 %v681
      %v1235 = vpop.f32.mrb[0].mxu0
      %v1236 = vadd.f32 %v1000, %v1235
      %v1237 = vpop.f32.mrb[0].mxu0
      %v1238 = vpop.f32.mrb[0].mxu0
      %v1239 = vadd.f32 %v1003, %v1238
      %v1240 = vpop.f32.mrb[0].mxu0
      %1241 = vmatprep.mubr.bf16.mxu0 %v878
      %1242 = vmatmul.mubr.bf16.gmra.mrb[0].mxu0 %v684
      %v1243 = vpop.f32.mrb[0].mxu0
      %v1244 = vadd.f32 %v1008, %v1243
      %v1245 = vpop.f32.mrb[0].mxu0
      %v1246 = vpop.f32.mrb[0].mxu0
      %v1247 = vadd.f32 %v1011, %v1246
      %v1248 = vpop.f32.mrb[0].mxu0
      %1249 = vmatprep.mubr.bf16.mxu0 %v881
      %1250 = vmatmul.mubr.bf16.gmra.mrb[0].mxu0 %v687
      %v1251 = vpop.f32.mrb[0].mxu0
      %v1252 = vadd.f32 %v1016, %v1251
      %v1253 = vpop.f32.mrb[0].mxu0
      %v1254 = vpop.f32.mrb[0].mxu0
      %v1255 = vadd.f32 %v1019, %v1254
      %v1256 = vpop.f32.mrb[0].mxu0
      %1257 = vmatprep.mubr.bf16.mxu0 %v884
      %1258 = vmatmul.mubr.bf16.gmra.mrb[0].mxu0 %v690
      %v1259 = vpop.f32.mrb[0].mxu0
      %v1260 = vadd.f32 %v1024, %v1259
      %v1261 = vpop.f32.mrb[0].mxu0
      %v1262 = vpop.f32.mrb[0].mxu0
      %v1263 = vadd.f32 %v1027, %v1262
      %v1264 = vpop.f32.mrb[0].mxu0
      %1265 = vmatprep.mubr.bf16.mxu0 %v887
      %1266 = vmatmul.mubr.bf16.gmra.mrb[0].mxu0 %v693
      %v1267 = vpop.f32.mrb[0].mxu0
      %v1268 = vadd.f32 %v1032, %v1267
      %v1269 = vpop.f32.mrb[0].mxu0
      %v1270 = vpop.f32.mrb[0].mxu0
      %v1271 = vadd.f32 %v1035, %v1270
      %v1272 = vpop.f32.mrb[0].mxu0
      %1273 = vmatprep.mubr.bf16.mxu0 %v890
      %1274 = vmatmul.mubr.bf16.gmra.mrb[0].mxu0 %v696
      %v1275 = vpop.f32.mrb[0].mxu0
      %v1276 = vadd.f32 %v1040, %v1275
      %v1277 = vpop.f32.mrb[0].mxu0
      %v1278 = vpop.f32.mrb[0].mxu0
      %v1279 = vadd.f32 %v1043, %v1278
      %v1280 = vpop.f32.mrb[0].mxu0
      %1281 = vmatprep.mubr.bf16.mxu0 %v893
      %1282 = vmatmul.mubr.bf16.gmra.mrb[0].mxu0 %v699
      %v1283 = vpop.f32.mrb[0].mxu0
      %v1284 = vadd.f32 %v1048, %v1283
      %v1285 = vpop.f32.mrb[0].mxu0
      %v1286 = vpop.f32.mrb[0].mxu0
      %v1287 = vadd.f32 %v1051, %v1286
      %v1288 = vpop.f32.mrb[0].mxu0
      %1289 = vmatprep.mubr.bf16.mxu0 %v896
      %1290 = vmatmul.mubr.bf16.gmra.mrb[0].mxu0 %v702
      %v1291 = vpop.f32.mrb[0].mxu0
      %v1292 = vadd.f32 %v1056, %v1291
      %v1293 = vpop.f32.mrb[0].mxu0
      %v1294 = vpop.f32.mrb[0].mxu0
      %v1295 = vadd.f32 %v1059, %v1294
      %v1296 = vpop.f32.mrb[0].mxu0
      %1297 = vdwg.mxu0
      %v1300 = vunpack.c.l.b16 %v250
      %v1301 = vunpack.c.l.b16 %v251
      %v1302 = vpack.c.b16 %v1301, %v1300
      %v1304 = vunpack.c.l.b16 %v252
      %v1305 = vpack.c.b16 %v1304, %v1304
      %v1307 = vshrl.u32 %v1302, 16
      %v1309 = vshll.u32 %v1302, 16
      %v1311 = vrot.slane %v1309, 1
      %v1312 = vor.u32 %v1307, %v1311
      %v1314 = vshll.u32 %v1305, 16
      %v1316 = vrot.slane %v1314, 1
      %v1317 = vsel %vm381, %v1312, %v1316
      %1318 = vrot.lane.b32.xlu0 %v1317, 64
      %v1319 = vpop.permute.xlu0 %1318
      %v1320 = vrot.slane %v1302, 1
      %v1321 = vrot.slane %v1305, 1
      %v1322 = vsel %vm606, %v1320, %v1321
      %v1324 = vsel %vm655, %v1302, %v1319
      %s1326 = scalar_lea.vmem %s1, 192
      %v1327 = vld [vmem:[%s1326] sm:$0xf]
      %v1328 = vld [vmem:[%s1326 + $0x4] sm:$0xf]
      %v1329 = vld [vmem:[%s1326 + $0x8] sm:$0xf]
      %v1330 = vld [vmem:[%s1326 + $0xc] sm:$0xf]
      %v1331 = vld [vmem:[%s1326 + $0x10] sm:$0xf]
      %v1332 = vld [vmem:[%s1326 + $0x14] sm:$0xf]
      %v1333 = vld [vmem:[%s1326 + $0x18] sm:$0xf]
      %v1334 = vld [vmem:[%s1326 + $0x1c] sm:$0xf]
      %v1335 = vld [vmem:[%s1326 + $0x20] sm:$0xf]
      %v1336 = vld [vmem:[%s1326 + $0x24] sm:$0xf]
      %v1337 = vld [vmem:[%s1326 + $0x28] sm:$0xf]
      %v1338 = vld [vmem:[%s1326 + $0x2c] sm:$0xf]
      %v1339 = vld [vmem:[%s1326 + $0x30] sm:$0xf]
      %v1340 = vld [vmem:[%s1326 + $0x34] sm:$0xf]
      %v1341 = vld [vmem:[%s1326 + $0x38] sm:$0xf]
      %v1342 = vld [vmem:[%s1326 + $0x3c] sm:$0xf]
      %v1343 = vld [vmem:[%s1326 + $0x40] sm:$0xf]
      %v1344 = vld [vmem:[%s1326 + $0x44] sm:$0xf]
      %v1345 = vld [vmem:[%s1326 + $0x48] sm:$0xf]
      %v1346 = vld [vmem:[%s1326 + $0x4c] sm:$0xf]
      %v1347 = vld [vmem:[%s1326 + $0x50] sm:$0xf]
      %v1348 = vld [vmem:[%s1326 + $0x54] sm:$0xf]
      %v1349 = vld [vmem:[%s1326 + $0x58] sm:$0xf]
      %v1350 = vld [vmem:[%s1326 + $0x5c] sm:$0xf]
      %v1375 = vunpack.c.l.b16 %v1327
      %v1376 = vunpack.c.l.b16 %v1328
      %v1377 = vunpack.c.l.b16 %v1329
      %v1378 = vunpack.c.l.b16 %v1330
      %v1379 = vunpack.c.l.b16 %v1331
      %v1380 = vunpack.c.l.b16 %v1332
      %v1381 = vunpack.c.l.b16 %v1333
      %v1382 = vunpack.c.l.b16 %v1334
      %v1383 = vunpack.c.l.b16 %v1335
      %v1384 = vunpack.c.l.b16 %v1336
      %v1385 = vunpack.c.l.b16 %v1337
      %v1386 = vunpack.c.l.b16 %v1338
      %v1387 = vunpack.c.l.b16 %v1339
      %v1388 = vunpack.c.l.b16 %v1340
      %v1389 = vunpack.c.l.b16 %v1341
      %v1390 = vunpack.c.l.b16 %v1342
      %v1391 = vunpack.c.l.b16 %v1343
      %v1392 = vunpack.c.l.b16 %v1344
      %v1393 = vunpack.c.l.b16 %v1345
      %v1394 = vunpack.c.l.b16 %v1346
      %v1395 = vunpack.c.l.b16 %v1347
      %v1396 = vunpack.c.l.b16 %v1348
      %v1397 = vunpack.c.l.b16 %v1349
      %v1398 = vunpack.c.l.b16 %v1350
      %v1399 = vpack.c.b16 %v1376, %v1375
      %v1400 = vpack.c.b16 %v1378, %v1377
      %v1401 = vpack.c.b16 %v1380, %v1379
      %v1402 = vpack.c.b16 %v1382, %v1381
      %v1403 = vpack.c.b16 %v1384, %v1383
      %v1404 = vpack.c.b16 %v1386, %v1385
      %v1405 = vpack.c.b16 %v1388, %v1387
      %v1406 = vpack.c.b16 %v1390, %v1389
      %v1407 = vpack.c.b16 %v1392, %v1391
      %v1408 = vpack.c.b16 %v1394, %v1393
      %v1409 = vpack.c.b16 %v1396, %v1395
      %v1410 = vpack.c.b16 %v1398, %v1397
      %v1424 = vsel %vm655, %v1322, 0
      %1426 = vmatprep.subr.bf16.mxu0 0
      %1427 = vmatpush1.bf16.msra.mxu0 %v1399
      %1428 = vmatprep.subr.bf16.mxu0 0
      %1429 = vmatpush1.bf16.msra.mxu0 %v1400
      %1430 = vmatprep.subr.bf16.mxu0 0
      %1431 = vmatpush1.bf16.msra.mxu0 %v1401
      %1432 = vmatprep.subr.bf16.mxu0 0
      %1433 = vmatpush1.bf16.msra.mxu0 %v1402
      %1434 = vmatprep.subr.bf16.mxu0 0
      %1435 = vmatpush1.bf16.msra.mxu0 %v1403
      %1436 = vmatprep.subr.bf16.mxu0 0
      %1437 = vmatpush1.bf16.msra.mxu0 %v1404
      %1438 = vmatprep.subr.bf16.mxu0 0
      %1439 = vmatpush1.bf16.msra.mxu0 %v1405
      %1440 = vmatprep.subr.bf16.mxu0 0
      %1441 = vmatpush1.bf16.msra.mxu0 %v1406
      %1442 = vmatprep.subr.bf16.mxu0 0
      %1443 = vmatpush1.bf16.msra.mxu0 %v1407
      %1444 = vmatprep.subr.bf16.mxu0 0
      %1445 = vmatpush1.bf16.msra.mxu0 %v1408
      %1446 = vmatprep.subr.bf16.mxu0 0
      %1447 = vmatpush1.bf16.msra.mxu0 %v1409
      %1448 = vmatprep.subr.bf16.mxu0 0
      %1449 = vmatpush1.bf16.msra.mxu0 %v1410
      %1450 = vmatprep.subr.bf16.mxu0 0
      %1451 = vmatpush1.bf16.msra.mxu0 0
      %1452 = vmatprep.subr.bf16.mxu0 0
      %1453 = vmatpush1.bf16.msra.mxu0 0
      %1454 = vmatprep.subr.bf16.mxu0 0
      %1455 = vmatpush1.bf16.msra.mxu0 0
      %1456 = vmatprep.subr.bf16.mxu0 0
      %1457 = vmatpush1.bf16.msra.mxu0 0
      %1458 = vmatprep.mubr.bf16.mxu0 %v857
      %1459 = vmatmul.mubr.bf16.gmra.mrb[0].mxu0 %v663
      %v1460 = vpop.f32.mrb[0].mxu0
      %v1461 = vadd.f32 0.0, %v1460
      %v1462 = vpop.f32.mrb[0].mxu0
      %v1463 = vpop.f32.mrb[0].mxu0
      %v1464 = vadd.f32 0.0, %v1463
      %v1465 = vpop.f32.mrb[0].mxu0
      %1466 = vmatprep.mubr.bf16.mxu0 %v860
      %1467 = vmatmul.mubr.bf16.gmra.mrb[0].mxu0 %v666
      %v1468 = vpop.f32.mrb[0].mxu0
      %v1469 = vadd.f32 0.0, %v1468
      %v1470 = vpop.f32.mrb[0].mxu0
      %v1471 = vpop.f32.mrb[0].mxu0
      %v1472 = vadd.f32 0.0, %v1471
      %v1473 = vpop.f32.mrb[0].mxu0
      %1474 = vmatprep.mubr.bf16.mxu0 %v863
      %1475 = vmatmul.mubr.bf16.gmra.mrb[0].mxu0 %v669
      %v1476 = vpop.f32.mrb[0].mxu0
      %v1477 = vadd.f32 0.0, %v1476
      %v1478 = vpop.f32.mrb[0].mxu0
      %v1479 = vpop.f32.mrb[0].mxu0
      %v1480 = vadd.f32 0.0, %v1479
      %v1481 = vpop.f32.mrb[0].mxu0
      %1482 = vmatprep.mubr.bf16.mxu0 %v866
      %1483 = vmatmul.mubr.bf16.gmra.mrb[0].mxu0 %v672
      %v1484 = vpop.f32.mrb[0].mxu0
      %v1485 = vadd.f32 0.0, %v1484
      %v1486 = vpop.f32.mrb[0].mxu0
      %v1487 = vpop.f32.mrb[0].mxu0
      %v1488 = vadd.f32 0.0, %v1487
      %v1489 = vpop.f32.mrb[0].mxu0
      %1490 = vmatprep.mubr.bf16.mxu0 %v869
      %1491 = vmatmul.mubr.bf16.gmra.mrb[0].mxu0 %v675
      %v1492 = vpop.f32.mrb[0].mxu0
      %v1493 = vadd.f32 0.0, %v1492
      %v1494 = vpop.f32.mrb[0].mxu0
      %v1495 = vpop.f32.mrb[0].mxu0
      %v1496 = vadd.f32 0.0, %v1495
      %v1497 = vpop.f32.mrb[0].mxu0
      %1498 = vmatprep.mubr.bf16.mxu0 %v872
      %1499 = vmatmul.mubr.bf16.gmra.mrb[0].mxu0 %v678
      %v1500 = vpop.f32.mrb[0].mxu0
      %v1501 = vadd.f32 0.0, %v1500
      %v1502 = vpop.f32.mrb[0].mxu0
      %v1503 = vpop.f32.mrb[0].mxu0
      %v1504 = vadd.f32 0.0, %v1503
      %v1505 = vpop.f32.mrb[0].mxu0
      %1506 = vmatprep.mubr.bf16.mxu0 %v875
      %1507 = vmatmul.mubr.bf16.gmra.mrb[0].mxu0 %v681
      %v1508 = vpop.f32.mrb[0].mxu0
      %v1509 = vadd.f32 0.0, %v1508
      %v1510 = vpop.f32.mrb[0].mxu0
      %v1511 = vpop.f32.mrb[0].mxu0
      %v1512 = vadd.f32 0.0, %v1511
      %v1513 = vpop.f32.mrb[0].mxu0
      %1514 = vmatprep.mubr.bf16.mxu0 %v878
      %1515 = vmatmul.mubr.bf16.gmra.mrb[0].mxu0 %v684
      %v1516 = vpop.f32.mrb[0].mxu0
      %v1517 = vadd.f32 0.0, %v1516
      %v1518 = vpop.f32.mrb[0].mxu0
      %v1519 = vpop.f32.mrb[0].mxu0
      %v1520 = vadd.f32 0.0, %v1519
      %v1521 = vpop.f32.mrb[0].mxu0
      %1522 = vmatprep.mubr.bf16.mxu0 %v881
      %1523 = vmatmul.mubr.bf16.gmra.mrb[0].mxu0 %v687
      %v1524 = vpop.f32.mrb[0].mxu0
      %v1525 = vadd.f32 0.0, %v1524
      %v1526 = vpop.f32.mrb[0].mxu0
      %v1527 = vpop.f32.mrb[0].mxu0
      %v1528 = vadd.f32 0.0, %v1527
      %v1529 = vpop.f32.mrb[0].mxu0
      %1530 = vmatprep.mubr.bf16.mxu0 %v884
      %1531 = vmatmul.mubr.bf16.gmra.mrb[0].mxu0 %v690
      %v1532 = vpop.f32.mrb[0].mxu0
      %v1533 = vadd.f32 0.0, %v1532
      %v1534 = vpop.f32.mrb[0].mxu0
      %v1535 = vpop.f32.mrb[0].mxu0
      %v1536 = vadd.f32 0.0, %v1535
      %v1537 = vpop.f32.mrb[0].mxu0
      %1538 = vmatprep.mubr.bf16.mxu0 %v887
      %1539 = vmatmul.mubr.bf16.gmra.mrb[0].mxu0 %v693
      %v1540 = vpop.f32.mrb[0].mxu0
      %v1541 = vadd.f32 0.0, %v1540
      %v1542 = vpop.f32.mrb[0].mxu0
      %v1543 = vpop.f32.mrb[0].mxu0
      %v1544 = vadd.f32 0.0, %v1543
      %v1545 = vpop.f32.mrb[0].mxu0
      %1546 = vmatprep.mubr.bf16.mxu0 %v890
      %1547 = vmatmul.mubr.bf16.gmra.mrb[0].mxu0 %v696
      %v1548 = vpop.f32.mrb[0].mxu0
      %v1549 = vadd.f32 0.0, %v1548
      %v1550 = vpop.f32.mrb[0].mxu0
      %v1551 = vpop.f32.mrb[0].mxu0
      %v1552 = vadd.f32 0.0, %v1551
      %v1553 = vpop.f32.mrb[0].mxu0
      %1554 = vmatprep.mubr.bf16.mxu0 %v893
      %1555 = vmatmul.mubr.bf16.gmra.mrb[0].mxu0 %v699
      %v1556 = vpop.f32.mrb[0].mxu0
      %v1557 = vadd.f32 0.0, %v1556
      %v1558 = vpop.f32.mrb[0].mxu0
      %v1559 = vpop.f32.mrb[0].mxu0
      %v1560 = vadd.f32 0.0, %v1559
      %v1561 = vpop.f32.mrb[0].mxu0
      %1562 = vmatprep.mubr.bf16.mxu0 %v896
      %1563 = vmatmul.mubr.bf16.gmra.mrb[0].mxu0 %v702
      %v1564 = vpop.f32.mrb[0].mxu0
      %v1565 = vadd.f32 0.0, %v1564
      %v1566 = vpop.f32.mrb[0].mxu0
      %v1567 = vpop.f32.mrb[0].mxu0
      %v1568 = vadd.f32 0.0, %v1567
      %v1569 = vpop.f32.mrb[0].mxu0
      %1570 = vmatprep.mubr.bf16.mxu0 %v899
      %1571 = vmatmul.mubr.bf16.gmra.mrb[0].mxu0 %v754
      %v1572 = vpop.f32.mrb[0].mxu0
      %v1573 = vadd.f32 0.0, %v1572
      %v1574 = vpop.f32.mrb[0].mxu0
      %v1575 = vpop.f32.mrb[0].mxu0
      %v1576 = vadd.f32 0.0, %v1575
      %v1577 = vpop.f32.mrb[0].mxu0
      %1578 = vmatprep.mubr.bf16.mxu0 %v1424
      %1579 = vmatmul.mubr.bf16.gmra.mrb[0].mxu0 %v1324
      %v1580 = vpop.f32.mrb[0].mxu0
      %v1581 = vadd.f32 0.0, %v1580
      %v1582 = vpop.f32.mrb[0].mxu0
      %v1583 = vpop.f32.mrb[0].mxu0
      %v1584 = vadd.f32 0.0, %v1583
      %v1585 = vpop.f32.mrb[0].mxu0
      %1586 = vdwg.mxu0
      %v1587 = vadd.f32 %v1172, %v1461
      %v1588 = vadd.f32 %v1175, %v1464
      %v1589 = vadd.f32 %v1180, %v1469
      %v1590 = vadd.f32 %v1183, %v1472
      %v1591 = vadd.f32 %v1188, %v1477
      %v1592 = vadd.f32 %v1191, %v1480
      %v1593 = vadd.f32 %v1196, %v1485
      %v1594 = vadd.f32 %v1199, %v1488
      %v1595 = vadd.f32 %v1204, %v1493
      %v1596 = vadd.f32 %v1207, %v1496
      %v1597 = vadd.f32 %v1212, %v1501
      %v1598 = vadd.f32 %v1215, %v1504
      %v1599 = vadd.f32 %v1220, %v1509
      %v1600 = vadd.f32 %v1223, %v1512
      %v1601 = vadd.f32 %v1228, %v1517
      %v1602 = vadd.f32 %v1231, %v1520
      %v1603 = vadd.f32 %v1236, %v1525
      %v1604 = vadd.f32 %v1239, %v1528
      %v1605 = vadd.f32 %v1244, %v1533
      %v1606 = vadd.f32 %v1247, %v1536
      %v1607 = vadd.f32 %v1252, %v1541
      %v1608 = vadd.f32 %v1255, %v1544
      %v1609 = vadd.f32 %v1260, %v1549
      %v1610 = vadd.f32 %v1263, %v1552
      %v1611 = vadd.f32 %v1268, %v1557
      %v1612 = vadd.f32 %v1271, %v1560
      %v1613 = vadd.f32 %v1276, %v1565
      %v1614 = vadd.f32 %v1279, %v1568
      %v1615 = vadd.f32 %v1284, %v1573
      %v1616 = vadd.f32 %v1287, %v1576
      %v1617 = vadd.f32 %v1292, %v1581
      %v1618 = vadd.f32 %v1295, %v1584
      %v1619 = vld [vmem:[%s2] sm:$0x1]
      %v1621 = vlaneseq
      %v1622 = vshrl.u32 %v1621, 7
      %v1623 = vsub.s32 0, %v1622
      %v1624 = vrot.slane %v1619, %v1623
      %v1626 = vmul.f32 %v1587, %v1624
      %v1627 = vmul.f32 %v1588, %v1624
      %v1628 = vmul.f32 %v1589, %v1624
      %v1629 = vmul.f32 %v1590, %v1624
      %v1630 = vmul.f32 %v1591, %v1624
      %v1631 = vmul.f32 %v1592, %v1624
      %v1632 = vmul.f32 %v1593, %v1624
      %v1633 = vmul.f32 %v1594, %v1624
      %v1634 = vmul.f32 %v1595, %v1624
      %v1635 = vmul.f32 %v1596, %v1624
      %v1636 = vmul.f32 %v1597, %v1624
      %v1637 = vmul.f32 %v1598, %v1624
      %v1638 = vmul.f32 %v1599, %v1624
      %v1639 = vmul.f32 %v1600, %v1624
      %v1640 = vmul.f32 %v1601, %v1624
      %v1641 = vmul.f32 %v1602, %v1624
      %v1642 = vmul.f32 %v1603, %v1624
      %v1643 = vmul.f32 %v1604, %v1624
      %v1644 = vmul.f32 %v1605, %v1624
      %v1645 = vmul.f32 %v1606, %v1624
      %v1646 = vmul.f32 %v1607, %v1624
      %v1647 = vmul.f32 %v1608, %v1624
      %v1648 = vmul.f32 %v1609, %v1624
      %v1649 = vmul.f32 %v1610, %v1624
      %v1650 = vmul.f32 %v1611, %v1624
      %v1651 = vmul.f32 %v1612, %v1624
      %v1652 = vmul.f32 %v1613, %v1624
      %v1653 = vmul.f32 %v1614, %v1624
      %v1654 = vmul.f32 %v1615, %v1624
      %v1655 = vmul.f32 %v1616, %v1624
      %v1656 = vmul.f32 %v1617, %v1624
      %v1657 = vmul.f32 %v1618, %v1624
      %v1658 = vld [vmem:[%s3] sm:$0x1]
      %v1660 = vlaneseq
      %v1661 = vshrl.u32 %v1660, 7
      %v1662 = vsub.s32 0, %v1661
      %v1663 = vrot.slane %v1658, %v1662
      %v1665 = vadd.f32 %v1626, %v1663
      %v1666 = vadd.f32 %v1627, %v1663
      %v1667 = vadd.f32 %v1628, %v1663
      %v1668 = vadd.f32 %v1629, %v1663
      %v1669 = vadd.f32 %v1630, %v1663
      %v1670 = vadd.f32 %v1631, %v1663
      %v1671 = vadd.f32 %v1632, %v1663
      %v1672 = vadd.f32 %v1633, %v1663
      %v1673 = vadd.f32 %v1634, %v1663
      %v1674 = vadd.f32 %v1635, %v1663
      %v1675 = vadd.f32 %v1636, %v1663
      %v1676 = vadd.f32 %v1637, %v1663
      %v1677 = vadd.f32 %v1638, %v1663
      %v1678 = vadd.f32 %v1639, %v1663
      %v1679 = vadd.f32 %v1640, %v1663
      %v1680 = vadd.f32 %v1641, %v1663
      %v1681 = vadd.f32 %v1642, %v1663
      %v1682 = vadd.f32 %v1643, %v1663
      %v1683 = vadd.f32 %v1644, %v1663
      %v1684 = vadd.f32 %v1645, %v1663
      %v1685 = vadd.f32 %v1646, %v1663
      %v1686 = vadd.f32 %v1647, %v1663
      %v1687 = vadd.f32 %v1648, %v1663
      %v1688 = vadd.f32 %v1649, %v1663
      %v1689 = vadd.f32 %v1650, %v1663
      %v1690 = vadd.f32 %v1651, %v1663
      %v1691 = vadd.f32 %v1652, %v1663
      %v1692 = vadd.f32 %v1653, %v1663
      %v1693 = vadd.f32 %v1654, %v1663
      %v1694 = vadd.f32 %v1655, %v1663
      %v1695 = vadd.f32 %v1656, %v1663
      %v1696 = vadd.f32 %v1657, %v1663
      %v1697 = vmax.f32 %v1665, 0.0
      %v1698 = vmax.f32 %v1666, 0.0
      %v1699 = vmax.f32 %v1667, 0.0
      %v1700 = vmax.f32 %v1668, 0.0
      %v1701 = vmax.f32 %v1669, 0.0
      %v1702 = vmax.f32 %v1670, 0.0
      %v1703 = vmax.f32 %v1671, 0.0
      %v1704 = vmax.f32 %v1672, 0.0
      %v1705 = vmax.f32 %v1673, 0.0
      %v1706 = vmax.f32 %v1674, 0.0
      %v1707 = vmax.f32 %v1675, 0.0
      %v1708 = vmax.f32 %v1676, 0.0
      %v1709 = vmax.f32 %v1677, 0.0
      %v1710 = vmax.f32 %v1678, 0.0
      %v1711 = vmax.f32 %v1679, 0.0
      %v1712 = vmax.f32 %v1680, 0.0
      %v1713 = vmax.f32 %v1681, 0.0
      %v1714 = vmax.f32 %v1682, 0.0
      %v1715 = vmax.f32 %v1683, 0.0
      %v1716 = vmax.f32 %v1684, 0.0
      %v1717 = vmax.f32 %v1685, 0.0
      %v1718 = vmax.f32 %v1686, 0.0
      %v1719 = vmax.f32 %v1687, 0.0
      %v1720 = vmax.f32 %v1688, 0.0
      %v1721 = vmax.f32 %v1689, 0.0
      %v1722 = vmax.f32 %v1690, 0.0
      %v1723 = vmax.f32 %v1691, 0.0
      %v1724 = vmax.f32 %v1692, 0.0
      %v1725 = vmax.f32 %v1693, 0.0
      %v1726 = vmax.f32 %v1694, 0.0
      %v1727 = vmax.f32 %v1695, 0.0
      %v1728 = vmax.f32 %v1696, 0.0
      %v1729 = vpack.c.bf16 %v1698, %v1697
      %v1730 = vpack.c.bf16 %v1700, %v1699
      %v1731 = vpack.c.bf16 %v1702, %v1701
      %v1732 = vpack.c.bf16 %v1704, %v1703
      %v1733 = vpack.c.bf16 %v1706, %v1705
      %v1734 = vpack.c.bf16 %v1708, %v1707
      %v1735 = vpack.c.bf16 %v1710, %v1709
      %v1736 = vpack.c.bf16 %v1712, %v1711
      %v1737 = vpack.c.bf16 %v1714, %v1713
      %v1738 = vpack.c.bf16 %v1716, %v1715
      %v1739 = vpack.c.bf16 %v1718, %v1717
      %v1740 = vpack.c.bf16 %v1720, %v1719
      %v1741 = vpack.c.bf16 %v1722, %v1721
      %v1742 = vpack.c.bf16 %v1724, %v1723
      %v1743 = vpack.c.bf16 %v1726, %v1725
      %v1744 = vpack.c.bf16 %v1728, %v1727
      %v1761 = vunpack.c.l.b16 %v1729
      %v1762 = vunpack.c.h.b16 %v1729
      %v1763 = vunpack.c.l.b16 %v1730
      %v1764 = vunpack.c.h.b16 %v1730
      %v1765 = vunpack.c.l.b16 %v1731
      %v1766 = vunpack.c.h.b16 %v1731
      %v1767 = vunpack.c.l.b16 %v1732
      %v1768 = vunpack.c.h.b16 %v1732
      %v1769 = vunpack.c.l.b16 %v1733
      %v1770 = vunpack.c.h.b16 %v1733
      %v1771 = vunpack.c.l.b16 %v1734
      %v1772 = vunpack.c.h.b16 %v1734
      %v1773 = vunpack.c.l.b16 %v1735
      %v1774 = vunpack.c.h.b16 %v1735
      %v1775 = vunpack.c.l.b16 %v1736
      %v1776 = vunpack.c.h.b16 %v1736
      %v1777 = vunpack.c.l.b16 %v1737
      %v1778 = vunpack.c.h.b16 %v1737
      %v1779 = vunpack.c.l.b16 %v1738
      %v1780 = vunpack.c.h.b16 %v1738
      %v1781 = vunpack.c.l.b16 %v1739
      %v1782 = vunpack.c.h.b16 %v1739
      %v1783 = vunpack.c.l.b16 %v1740
      %v1784 = vunpack.c.h.b16 %v1740
      %v1785 = vunpack.c.l.b16 %v1741
      %v1786 = vunpack.c.h.b16 %v1741
      %v1787 = vunpack.c.l.b16 %v1742
      %v1788 = vunpack.c.h.b16 %v1742
      %v1789 = vunpack.c.l.b16 %v1743
      %v1790 = vunpack.c.h.b16 %v1743
      %v1791 = vunpack.c.l.b16 %v1744
      %v1792 = vunpack.c.h.b16 %v1744
      %v1793 = vpack.c.b16 %v1761, %v1761
      %v1794 = vpack.c.b16 %v1762, %v1762
      %v1795 = vpack.c.b16 %v1763, %v1763
      %v1796 = vpack.c.b16 %v1764, %v1764
      %v1797 = vpack.c.b16 %v1765, %v1765
      %v1798 = vpack.c.b16 %v1766, %v1766
      %v1799 = vpack.c.b16 %v1767, %v1767
      %v1800 = vpack.c.b16 %v1768, %v1768
      %v1801 = vpack.c.b16 %v1769, %v1769
      %v1802 = vpack.c.b16 %v1770, %v1770
      %v1803 = vpack.c.b16 %v1771, %v1771
      %v1804 = vpack.c.b16 %v1772, %v1772
      %v1805 = vpack.c.b16 %v1773, %v1773
      %v1806 = vpack.c.b16 %v1774, %v1774
      %v1807 = vpack.c.b16 %v1775, %v1775
      %v1808 = vpack.c.b16 %v1776, %v1776
      %v1809 = vpack.c.b16 %v1777, %v1777
      %v1810 = vpack.c.b16 %v1778, %v1778
      %v1811 = vpack.c.b16 %v1779, %v1779
      %v1812 = vpack.c.b16 %v1780, %v1780
      %v1813 = vpack.c.b16 %v1781, %v1781
      %v1814 = vpack.c.b16 %v1782, %v1782
      %v1815 = vpack.c.b16 %v1783, %v1783
      %v1816 = vpack.c.b16 %v1784, %v1784
      %v1817 = vpack.c.b16 %v1785, %v1785
      %v1818 = vpack.c.b16 %v1786, %v1786
      %v1819 = vpack.c.b16 %v1787, %v1787
      %v1820 = vpack.c.b16 %v1788, %v1788
      %v1821 = vpack.c.b16 %v1789, %v1789
      %v1822 = vpack.c.b16 %v1790, %v1790
      %v1823 = vpack.c.b16 %v1791, %v1791
      %v1824 = vpack.c.b16 %v1792, %v1792
      %vm1857 = vcmask 519168
      %1858 = vst.msk [vmem:[%s197] sm:$0xf] %vm1857, %v1793
      %1859 = vst.msk [vmem:[%s197 + $0x4] sm:$0xf] %vm1857, %v1794
      %1860 = vst.msk [vmem:[%s197 + $0x8] sm:$0xf] %vm1857, %v1795
      %1861 = vst.msk [vmem:[%s197 + $0xc] sm:$0xf] %vm1857, %v1796
      %1862 = vst.msk [vmem:[%s197 + $0x10] sm:$0xf] %vm1857, %v1797
      %1863 = vst.msk [vmem:[%s197 + $0x14] sm:$0xf] %vm1857, %v1798
      %1864 = vst.msk [vmem:[%s197 + $0x18] sm:$0xf] %vm1857, %v1799
      %1865 = vst.msk [vmem:[%s197 + $0x1c] sm:$0xf] %vm1857, %v1800
      %1866 = vst.msk [vmem:[%s197 + $0x20] sm:$0xf] %vm1857, %v1801
      %1867 = vst.msk [vmem:[%s197 + $0x24] sm:$0xf] %vm1857, %v1802
      %1868 = vst.msk [vmem:[%s197 + $0x28] sm:$0xf] %vm1857, %v1803
      %1869 = vst.msk [vmem:[%s197 + $0x2c] sm:$0xf] %vm1857, %v1804
      %1870 = vst.msk [vmem:[%s197 + $0x30] sm:$0xf] %vm1857, %v1805
      %1871 = vst.msk [vmem:[%s197 + $0x34] sm:$0xf] %vm1857, %v1806
      %1872 = vst.msk [vmem:[%s197 + $0x38] sm:$0xf] %vm1857, %v1807
      %1873 = vst.msk [vmem:[%s197 + $0x3c] sm:$0xf] %vm1857, %v1808
      %1874 = vst.msk [vmem:[%s197 + $0x40] sm:$0xf] %vm1857, %v1809
      %1875 = vst.msk [vmem:[%s197 + $0x44] sm:$0xf] %vm1857, %v1810
      %1876 = vst.msk [vmem:[%s197 + $0x48] sm:$0xf] %vm1857, %v1811
      %1877 = vst.msk [vmem:[%s197 + $0x4c] sm:$0xf] %vm1857, %v1812
      %1878 = vst.msk [vmem:[%s197 + $0x50] sm:$0xf] %vm1857, %v1813
      %1879 = vst.msk [vmem:[%s197 + $0x54] sm:$0xf] %vm1857, %v1814
      %1880 = vst.msk [vmem:[%s197 + $0x58] sm:$0xf] %vm1857, %v1815
      %1881 = vst.msk [vmem:[%s197 + $0x5c] sm:$0xf] %vm1857, %v1816
      %1882 = vst.msk [vmem:[%s197 + $0x60] sm:$0xf] %vm1857, %v1817
      %1883 = vst.msk [vmem:[%s197 + $0x64] sm:$0xf] %vm1857, %v1818
      %1884 = vst.msk [vmem:[%s197 + $0x68] sm:$0xf] %vm1857, %v1819
      %1885 = vst.msk [vmem:[%s197 + $0x6c] sm:$0xf] %vm1857, %v1820
      %1886 = vst.msk [vmem:[%s197 + $0x70] sm:$0xf] %vm1857, %v1821
      %1887 = vst.msk [vmem:[%s197 + $0x74] sm:$0xf] %vm1857, %v1822
      %1888 = vst.msk [vmem:[%s197 + $0x78] sm:$0xf] %vm1857, %v1823
      %1889 = vst.msk [vmem:[%s197 + $0x7c] sm:$0xf] %vm1857, %v1824
      %p1890 = scmp.lt.s32.totalorder %s15, 1
      %s1891 = scalar_select %p1890, %s15, 1
      %s1892 = smul.addr %s1891, 32
      %s1893 = smul.addr %s1892, 4
      %s1894 = scalar_lea.vmem %s4, %s1893
      // Predicated region
      $region37: #{_lambda_.2} parent=35 // pred_check
        %p1895 = pneg %p122
      $region38: #{_lambda_.2} parent=35 // pred_check_branch
        %1897 = sbr.rel (%p1895) target = $region40
      $region39: #{_lambda_.2} parent=35 // pred_region
        _
      $region40: #{_lambda_.2} parent=35 // pred_fallthru
        _
    $region36: #{_lambda_.2} parent=5 // pred_fallthru
      _
    %p1898 = scmp.le.s32.totalorder 2, %s10
    // Predicated region
    $region41: #{_lambda_.2} parent=5 // pred_check
      %p1899 = pneg %p1898
    $region42: #{_lambda_.2} parent=5 // pred_check_branch
      %1901 = sbr.rel (%p1899) target = $region44
    $region43: #{_lambda_.2} parent=5 // pred_region
      %s1902 = ssub.s32 %s10, 2
      // Predicated region
      $region45: #{_lambda_.2} parent=43 // pred_check
        %p1903 = pneg %p128
      $region46: #{_lambda_.2} parent=43 // pred_check_branch
        %1905 = sbr.rel (%p1903) target = $region48
      $region47: #{_lambda_.2} parent=43 // pred_region
        %p1906 = scmp.lt.s32.totalorder %s16, 1
        %s1907 = scalar_select %p1906, %s16, 1
        %s1908 = smul.addr %s1907, 32
        %s1909 = smul.addr %s1908, 4
        %s1910 = scalar_lea.vmem %s4, %s1909
      $region48: #{_lambda_.2} parent=43 // pred_fallthru
        _
    $region44: #{_lambda_.2} parent=5 // pred_fallthru
      _
  $region6: #{_lambda_.2} parent=0 // loop_footer
    %s14 = sadd.s32 1, %s10
  $region7: #{_lambda_.2} parent=0 // loop_footer_branch
    %9 = sbr.rel target = $region3
  $region8: #{_lambda_.2} parent=0 // loop_exit
    _

// kernel: _lambda_.3
$region0: #{_lambda_.3}
  #allocation0 [shape = 'u32[]', space=smem, size = 0x4, offset = 0x4, fixed_abs, tag = 'smem constant byte address 0x4 - core index']
  #allocation1 [shape = 'u32[144,128]{1,0:T(1,128)}', space=vmem, size = 0x12000, scoped, tag = 'internal scratch']
  %s0 = inlined_call_operand.vmem [shape: bf16[2,1,18,18,64], index: 0, kind: input, shape index: {}]
  %s1 = inlined_call_operand.vmem [shape: bf16[3,192,64], index: 1, kind: input, shape index: {}]
  %s2 = inlined_call_operand.vmem [shape: f32[1,64], index: 2, kind: input, shape index: {}]
  %s3 = inlined_call_operand.vmem [shape: f32[1,64], index: 3, kind: input, shape index: {}]
  %s4 = inlined_call_operand.vmem [shape: f32[2,256,64], index: 4, kind: input, shape index: {}]
  %s5 = inlined_call_operand.hbm [shape: f32[2,256,64], index: 5, kind: output, shape index: {}]
  %s6 = sld [smem:[#allocation0]]
  $region53: #{_lambda_.3} parent=0
    _
  %s8 = ssub.s32 1, %s6
  %s9 = scalar_select 0, %s8, %s6
  $region1: #{_lambda_.3} parent=0
    #allocation2 [shape = 'u8[262144]{0}', space=vmem, size = 0x40000, scoped, tag = 'output window, operand 0']
    #allocation3 [shape = 's32[2]{0}', space=sflag, size = 0x8, scoped, tag = 'scoped memory for _lambda_.3']
    %10 = vsyncpa [#allocation3], 0
    %s11 = scalar_lea.sflag [#allocation3], 1
    %12 = vsyncpa %s11, 0
    loop: start=0, step=1, limit=4
    $region2: #{_lambda_.3} parent=1 // loop_pre_header
      _
    $region3: #{_lambda_.3} parent=1 // loop_header
      %s14 = sphi 0, %s18
      %p15 = scmp.ge.s32.totalorder %s14, 4
      %s24 = sphi 0, %s26
      %s27 = sphi 0, %s24
      %s28 = sphi 0, %s27
      %s44 = sphi 0, %s28
      %s48 = sphi 0, %s48
      %s50 = sphi 0, %s48
      %s51 = sphi 0, %s50
      %s65 = sphi 0, %s51
      %s69 = sphi 0, %s69
      %s71 = sphi 0, %s69
      %s72 = sphi 0, %s71
      %s86 = sphi 0, %s72
      %s90 = sphi 0, %s90
      %s92 = sphi 0, %s90
      %s93 = sphi 0, %s92
      %s107 = sphi 0, %s93
      %s113 = sphi 0, %s115
      %s116 = sphi 0, %s113
      %s117 = sphi 0, %s116
      %s133 = sphi 0, %s117
      %s139 = sphi 0, %s141
      %s142 = sphi 0, %s139
      %s143 = sphi 0, %s142
      %s159 = sphi 0, %s143
    $region4: #{_lambda_.3} parent=1 // loop_header_branch
      %17 = sbr.rel (%p15) target = $region8
    $region5: #{_lambda_.3} parent=1 // loop_body
      %s19 = ssub.s32 %s14, 1
      %s20 = ssub.s32 %s14, 2
      %s21 = sadd.s32 %s14, 1
      %s22 = ssub.s32 %s14, %s21
      %p23 = scmp.eq.s32.totalorder %s22, 0
      %s25 = sadd.s32 %s24, 1
      %s26 = scalar_select %p23, %s24, %s25
      %p29 = pneg %p23
      %p30 = scmp.eq.s32.totalorder %s14, 1
      %p31 = por %p29, %p30
      %p32 = scmp.ne.s32.totalorder %s24, %s27
      %p33 = scmp.eq.s32.totalorder %s14, 0
      %p34 = por %p32, %p33
      %p35 = scmp.ne.s32.totalorder %s24, %s27
      %p36 = scmp.eq.s32.totalorder %s19, 1
      %p37 = por %p35, %p36
      %p38 = scmp.ne.s32.totalorder %s27, %s28
      %p39 = scmp.eq.s32.totalorder %s19, 0
      %p40 = por %p38, %p39
      %p41 = scmp.ne.s32.totalorder %s27, %s28
      %p42 = scmp.eq.s32.totalorder %s20, 1
      %p43 = por %p41, %p42
      %p45 = scmp.ne.s32.totalorder %s28, %s44
      %p46 = scmp.eq.s32.totalorder %s20, 0
      %p47 = por %p45, %p46
      %s49 = sadd.s32 %s48, 1
      %p52 = scmp.eq.s32.totalorder %s14, 1
      %p53 = scmp.ne.s32.totalorder %s48, %s50
      %p54 = scmp.eq.s32.totalorder %s14, 0
      %p55 = por %p53, %p54
      %p56 = scmp.ne.s32.totalorder %s48, %s50
      %p57 = scmp.eq.s32.totalorder %s19, 1
      %p58 = por %p56, %p57
      %p59 = scmp.ne.s32.totalorder %s50, %s51
      %p60 = scmp.eq.s32.totalorder %s19, 0
      %p61 = por %p59, %p60
      %p62 = scmp.ne.s32.totalorder %s50, %s51
      %p63 = scmp.eq.s32.totalorder %s20, 1
      %p64 = por %p62, %p63
      %p66 = scmp.ne.s32.totalorder %s51, %s65
      %p67 = scmp.eq.s32.totalorder %s20, 0
      %p68 = por %p66, %p67
      %s70 = sadd.s32 %s69, 1
      %p73 = scmp.eq.s32.totalorder %s14, 1
      %p74 = scmp.ne.s32.totalorder %s69, %s71
      %p75 = scmp.eq.s32.totalorder %s14, 0
      %p76 = por %p74, %p75
      %p77 = scmp.ne.s32.totalorder %s69, %s71
      %p78 = scmp.eq.s32.totalorder %s19, 1
      %p79 = por %p77, %p78
      %p80 = scmp.ne.s32.totalorder %s71, %s72
      %p81 = scmp.eq.s32.totalorder %s19, 0
      %p82 = por %p80, %p81
      %p83 = scmp.ne.s32.totalorder %s71, %s72
      %p84 = scmp.eq.s32.totalorder %s20, 1
      %p85 = por %p83, %p84
      %p87 = scmp.ne.s32.totalorder %s72, %s86
      %p88 = scmp.eq.s32.totalorder %s20, 0
      %p89 = por %p87, %p88
      %s91 = sadd.s32 %s90, 1
      %p94 = scmp.eq.s32.totalorder %s14, 1
      %p95 = scmp.ne.s32.totalorder %s90, %s92
      %p96 = scmp.eq.s32.totalorder %s14, 0
      %p97 = por %p95, %p96
      %p98 = scmp.ne.s32.totalorder %s90, %s92
      %p99 = scmp.eq.s32.totalorder %s19, 1
      %p100 = por %p98, %p99
      %p101 = scmp.ne.s32.totalorder %s92, %s93
      %p102 = scmp.eq.s32.totalorder %s19, 0
      %p103 = por %p101, %p102
      %p104 = scmp.ne.s32.totalorder %s92, %s93
      %p105 = scmp.eq.s32.totalorder %s20, 1
      %p106 = por %p104, %p105
      %p108 = scmp.ne.s32.totalorder %s93, %s107
      %p109 = scmp.eq.s32.totalorder %s20, 0
      %p110 = por %p108, %p109
      %s111 = ssub.s32 %s14, %s21
      %p112 = scmp.eq.s32.totalorder %s111, 0
      %s114 = sadd.s32 %s113, 1
      %s115 = scalar_select %p112, %s113, %s114
      %p118 = pneg %p112
      %p119 = scmp.eq.s32.totalorder %s14, 1
      %p120 = por %p118, %p119
      %p121 = scmp.ne.s32.totalorder %s113, %s116
      %p122 = scmp.eq.s32.totalorder %s14, 0
      %p123 = por %p121, %p122
      %p124 = scmp.ne.s32.totalorder %s113, %s116
      %p125 = scmp.eq.s32.totalorder %s19, 1
      %p126 = por %p124, %p125
      %p127 = scmp.ne.s32.totalorder %s116, %s117
      %p128 = scmp.eq.s32.totalorder %s19, 0
      %p129 = por %p127, %p128
      %p130 = scmp.ne.s32.totalorder %s116, %s117
      %p131 = scmp.eq.s32.totalorder %s20, 1
      %p132 = por %p130, %p131
      %p134 = scmp.ne.s32.totalorder %s117, %s133
      %p135 = scmp.eq.s32.totalorder %s20, 0
      %p136 = por %p134, %p135
      %s137 = ssub.s32 %s14, %s21
      %p138 = scmp.eq.s32.totalorder %s137, 0
      %s140 = sadd.s32 %s139, 1
      %s141 = scalar_select %p138, %s139, %s140
      %p144 = pneg %p138
      %p145 = scmp.eq.s32.totalorder %s14, 1
      %p146 = por %p144, %p145
      %p147 = scmp.ne.s32.totalorder %s139, %s142
      %p148 = scmp.eq.s32.totalorder %s14, 0
      %p149 = por %p147, %p148
      %p150 = scmp.ne.s32.totalorder %s139, %s142
      %p151 = scmp.eq.s32.totalorder %s19, 1
      %p152 = por %p150, %p151
      %p153 = scmp.ne.s32.totalorder %s142, %s143
      %p154 = scmp.eq.s32.totalorder %s19, 0
      %p155 = por %p153, %p154
      %p156 = scmp.ne.s32.totalorder %s142, %s143
      %p157 = scmp.eq.s32.totalorder %s20, 1
      %p158 = por %p156, %p157
      %p160 = scmp.ne.s32.totalorder %s143, %s159
      %p161 = scmp.eq.s32.totalorder %s20, 0
      %p162 = por %p160, %p161
      %p163 = scmp.le.s32.totalorder 1, %s14
      %p164 = scmp.lt.s32.totalorder %s14, 3
      %p165 = pnand %p163, %p164
      %p166 = pneg %p165
      // Predicated region
      $region9: #{_lambda_.3} parent=5 // pred_check
        _
      $region10: #{_lambda_.3} parent=5 // pred_check_branch
        %168 = sbr.rel (%p165) target = $region12
      $region11: #{_lambda_.3} parent=5 // pred_region
        %s169 = ssub.s32 %s14, 1
        // Predicated region
        $region13: #{_lambda_.3} parent=11 // pred_check
          %p170 = pneg %p61
        $region14: #{_lambda_.3} parent=11 // pred_check_branch
          %172 = sbr.rel (%p170) target = $region16
        $region15: #{_lambda_.3} parent=11 // pred_region
          _
        $region16: #{_lambda_.3} parent=11 // pred_fallthru
          _
        // Predicated region
        $region17: #{_lambda_.3} parent=11 // pred_check
          %p173 = pneg %p82
        $region18: #{_lambda_.3} parent=11 // pred_check_branch
          %175 = sbr.rel (%p173) target = $region20
        $region19: #{_lambda_.3} parent=11 // pred_region
          _
        $region20: #{_lambda_.3} parent=11 // pred_fallthru
          _
        // Predicated region
        $region21: #{_lambda_.3} parent=11 // pred_check
          %p176 = pneg %p103
        $region22: #{_lambda_.3} parent=11 // pred_check_branch
          %178 = sbr.rel (%p176) target = $region24
        $region23: #{_lambda_.3} parent=11 // pred_region
          _
        $region24: #{_lambda_.3} parent=11 // pred_fallthru
          _
      $region12: #{_lambda_.3} parent=5 // pred_fallthru
        _
      %p179 = scmp.lt.s32.totalorder %s14, 2
      // Predicated region
      $region25: #{_lambda_.3} parent=5 // pred_check
        %p180 = pneg %p179
      $region26: #{_lambda_.3} parent=5 // pred_check_branch
        %182 = sbr.rel (%p180) target = $region28
      $region27: #{_lambda_.3} parent=5 // pred_region
        // Predicated region
        $region29: #{_lambda_.3} parent=27 // pred_check
          %p183 = pneg %p34
        $region30: #{_lambda_.3} parent=27 // pred_check_branch
          %185 = sbr.rel (%p183) target = $region32
        $region31: #{_lambda_.3} parent=27 // pred_region
          %p186 = scmp.lt.s32.totalorder %s14, 1
          %s187 = scalar_select %p186, %s14, 1
          %s188 = smul.addr %s187, 54
          %s189 = smul.addr %s188, 4
          %s190 = scalar_lea.vmem %s0, %s189
        $region32: #{_lambda_.3} parent=27 // pred_fallthru
          _
        // Predicated region
        $region33: #{_lambda_.3} parent=27 // pred_check
          %p191 = pneg %p123
        $region34: #{_lambda_.3} parent=27 // pred_check_branch
          %193 = sbr.rel (%p191) target = $region36
        $region35: #{_lambda_.3} parent=27 // pred_region
          %p194 = scmp.lt.s32.totalorder %s14, 1
          %s195 = scalar_select %p194, %s14, 1
          %s196 = smul.addr %s195, 32
          %s197 = smul.addr %s196, 8
          %s198 = scalar_lea.vmem %s4, %s197
        $region36: #{_lambda_.3} parent=27 // pred_fallthru
          _
      $region28: #{_lambda_.3} parent=5 // pred_fallthru
        _
      %p199 = scmp.le.s32.totalorder 1, %s14
      %p200 = scmp.lt.s32.totalorder %s14, 3
      %p201 = pnand %p199, %p200
      %p202 = pneg %p201
      // Predicated region
      $region37: #{_lambda_.3} parent=5 // pred_check
        _
      $region38: #{_lambda_.3} parent=5 // pred_check_branch
        %204 = sbr.rel (%p201) target = $region40
      $region39: #{_lambda_.3} parent=5 // pred_region
        %s205 = ssub.s32 %s14, 1
        %p206 = scmp.lt.s32.totalorder %s19, 1
        %s207 = scalar_select %p206, %s19, 1
        %s208 = smul.addr %s207, 54
        %s209 = smul.addr %s208, 4
        %s210 = scalar_lea.vmem %s0, %s209
        %p211 = pneg %p40
        %p212 = pneg %p37
        %p213 = pneg %p61
        %p214 = pneg %p58
        %p215 = pneg %p82
        %p216 = pneg %p79
        %p217 = pneg %p103
        %p218 = pneg %p100
        %p219 = scmp.lt.s32.totalorder %s19, 1
        %s220 = scalar_select %p219, %s19, 1
        %s221 = smul.addr %s220, 32
        %s222 = smul.addr %s221, 8
        %s223 = scalar_lea.vmem %s4, %s222
        %p224 = pneg %p129
        %p225 = pneg %p126
        %p226 = pneg %p155
        %p227 = pneg %p152
        %s228 = sand.u32 %s142, 1
        %s229 = scalar_lea.sflag [#allocation3], %s228
        %s230 = sand.u32 %s142, 1
        %s231 = smul.addr %s230, 256
        %s232 = scalar_lea.vmem [#allocation2], %s231
        %p233 = scmp.lt.s32.totalorder %s19, 1
        %s234 = scalar_select %p233, %s19, 1
        %s235 = smul.addr %s234, 54
        %s236 = smul.addr %s235, 4
        %s237 = scalar_lea.vmem %s0, %s236
        %p238 = scmp.lt.s32.totalorder %s19, 1
        %s239 = scalar_select %p238, %s19, 1
        %s240 = smul.addr %s239, 32
        %s241 = smul.addr %s240, 8
        %s242 = scalar_lea.vmem %s4, %s241
        %v244 = vld [vmem:[%s237] sm:$0xf]
        %v245 = vld [vmem:[%s237 + $0x4] sm:$0xf]
        %v246 = vld [vmem:[%s237 + $0x8] sm:$0x1]
        %v247 = vld [vmem:[%s237 + $0xc] sm:$0xf]
        %v248 = vld [vmem:[%s237 + $0x10] sm:$0xf]
        %v249 = vld [vmem:[%s237 + $0x14] sm:$0x1]
        %v250 = vld [vmem:[%s237 + $0x18] sm:$0xf]
        %v251 = vld [vmem:[%s237 + $0x1c] sm:$0xf]
        %v252 = vld [vmem:[%s237 + $0x20] sm:$0x1]
        %v253 = vld [vmem:[%s237 + $0x24] sm:$0xf]
        %v254 = vld [vmem:[%s237 + $0x28] sm:$0xf]
        %v255 = vld [vmem:[%s237 + $0x2c] sm:$0x1]
        %v256 = vld [vmem:[%s237 + $0x30] sm:$0xf]
        %v257 = vld [vmem:[%s237 + $0x34] sm:$0xf]
        %v258 = vld [vmem:[%s237 + $0x38] sm:$0x1]
        %v259 = vld [vmem:[%s237 + $0x3c] sm:$0xf]
        %v260 = vld [vmem:[%s237 + $0x40] sm:$0xf]
        %v261 = vld [vmem:[%s237 + $0x44] sm:$0x1]
        %v262 = vld [vmem:[%s237 + $0x48] sm:$0xf]
        %v263 = vld [vmem:[%s237 + $0x4c] sm:$0xf]
        %v264 = vld [vmem:[%s237 + $0x50] sm:$0x1]
        %v265 = vld [vmem:[%s237 + $0x54] sm:$0xf]
        %v266 = vld [vmem:[%s237 + $0x58] sm:$0xf]
        %v267 = vld [vmem:[%s237 + $0x5c] sm:$0x1]
        %v268 = vld [vmem:[%s237 + $0x60] sm:$0xf]
        %v269 = vld [vmem:[%s237 + $0x64] sm:$0xf]
        %v270 = vld [vmem:[%s237 + $0x68] sm:$0x1]
        %v271 = vld [vmem:[%s237 + $0x6c] sm:$0xf]
        %v272 = vld [vmem:[%s237 + $0x70] sm:$0xf]
        %v273 = vld [vmem:[%s237 + $0x74] sm:$0x1]
        %v274 = vld [vmem:[%s237 + $0x78] sm:$0xf]
        %v275 = vld [vmem:[%s237 + $0x7c] sm:$0xf]
        %v276 = vld [vmem:[%s237 + $0x80] sm:$0x1]
        %v277 = vld [vmem:[%s237 + $0x84] sm:$0xf]
        %v278 = vld [vmem:[%s237 + $0x88] sm:$0xf]
        %v279 = vld [vmem:[%s237 + $0x8c] sm:$0x1]
        %v280 = vld [vmem:[%s237 + $0x90] sm:$0xf]
        %v281 = vld [vmem:[%s237 + $0x94] sm:$0xf]
        %v282 = vld [vmem:[%s237 + $0x98] sm:$0x1]
        %v283 = vld [vmem:[%s237 + $0x9c] sm:$0xf]
        %v284 = vld [vmem:[%s237 + $0xa0] sm:$0xf]
        %v285 = vld [vmem:[%s237 + $0xa4] sm:$0x1]
        %v286 = vld [vmem:[%s237 + $0xa8] sm:$0xf]
        %v287 = vld [vmem:[%s237 + $0xac] sm:$0xf]
        %v288 = vld [vmem:[%s237 + $0xb0] sm:$0x1]
        %v289 = vld [vmem:[%s237 + $0xb4] sm:$0xf]
        %v290 = vld [vmem:[%s237 + $0xb8] sm:$0xf]
        %v291 = vld [vmem:[%s237 + $0xbc] sm:$0x1]
        %v292 = vld [vmem:[%s237 + $0xc0] sm:$0xf]
        %v293 = vld [vmem:[%s237 + $0xc4] sm:$0xf]
        %v294 = vld [vmem:[%s237 + $0xc8] sm:$0x1]
        %v295 = vld [vmem:[%s237 + $0xcc] sm:$0xf]
        %v296 = vld [vmem:[%s237 + $0xd0] sm:$0xf]
        %v297 = vld [vmem:[%s237 + $0xd4] sm:$0x1]
        %v330 = vunpack.c.l.b16 %v244
        %v331 = vunpack.c.l.b16 %v245
        %v332 = vunpack.c.l.b16 %v247
        %v333 = vunpack.c.l.b16 %v248
        %v334 = vunpack.c.l.b16 %v250
        %v335 = vunpack.c.l.b16 %v251
        %v336 = vunpack.c.l.b16 %v253
        %v337 = vunpack.c.l.b16 %v254
        %v338 = vunpack.c.l.b16 %v256
        %v339 = vunpack.c.l.b16 %v257
        %v340 = vunpack.c.l.b16 %v259
        %v341 = vunpack.c.l.b16 %v260
        %v342 = vunpack.c.l.b16 %v262
        %v343 = vunpack.c.l.b16 %v263
        %v344 = vunpack.c.l.b16 %v265
        %v345 = vunpack.c.l.b16 %v266
        %v346 = vunpack.c.l.b16 %v268
        %v347 = vunpack.c.l.b16 %v269
        %v348 = vunpack.c.l.b16 %v271
        %v349 = vunpack.c.l.b16 %v272
        %v350 = vunpack.c.l.b16 %v274
        %v351 = vunpack.c.l.b16 %v275
        %v352 = vunpack.c.l.b16 %v277
        %v353 = vunpack.c.l.b16 %v278
        %v354 = vunpack.c.l.b16 %v280
        %v355 = vunpack.c.l.b16 %v281
        %v356 = vunpack.c.l.b16 %v283
        %v357 = vunpack.c.l.b16 %v284
        %v358 = vunpack.c.l.b16 %v286
        %v359 = vunpack.c.l.b16 %v287
        %v360 = vunpack.c.l.b16 %v289
        %v361 = vunpack.c.l.b16 %v290
        %v362 = vpack.c.b16 %v331, %v330
        %v363 = vpack.c.b16 %v333, %v332
        %v364 = vpack.c.b16 %v335, %v334
        %v365 = vpack.c.b16 %v337, %v336
        %v366 = vpack.c.b16 %v339, %v338
        %v367 = vpack.c.b16 %v341, %v340
        %v368 = vpack.c.b16 %v343, %v342
        %v369 = vpack.c.b16 %v345, %v344
        %v370 = vpack.c.b16 %v347, %v346
        %v371 = vpack.c.b16 %v349, %v348
        %v372 = vpack.c.b16 %v351, %v350
        %v373 = vpack.c.b16 %v353, %v352
        %v374 = vpack.c.b16 %v355, %v354
        %v375 = vpack.c.b16 %v357, %v356
        %v376 = vpack.c.b16 %v359, %v358
        %v377 = vpack.c.b16 %v361, %v360
        %v394 = vunpack.c.l.b16 %v246
        %v395 = vunpack.c.l.b16 %v249
        %v396 = vunpack.c.l.b16 %v252
        %v397 = vunpack.c.l.b16 %v255
        %v398 = vunpack.c.l.b16 %v258
        %v399 = vunpack.c.l.b16 %v261
        %v400 = vunpack.c.l.b16 %v264
        %v401 = vunpack.c.l.b16 %v267
        %v402 = vunpack.c.l.b16 %v270
        %v403 = vunpack.c.l.b16 %v273
        %v404 = vunpack.c.l.b16 %v276
        %v405 = vunpack.c.l.b16 %v279
        %v406 = vunpack.c.l.b16 %v282
        %v407 = vunpack.c.l.b16 %v285
        %v408 = vunpack.c.l.b16 %v288
        %v409 = vunpack.c.l.b16 %v291
        %v410 = vpack.c.b16 %v394, %v394
        %v411 = vpack.c.b16 %v395, %v395
        %v412 = vpack.c.b16 %v396, %v396
        %v413 = vpack.c.b16 %v397, %v397
        %v414 = vpack.c.b16 %v398, %v398
        %v415 = vpack.c.b16 %v399, %v399
        %v416 = vpack.c.b16 %v400, %v400
        %v417 = vpack.c.b16 %v401, %v401
        %v418 = vpack.c.b16 %v402, %v402
        %v419 = vpack.c.b16 %v403, %v403
        %v420 = vpack.c.b16 %v404, %v404
        %v421 = vpack.c.b16 %v405, %v405
        %v422 = vpack.c.b16 %v406, %v406
        %v423 = vpack.c.b16 %v407, %v407
        %v424 = vpack.c.b16 %v408, %v408
        %v425 = vpack.c.b16 %v409, %v409
        %vm426 = vsmask.f32 7424
        %v428 = vshrl.u32 %v362, 16
        %v430 = vshll.u32 %v362, 16
        %v432 = vrot.slane %v430, 1
        %v433 = vor.u32 %v428, %v432
        %v435 = vshll.u32 %v410, 16
        %v437 = vrot.slane %v435, 1
        %v438 = vsel %vm426, %v433, %v437
        %v440 = vshrl.u32 %v363, 16
        %v442 = vshll.u32 %v363, 16
        %v444 = vrot.slane %v442, 1
        %v445 = vor.u32 %v440, %v444
        %v447 = vshll.u32 %v411, 16
        %v449 = vrot.slane %v447, 1
        %v450 = vsel %vm426, %v445, %v449
        %v452 = vshrl.u32 %v364, 16
        %v454 = vshll.u32 %v364, 16
        %v456 = vrot.slane %v454, 1
        %v457 = vor.u32 %v452, %v456
        %v459 = vshll.u32 %v412, 16
        %v461 = vrot.slane %v459, 1
        %v462 = vsel %vm426, %v457, %v461
        %v464 = vshrl.u32 %v365, 16
        %v466 = vshll.u32 %v365, 16
        %v468 = vrot.slane %v466, 1
        %v469 = vor.u32 %v464, %v468
        %v471 = vshll.u32 %v413, 16
        %v473 = vrot.slane %v471, 1
        %v474 = vsel %vm426, %v469, %v473
        %v476 = vshrl.u32 %v366, 16
        %v478 = vshll.u32 %v366, 16
        %v480 = vrot.slane %v478, 1
        %v481 = vor.u32 %v476, %v480
        %v483 = vshll.u32 %v414, 16
        %v485 = vrot.slane %v483, 1
        %v486 = vsel %vm426, %v481, %v485
        %v488 = vshrl.u32 %v367, 16
        %v490 = vshll.u32 %v367, 16
        %v492 = vrot.slane %v490, 1
        %v493 = vor.u32 %v488, %v492
        %v495 = vshll.u32 %v415, 16
        %v497 = vrot.slane %v495, 1
        %v498 = vsel %vm426, %v493, %v497
        %v500 = vshrl.u32 %v368, 16
        %v502 = vshll.u32 %v368, 16
        %v504 = vrot.slane %v502, 1
        %v505 = vor.u32 %v500, %v504
        %v507 = vshll.u32 %v416, 16
        %v509 = vrot.slane %v507, 1
        %v510 = vsel %vm426, %v505, %v509
        %v512 = vshrl.u32 %v369, 16
        %v514 = vshll.u32 %v369, 16
        %v516 = vrot.slane %v514, 1
        %v517 = vor.u32 %v512, %v516
        %v519 = vshll.u32 %v417, 16
        %v521 = vrot.slane %v519, 1
        %v522 = vsel %vm426, %v517, %v521
        %v524 = vshrl.u32 %v370, 16
        %v526 = vshll.u32 %v370, 16
        %v528 = vrot.slane %v526, 1
        %v529 = vor.u32 %v524, %v528
        %v531 = vshll.u32 %v418, 16
        %v533 = vrot.slane %v531, 1
        %v534 = vsel %vm426, %v529, %v533
        %v536 = vshrl.u32 %v371, 16
        %v538 = vshll.u32 %v371, 16
        %v540 = vrot.slane %v538, 1
        %v541 = vor.u32 %v536, %v540
        %v543 = vshll.u32 %v419, 16
        %v545 = vrot.slane %v543, 1
        %v546 = vsel %vm426, %v541, %v545
        %v548 = vshrl.u32 %v372, 16
        %v550 = vshll.u32 %v372, 16
        %v552 = vrot.slane %v550, 1
        %v553 = vor.u32 %v548, %v552
        %v555 = vshll.u32 %v420, 16
        %v557 = vrot.slane %v555, 1
        %v558 = vsel %vm426, %v553, %v557
        %v560 = vshrl.u32 %v373, 16
        %v562 = vshll.u32 %v373, 16
        %v564 = vrot.slane %v562, 1
        %v565 = vor.u32 %v560, %v564
        %v567 = vshll.u32 %v421, 16
        %v569 = vrot.slane %v567, 1
        %v570 = vsel %vm426, %v565, %v569
        %v572 = vshrl.u32 %v374, 16
        %v574 = vshll.u32 %v374, 16
        %v576 = vrot.slane %v574, 1
        %v577 = vor.u32 %v572, %v576
        %v579 = vshll.u32 %v422, 16
        %v581 = vrot.slane %v579, 1
        %v582 = vsel %vm426, %v577, %v581
        %v584 = vshrl.u32 %v375, 16
        %v586 = vshll.u32 %v375, 16
        %v588 = vrot.slane %v586, 1
        %v589 = vor.u32 %v584, %v588
        %v591 = vshll.u32 %v423, 16
        %v593 = vrot.slane %v591, 1
        %v594 = vsel %vm426, %v589, %v593
        %v596 = vshrl.u32 %v376, 16
        %v598 = vshll.u32 %v376, 16
        %v600 = vrot.slane %v598, 1
        %v601 = vor.u32 %v596, %v600
        %v603 = vshll.u32 %v424, 16
        %v605 = vrot.slane %v603, 1
        %v606 = vsel %vm426, %v601, %v605
        %v608 = vshrl.u32 %v377, 16
        %v610 = vshll.u32 %v377, 16
        %v612 = vrot.slane %v610, 1
        %v613 = vor.u32 %v608, %v612
        %v615 = vshll.u32 %v425, 16
        %v617 = vrot.slane %v615, 1
        %v618 = vsel %vm426, %v613, %v617
        %619 = vrot.lane.b32.xlu0 %v438, 64
        %v620 = vpop.permute.xlu0 %619
        %621 = vrot.lane.b32.xlu0 %v450, 64
        %v622 = vpop.permute.xlu0 %621
        %623 = vrot.lane.b32.xlu0 %v462, 64
        %v624 = vpop.permute.xlu0 %623
        %625 = vrot.lane.b32.xlu0 %v474, 64
        %v626 = vpop.permute.xlu0 %625
        %627 = vrot.lane.b32.xlu0 %v486, 64
        %v628 = vpop.permute.xlu0 %627
        %629 = vrot.lane.b32.xlu0 %v498, 64
        %v630 = vpop.permute.xlu0 %629
        %631 = vrot.lane.b32.xlu0 %v510, 64
        %v632 = vpop.permute.xlu0 %631
        %633 = vrot.lane.b32.xlu0 %v522, 64
        %v634 = vpop.permute.xlu0 %633
        %635 = vrot.lane.b32.xlu0 %v534, 64
        %v636 = vpop.permute.xlu0 %635
        %637 = vrot.lane.b32.xlu0 %v546, 64
        %v638 = vpop.permute.xlu0 %637
        %639 = vrot.lane.b32.xlu0 %v558, 64
        %v640 = vpop.permute.xlu0 %639
        %641 = vrot.lane.b32.xlu0 %v570, 64
        %v642 = vpop.permute.xlu0 %641
        %643 = vrot.lane.b32.xlu0 %v582, 64
        %v644 = vpop.permute.xlu0 %643
        %645 = vrot.lane.b32.xlu0 %v594, 64
        %v646 = vpop.permute.xlu0 %645
        %647 = vrot.lane.b32.xlu0 %v606, 64
        %v648 = vpop.permute.xlu0 %647
        %649 = vrot.lane.b32.xlu0 %v618, 64
        %v650 = vpop.permute.xlu0 %649
        %vm651 = vcmask 1046528
        %v652 = vrot.slane %v362, 1
        %v653 = vrot.slane %v410, 1
        %v654 = vsel %vm651, %v652, %v653
        %v655 = vrot.slane %v363, 1
        %v656 = vrot.slane %v411, 1
        %v657 = vsel %vm651, %v655, %v656
        %v658 = vrot.slane %v364, 1
        %v659 = vrot.slane %v412, 1
        %v660 = vsel %vm651, %v658, %v659
        %v661 = vrot.slane %v365, 1
        %v662 = vrot.slane %v413, 1
        %v663 = vsel %vm651, %v661, %v662
        %v664 = vrot.slane %v366, 1
        %v665 = vrot.slane %v414, 1
        %v666 = vsel %vm651, %v664, %v665
        %v667 = vrot.slane %v367, 1
        %v668 = vrot.slane %v415, 1
        %v669 = vsel %vm651, %v667, %v668
        %v670 = vrot.slane %v368, 1
        %v671 = vrot.slane %v416, 1
        %v672 = vsel %vm651, %v670, %v671
        %v673 = vrot.slane %v369, 1
        %v674 = vrot.slane %v417, 1
        %v675 = vsel %vm651, %v673, %v674
        %v676 = vrot.slane %v370, 1
        %v677 = vrot.slane %v418, 1
        %v678 = vsel %vm651, %v676, %v677
        %v679 = vrot.slane %v371, 1
        %v680 = vrot.slane %v419, 1
        %v681 = vsel %vm651, %v679, %v680
        %v682 = vrot.slane %v372, 1
        %v683 = vrot.slane %v420, 1
        %v684 = vsel %vm651, %v682, %v683
        %v685 = vrot.slane %v373, 1
        %v686 = vrot.slane %v421, 1
        %v687 = vsel %vm651, %v685, %v686
        %v688 = vrot.slane %v374, 1
        %v689 = vrot.slane %v422, 1
        %v690 = vsel %vm651, %v688, %v689
        %v691 = vrot.slane %v375, 1
        %v692 = vrot.slane %v423, 1
        %v693 = vsel %vm651, %v691, %v692
        %v694 = vrot.slane %v376, 1
        %v695 = vrot.slane %v424, 1
        %v696 = vsel %vm651, %v694, %v695
        %v697 = vrot.slane %v377, 1
        %v698 = vrot.slane %v425, 1
        %v699 = vsel %vm651, %v697, %v698
        %vm700 = vcmask 523264
        %v702 = vsel %vm700, %v362, %v620
        %v705 = vsel %vm700, %v363, %v622
        %v708 = vsel %vm700, %v364, %v624
        %v711 = vsel %vm700, %v365, %v626
        %v714 = vsel %vm700, %v366, %v628
        %v717 = vsel %vm700, %v367, %v630
        %v720 = vsel %vm700, %v368, %v632
        %v723 = vsel %vm700, %v369, %v634
        %v726 = vsel %vm700, %v370, %v636
        %v729 = vsel %vm700, %v371, %v638
        %v732 = vsel %vm700, %v372, %v640
        %v735 = vsel %vm700, %v373, %v642
        %v738 = vsel %vm700, %v374, %v644
        %v741 = vsel %vm700, %v375, %v646
        %v744 = vsel %vm700, %v376, %v648
        %v747 = vsel %vm700, %v377, %v650
        %v749 = vld [vmem:[%s1] sm:$0xf]
        %v750 = vld [vmem:[%s1 + $0x4] sm:$0xf]
        %v751 = vld [vmem:[%s1 + $0x8] sm:$0xf]
        %v752 = vld [vmem:[%s1 + $0xc] sm:$0xf]
        %v753 = vld [vmem:[%s1 + $0x10] sm:$0xf]
        %v754 = vld [vmem:[%s1 + $0x14] sm:$0xf]
        %v755 = vld [vmem:[%s1 + $0x18] sm:$0xf]
        %v756 = vld [vmem:[%s1 + $0x1c] sm:$0xf]
        %v757 = vld [vmem:[%s1 + $0x20] sm:$0xf]
        %v758 = vld [vmem:[%s1 + $0x24] sm:$0xf]
        %v759 = vld [vmem:[%s1 + $0x28] sm:$0xf]
        %v760 = vld [vmem:[%s1 + $0x2c] sm:$0xf]
        %v761 = vld [vmem:[%s1 + $0x30] sm:$0xf]
        %v762 = vld [vmem:[%s1 + $0x34] sm:$0xf]
        %v763 = vld [vmem:[%s1 + $0x38] sm:$0xf]
        %v764 = vld [vmem:[%s1 + $0x3c] sm:$0xf]
        %v765 = vld [vmem:[%s1 + $0x40] sm:$0xf]
        %v766 = vld [vmem:[%s1 + $0x44] sm:$0xf]
        %v767 = vld [vmem:[%s1 + $0x48] sm:$0xf]
        %v768 = vld [vmem:[%s1 + $0x4c] sm:$0xf]
        %v769 = vld [vmem:[%s1 + $0x50] sm:$0xf]
        %v770 = vld [vmem:[%s1 + $0x54] sm:$0xf]
        %v771 = vld [vmem:[%s1 + $0x58] sm:$0xf]
        %v772 = vld [vmem:[%s1 + $0x5c] sm:$0xf]
        %v775 = vunpack.c.l.b16 %v292
        %v776 = vunpack.c.l.b16 %v293
        %v777 = vpack.c.b16 %v776, %v775
        %v779 = vunpack.c.l.b16 %v294
        %v780 = vpack.c.b16 %v779, %v779
        %v782 = vshrl.u32 %v777, 16
        %v784 = vshll.u32 %v777, 16
        %v786 = vrot.slane %v784, 1
        %v787 = vor.u32 %v782, %v786
        %v789 = vshll.u32 %v780, 16
        %v791 = vrot.slane %v789, 1
        %v792 = vsel %vm426, %v787, %v791
        %793 = vrot.lane.b32.xlu0 %v792, 64
        %v794 = vpop.permute.xlu0 %793
        %v795 = vrot.slane %v777, 1
        %v796 = vrot.slane %v780, 1
        %v797 = vsel %vm651, %v795, %v796
        %v799 = vsel %vm700, %v777, %v794
        %s801 = scalar_lea.vmem %s1, 96
        %v802 = vld [vmem:[%s801] sm:$0xf]
        %v803 = vld [vmem:[%s801 + $0x4] sm:$0xf]
        %v804 = vld [vmem:[%s801 + $0x8] sm:$0xf]
        %v805 = vld [vmem:[%s801 + $0xc] sm:$0xf]
        %v806 = vld [vmem:[%s801 + $0x10] sm:$0xf]
        %v807 = vld [vmem:[%s801 + $0x14] sm:$0xf]
        %v808 = vld [vmem:[%s801 + $0x18] sm:$0xf]
        %v809 = vld [vmem:[%s801 + $0x1c] sm:$0xf]
        %v810 = vld [vmem:[%s801 + $0x20] sm:$0xf]
        %v811 = vld [vmem:[%s801 + $0x24] sm:$0xf]
        %v812 = vld [vmem:[%s801 + $0x28] sm:$0xf]
        %v813 = vld [vmem:[%s801 + $0x2c] sm:$0xf]
        %v814 = vld [vmem:[%s801 + $0x30] sm:$0xf]
        %v815 = vld [vmem:[%s801 + $0x34] sm:$0xf]
        %v816 = vld [vmem:[%s801 + $0x38] sm:$0xf]
        %v817 = vld [vmem:[%s801 + $0x3c] sm:$0xf]
        %v818 = vld [vmem:[%s801 + $0x40] sm:$0xf]
        %v819 = vld [vmem:[%s801 + $0x44] sm:$0xf]
        %v820 = vld [vmem:[%s801 + $0x48] sm:$0xf]
        %v821 = vld [vmem:[%s801 + $0x4c] sm:$0xf]
        %v822 = vld [vmem:[%s801 + $0x50] sm:$0xf]
        %v823 = vld [vmem:[%s801 + $0x54] sm:$0xf]
        %v824 = vld [vmem:[%s801 + $0x58] sm:$0xf]
        %v825 = vld [vmem:[%s801 + $0x5c] sm:$0xf]
        %v850 = vunpack.c.l.b16 %v802
        %v851 = vunpack.c.l.b16 %v803
        %v852 = vunpack.c.l.b16 %v804
        %v853 = vunpack.c.l.b16 %v805
        %v854 = vunpack.c.l.b16 %v806
        %v855 = vunpack.c.l.b16 %v807
        %v856 = vunpack.c.l.b16 %v808
        %v857 = vunpack.c.l.b16 %v809
        %v858 = vunpack.c.l.b16 %v810
        %v859 = vunpack.c.l.b16 %v811
        %v860 = vunpack.c.l.b16 %v812
        %v861 = vunpack.c.l.b16 %v813
        %v862 = vunpack.c.l.b16 %v814
        %v863 = vunpack.c.l.b16 %v815
        %v864 = vunpack.c.l.b16 %v816
        %v865 = vunpack.c.l.b16 %v817
        %v866 = vunpack.c.l.b16 %v818
        %v867 = vunpack.c.l.b16 %v819
        %v868 = vunpack.c.l.b16 %v820
        %v869 = vunpack.c.l.b16 %v821
        %v870 = vunpack.c.l.b16 %v822
        %v871 = vunpack.c.l.b16 %v823
        %v872 = vunpack.c.l.b16 %v824
        %v873 = vunpack.c.l.b16 %v825
        %v874 = vpack.c.b16 %v851, %v850
        %v875 = vpack.c.b16 %v853, %v852
        %v876 = vpack.c.b16 %v855, %v854
        %v877 = vpack.c.b16 %v857, %v856
        %v878 = vpack.c.b16 %v859, %v858
        %v879 = vpack.c.b16 %v861, %v860
        %v880 = vpack.c.b16 %v863, %v862
        %v881 = vpack.c.b16 %v865, %v864
        %v882 = vpack.c.b16 %v867, %v866
        %v883 = vpack.c.b16 %v869, %v868
        %v884 = vpack.c.b16 %v871, %v870
        %v885 = vpack.c.b16 %v873, %v872
        %v899 = vsel %vm700, %v657, 0
        %v902 = vsel %vm700, %v660, 0
        %v905 = vsel %vm700, %v663, 0
        %v908 = vsel %vm700, %v666, 0
        %v911 = vsel %vm700, %v669, 0
        %v914 = vsel %vm700, %v672, 0
        %v917 = vsel %vm700, %v675, 0
        %v920 = vsel %vm700, %v678, 0
        %v923 = vsel %vm700, %v681, 0
        %v926 = vsel %vm700, %v684, 0
        %v929 = vsel %vm700, %v687, 0
        %v932 = vsel %vm700, %v690, 0
        %v935 = vsel %vm700, %v693, 0
        %v938 = vsel %vm700, %v696, 0
        %v941 = vsel %vm700, %v699, 0
        %v944 = vsel %vm700, %v797, 0
        %946 = vmatprep.subr.bf16.mxu0 0
        %947 = vmatpush1.bf16.msra.mxu0 %v874
        %948 = vmatprep.subr.bf16.mxu0 0
        %949 = vmatpush1.bf16.msra.mxu0 %v875
        %950 = vmatprep.subr.bf16.mxu0 0
        %951 = vmatpush1.bf16.msra.mxu0 %v876
        %952 = vmatprep.subr.bf16.mxu0 0
        %953 = vmatpush1.bf16.msra.mxu0 %v877
        %954 = vmatprep.subr.bf16.mxu0 0
        %955 = vmatpush1.bf16.msra.mxu0 %v878
        %956 = vmatprep.subr.bf16.mxu0 0
        %957 = vmatpush1.bf16.msra.mxu0 %v879
        %958 = vmatprep.subr.bf16.mxu0 0
        %959 = vmatpush1.bf16.msra.mxu0 %v880
        %960 = vmatprep.subr.bf16.mxu0 0
        %961 = vmatpush1.bf16.msra.mxu0 %v881
        %962 = vmatprep.subr.bf16.mxu0 0
        %963 = vmatpush1.bf16.msra.mxu0 %v882
        %964 = vmatprep.subr.bf16.mxu0 0
        %965 = vmatpush1.bf16.msra.mxu0 %v883
        %966 = vmatprep.subr.bf16.mxu0 0
        %967 = vmatpush1.bf16.msra.mxu0 %v884
        %968 = vmatprep.subr.bf16.mxu0 0
        %969 = vmatpush1.bf16.msra.mxu0 %v885
        %970 = vmatprep.subr.bf16.mxu0 0
        %971 = vmatpush1.bf16.msra.mxu0 0
        %972 = vmatprep.subr.bf16.mxu0 0
        %973 = vmatpush1.bf16.msra.mxu0 0
        %974 = vmatprep.subr.bf16.mxu0 0
        %975 = vmatpush1.bf16.msra.mxu0 0
        %976 = vmatprep.subr.bf16.mxu0 0
        %977 = vmatpush1.bf16.msra.mxu0 0
        %978 = vmatprep.mubr.bf16.mxu0 %v899
        %979 = vmatmul.mubr.bf16.gmra.mrb[0].mxu0 %v705
        %v980 = vpop.f32.mrb[0].mxu0
        %v981 = vadd.f32 0.0, %v980
        %v982 = vpop.f32.mrb[0].mxu0
        %v983 = vpop.f32.mrb[0].mxu0
        %v984 = vadd.f32 0.0, %v983
        %v985 = vpop.f32.mrb[0].mxu0
        %986 = vmatprep.mubr.bf16.mxu0 %v902
        %987 = vmatmul.mubr.bf16.gmra.mrb[0].mxu0 %v708
        %v988 = vpop.f32.mrb[0].mxu0
        %v989 = vadd.f32 0.0, %v988
        %v990 = vpop.f32.mrb[0].mxu0
        %v991 = vpop.f32.mrb[0].mxu0
        %v992 = vadd.f32 0.0, %v991
        %v993 = vpop.f32.mrb[0].mxu0
        %994 = vmatprep.mubr.bf16.mxu0 %v905
        %995 = vmatmul.mubr.bf16.gmra.mrb[0].mxu0 %v711
        %v996 = vpop.f32.mrb[0].mxu0
        %v997 = vadd.f32 0.0, %v996
        %v998 = vpop.f32.mrb[0].mxu0
        %v999 = vpop.f32.mrb[0].mxu0
        %v1000 = vadd.f32 0.0, %v999
        %v1001 = vpop.f32.mrb[0].mxu0
        %1002 = vmatprep.mubr.bf16.mxu0 %v908
        %1003 = vmatmul.mubr.bf16.gmra.mrb[0].mxu0 %v714
        %v1004 = vpop.f32.mrb[0].mxu0
        %v1005 = vadd.f32 0.0, %v1004
        %v1006 = vpop.f32.mrb[0].mxu0
        %v1007 = vpop.f32.mrb[0].mxu0
        %v1008 = vadd.f32 0.0, %v1007
        %v1009 = vpop.f32.mrb[0].mxu0
        %1010 = vmatprep.mubr.bf16.mxu0 %v911
        %1011 = vmatmul.mubr.bf16.gmra.mrb[0].mxu0 %v717
        %v1012 = vpop.f32.mrb[0].mxu0
        %v1013 = vadd.f32 0.0, %v1012
        %v1014 = vpop.f32.mrb[0].mxu0
        %v1015 = vpop.f32.mrb[0].mxu0
        %v1016 = vadd.f32 0.0, %v1015
        %v1017 = vpop.f32.mrb[0].mxu0
        %1018 = vmatprep.mubr.bf16.mxu0 %v914
        %1019 = vmatmul.mubr.bf16.gmra.mrb[0].mxu0 %v720
        %v1020 = vpop.f32.mrb[0].mxu0
        %v1021 = vadd.f32 0.0, %v1020
        %v1022 = vpop.f32.mrb[0].mxu0
        %v1023 = vpop.f32.mrb[0].mxu0
        %v1024 = vadd.f32 0.0, %v1023
        %v1025 = vpop.f32.mrb[0].mxu0
        %1026 = vmatprep.mubr.bf16.mxu0 %v917
        %1027 = vmatmul.mubr.bf16.gmra.mrb[0].mxu0 %v723
        %v1028 = vpop.f32.mrb[0].mxu0
        %v1029 = vadd.f32 0.0, %v1028
        %v1030 = vpop.f32.mrb[0].mxu0
        %v1031 = vpop.f32.mrb[0].mxu0
        %v1032 = vadd.f32 0.0, %v1031
        %v1033 = vpop.f32.mrb[0].mxu0
        %1034 = vmatprep.mubr.bf16.mxu0 %v920
        %1035 = vmatmul.mubr.bf16.gmra.mrb[0].mxu0 %v726
        %v1036 = vpop.f32.mrb[0].mxu0
        %v1037 = vadd.f32 0.0, %v1036
        %v1038 = vpop.f32.mrb[0].mxu0
        %v1039 = vpop.f32.mrb[0].mxu0
        %v1040 = vadd.f32 0.0, %v1039
        %v1041 = vpop.f32.mrb[0].mxu0
        %1042 = vmatprep.mubr.bf16.mxu0 %v923
        %1043 = vmatmul.mubr.bf16.gmra.mrb[0].mxu0 %v729
        %v1044 = vpop.f32.mrb[0].mxu0
        %v1045 = vadd.f32 0.0, %v1044
        %v1046 = vpop.f32.mrb[0].mxu0
        %v1047 = vpop.f32.mrb[0].mxu0
        %v1048 = vadd.f32 0.0, %v1047
        %v1049 = vpop.f32.mrb[0].mxu0
        %1050 = vmatprep.mubr.bf16.mxu0 %v926
        %1051 = vmatmul.mubr.bf16.gmra.mrb[0].mxu0 %v732
        %v1052 = vpop.f32.mrb[0].mxu0
        %v1053 = vadd.f32 0.0, %v1052
        %v1054 = vpop.f32.mrb[0].mxu0
        %v1055 = vpop.f32.mrb[0].mxu0
        %v1056 = vadd.f32 0.0, %v1055
        %v1057 = vpop.f32.mrb[0].mxu0
        %1058 = vmatprep.mubr.bf16.mxu0 %v929
        %1059 = vmatmul.mubr.bf16.gmra.mrb[0].mxu0 %v735
        %v1060 = vpop.f32.mrb[0].mxu0
        %v1061 = vadd.f32 0.0, %v1060
        %v1062 = vpop.f32.mrb[0].mxu0
        %v1063 = vpop.f32.mrb[0].mxu0
        %v1064 = vadd.f32 0.0, %v1063
        %v1065 = vpop.f32.mrb[0].mxu0
        %1066 = vmatprep.mubr.bf16.mxu0 %v932
        %1067 = vmatmul.mubr.bf16.gmra.mrb[0].mxu0 %v738
        %v1068 = vpop.f32.mrb[0].mxu0
        %v1069 = vadd.f32 0.0, %v1068
        %v1070 = vpop.f32.mrb[0].mxu0
        %v1071 = vpop.f32.mrb[0].mxu0
        %v1072 = vadd.f32 0.0, %v1071
        %v1073 = vpop.f32.mrb[0].mxu0
        %1074 = vmatprep.mubr.bf16.mxu0 %v935
        %1075 = vmatmul.mubr.bf16.gmra.mrb[0].mxu0 %v741
        %v1076 = vpop.f32.mrb[0].mxu0
        %v1077 = vadd.f32 0.0, %v1076
        %v1078 = vpop.f32.mrb[0].mxu0
        %v1079 = vpop.f32.mrb[0].mxu0
        %v1080 = vadd.f32 0.0, %v1079
        %v1081 = vpop.f32.mrb[0].mxu0
        %1082 = vmatprep.mubr.bf16.mxu0 %v938
        %1083 = vmatmul.mubr.bf16.gmra.mrb[0].mxu0 %v744
        %v1084 = vpop.f32.mrb[0].mxu0
        %v1085 = vadd.f32 0.0, %v1084
        %v1086 = vpop.f32.mrb[0].mxu0
        %v1087 = vpop.f32.mrb[0].mxu0
        %v1088 = vadd.f32 0.0, %v1087
        %v1089 = vpop.f32.mrb[0].mxu0
        %1090 = vmatprep.mubr.bf16.mxu0 %v941
        %1091 = vmatmul.mubr.bf16.gmra.mrb[0].mxu0 %v747
        %v1092 = vpop.f32.mrb[0].mxu0
        %v1093 = vadd.f32 0.0, %v1092
        %v1094 = vpop.f32.mrb[0].mxu0
        %v1095 = vpop.f32.mrb[0].mxu0
        %v1096 = vadd.f32 0.0, %v1095
        %v1097 = vpop.f32.mrb[0].mxu0
        %1098 = vmatprep.mubr.bf16.mxu0 %v944
        %1099 = vmatmul.mubr.bf16.gmra.mrb[0].mxu0 %v799
        %v1100 = vpop.f32.mrb[0].mxu0
        %v1101 = vadd.f32 0.0, %v1100
        %v1102 = vpop.f32.mrb[0].mxu0
        %v1103 = vpop.f32.mrb[0].mxu0
        %v1104 = vadd.f32 0.0, %v1103
        %v1105 = vpop.f32.mrb[0].mxu0
        %1106 = vdwg.mxu0
        %v1131 = vunpack.c.l.b16 %v749
        %v1132 = vunpack.c.l.b16 %v750
        %v1133 = vunpack.c.l.b16 %v751
        %v1134 = vunpack.c.l.b16 %v752
        %v1135 = vunpack.c.l.b16 %v753
        %v1136 = vunpack.c.l.b16 %v754
        %v1137 = vunpack.c.l.b16 %v755
        %v1138 = vunpack.c.l.b16 %v756
        %v1139 = vunpack.c.l.b16 %v757
        %v1140 = vunpack.c.l.b16 %v758
        %v1141 = vunpack.c.l.b16 %v759
        %v1142 = vunpack.c.l.b16 %v760
        %v1143 = vunpack.c.l.b16 %v761
        %v1144 = vunpack.c.l.b16 %v762
        %v1145 = vunpack.c.l.b16 %v763
        %v1146 = vunpack.c.l.b16 %v764
        %v1147 = vunpack.c.l.b16 %v765
        %v1148 = vunpack.c.l.b16 %v766
        %v1149 = vunpack.c.l.b16 %v767
        %v1150 = vunpack.c.l.b16 %v768
        %v1151 = vunpack.c.l.b16 %v769
        %v1152 = vunpack.c.l.b16 %v770
        %v1153 = vunpack.c.l.b16 %v771
        %v1154 = vunpack.c.l.b16 %v772
        %v1155 = vpack.c.b16 %v1132, %v1131
        %v1156 = vpack.c.b16 %v1134, %v1133
        %v1157 = vpack.c.b16 %v1136, %v1135
        %v1158 = vpack.c.b16 %v1138, %v1137
        %v1159 = vpack.c.b16 %v1140, %v1139
        %v1160 = vpack.c.b16 %v1142, %v1141
        %v1161 = vpack.c.b16 %v1144, %v1143
        %v1162 = vpack.c.b16 %v1146, %v1145
        %v1163 = vpack.c.b16 %v1148, %v1147
        %v1164 = vpack.c.b16 %v1150, %v1149
        %v1165 = vpack.c.b16 %v1152, %v1151
        %v1166 = vpack.c.b16 %v1154, %v1153
        %v1180 = vsel %vm700, %v654, 0
        %1182 = vmatprep.subr.bf16.mxu0 0
        %1183 = vmatpush1.bf16.msra.mxu0 %v1155
        %1184 = vmatprep.subr.bf16.mxu0 0
        %1185 = vmatpush1.bf16.msra.mxu0 %v1156
        %1186 = vmatprep.subr.bf16.mxu0 0
        %1187 = vmatpush1.bf16.msra.mxu0 %v1157
        %1188 = vmatprep.subr.bf16.mxu0 0
        %1189 = vmatpush1.bf16.msra.mxu0 %v1158
        %1190 = vmatprep.subr.bf16.mxu0 0
        %1191 = vmatpush1.bf16.msra.mxu0 %v1159
        %1192 = vmatprep.subr.bf16.mxu0 0
        %1193 = vmatpush1.bf16.msra.mxu0 %v1160
        %1194 = vmatprep.subr.bf16.mxu0 0
        %1195 = vmatpush1.bf16.msra.mxu0 %v1161
        %1196 = vmatprep.subr.bf16.mxu0 0
        %1197 = vmatpush1.bf16.msra.mxu0 %v1162
        %1198 = vmatprep.subr.bf16.mxu0 0
        %1199 = vmatpush1.bf16.msra.mxu0 %v1163
        %1200 = vmatprep.subr.bf16.mxu0 0
        %1201 = vmatpush1.bf16.msra.mxu0 %v1164
        %1202 = vmatprep.subr.bf16.mxu0 0
        %1203 = vmatpush1.bf16.msra.mxu0 %v1165
        %1204 = vmatprep.subr.bf16.mxu0 0
        %1205 = vmatpush1.bf16.msra.mxu0 %v1166
        %1206 = vmatprep.subr.bf16.mxu0 0
        %1207 = vmatpush1.bf16.msra.mxu0 0
        %1208 = vmatprep.subr.bf16.mxu0 0
        %1209 = vmatpush1.bf16.msra.mxu0 0
        %1210 = vmatprep.subr.bf16.mxu0 0
        %1211 = vmatpush1.bf16.msra.mxu0 0
        %1212 = vmatprep.subr.bf16.mxu0 0
        %1213 = vmatpush1.bf16.msra.mxu0 0
        %1214 = vmatprep.mubr.bf16.mxu0 %v1180
        %1215 = vmatmul.mubr.bf16.gmra.mrb[0].mxu0 %v702
        %v1216 = vpop.f32.mrb[0].mxu0
        %v1217 = vadd.f32 %v981, %v1216
        %v1218 = vpop.f32.mrb[0].mxu0
        %v1219 = vpop.f32.mrb[0].mxu0
        %v1220 = vadd.f32 %v984, %v1219
        %v1221 = vpop.f32.mrb[0].mxu0
        %1222 = vmatprep.mubr.bf16.mxu0 %v899
        %1223 = vmatmul.mubr.bf16.gmra.mrb[0].mxu0 %v705
        %v1224 = vpop.f32.mrb[0].mxu0
        %v1225 = vadd.f32 %v989, %v1224
        %v1226 = vpop.f32.mrb[0].mxu0
        %v1227 = vpop.f32.mrb[0].mxu0
        %v1228 = vadd.f32 %v992, %v1227
        %v1229 = vpop.f32.mrb[0].mxu0
        %1230 = vmatprep.mubr.bf16.mxu0 %v902
        %1231 = vmatmul.mubr.bf16.gmra.mrb[0].mxu0 %v708
        %v1232 = vpop.f32.mrb[0].mxu0
        %v1233 = vadd.f32 %v997, %v1232
        %v1234 = vpop.f32.mrb[0].mxu0
        %v1235 = vpop.f32.mrb[0].mxu0
        %v1236 = vadd.f32 %v1000, %v1235
        %v1237 = vpop.f32.mrb[0].mxu0
        %1238 = vmatprep.mubr.bf16.mxu0 %v905
        %1239 = vmatmul.mubr.bf16.gmra.mrb[0].mxu0 %v711
        %v1240 = vpop.f32.mrb[0].mxu0
        %v1241 = vadd.f32 %v1005, %v1240
        %v1242 = vpop.f32.mrb[0].mxu0
        %v1243 = vpop.f32.mrb[0].mxu0
        %v1244 = vadd.f32 %v1008, %v1243
        %v1245 = vpop.f32.mrb[0].mxu0
        %1246 = vmatprep.mubr.bf16.mxu0 %v908
        %1247 = vmatmul.mubr.bf16.gmra.mrb[0].mxu0 %v714
        %v1248 = vpop.f32.mrb[0].mxu0
        %v1249 = vadd.f32 %v1013, %v1248
        %v1250 = vpop.f32.mrb[0].mxu0
        %v1251 = vpop.f32.mrb[0].mxu0
        %v1252 = vadd.f32 %v1016, %v1251
        %v1253 = vpop.f32.mrb[0].mxu0
        %1254 = vmatprep.mubr.bf16.mxu0 %v911
        %1255 = vmatmul.mubr.bf16.gmra.mrb[0].mxu0 %v717
        %v1256 = vpop.f32.mrb[0].mxu0
        %v1257 = vadd.f32 %v1021, %v1256
        %v1258 = vpop.f32.mrb[0].mxu0
        %v1259 = vpop.f32.mrb[0].mxu0
        %v1260 = vadd.f32 %v1024, %v1259
        %v1261 = vpop.f32.mrb[0].mxu0
        %1262 = vmatprep.mubr.bf16.mxu0 %v914
        %1263 = vmatmul.mubr.bf16.gmra.mrb[0].mxu0 %v720
        %v1264 = vpop.f32.mrb[0].mxu0
        %v1265 = vadd.f32 %v1029, %v1264
        %v1266 = vpop.f32.mrb[0].mxu0
        %v1267 = vpop.f32.mrb[0].mxu0
        %v1268 = vadd.f32 %v1032, %v1267
        %v1269 = vpop.f32.mrb[0].mxu0
        %1270 = vmatprep.mubr.bf16.mxu0 %v917
        %1271 = vmatmul.mubr.bf16.gmra.mrb[0].mxu0 %v723
        %v1272 = vpop.f32.mrb[0].mxu0
        %v1273 = vadd.f32 %v1037, %v1272
        %v1274 = vpop.f32.mrb[0].mxu0
        %v1275 = vpop.f32.mrb[0].mxu0
        %v1276 = vadd.f32 %v1040, %v1275
        %v1277 = vpop.f32.mrb[0].mxu0
        %1278 = vmatprep.mubr.bf16.mxu0 %v920
        %1279 = vmatmul.mubr.bf16.gmra.mrb[0].mxu0 %v726
        %v1280 = vpop.f32.mrb[0].mxu0
        %v1281 = vadd.f32 %v1045, %v1280
        %v1282 = vpop.f32.mrb[0].mxu0
        %v1283 = vpop.f32.mrb[0].mxu0
        %v1284 = vadd.f32 %v1048, %v1283
        %v1285 = vpop.f32.mrb[0].mxu0
        %1286 = vmatprep.mubr.bf16.mxu0 %v923
        %1287 = vmatmul.mubr.bf16.gmra.mrb[0].mxu0 %v729
        %v1288 = vpop.f32.mrb[0].mxu0
        %v1289 = vadd.f32 %v1053, %v1288
        %v1290 = vpop.f32.mrb[0].mxu0
        %v1291 = vpop.f32.mrb[0].mxu0
        %v1292 = vadd.f32 %v1056, %v1291
        %v1293 = vpop.f32.mrb[0].mxu0
        %1294 = vmatprep.mubr.bf16.mxu0 %v926
        %1295 = vmatmul.mubr.bf16.gmra.mrb[0].mxu0 %v732
        %v1296 = vpop.f32.mrb[0].mxu0
        %v1297 = vadd.f32 %v1061, %v1296
        %v1298 = vpop.f32.mrb[0].mxu0
        %v1299 = vpop.f32.mrb[0].mxu0
        %v1300 = vadd.f32 %v1064, %v1299
        %v1301 = vpop.f32.mrb[0].mxu0
        %1302 = vmatprep.mubr.bf16.mxu0 %v929
        %1303 = vmatmul.mubr.bf16.gmra.mrb[0].mxu0 %v735
        %v1304 = vpop.f32.mrb[0].mxu0
        %v1305 = vadd.f32 %v1069, %v1304
        %v1306 = vpop.f32.mrb[0].mxu0
        %v1307 = vpop.f32.mrb[0].mxu0
        %v1308 = vadd.f32 %v1072, %v1307
        %v1309 = vpop.f32.mrb[0].mxu0
        %1310 = vmatprep.mubr.bf16.mxu0 %v932
        %1311 = vmatmul.mubr.bf16.gmra.mrb[0].mxu0 %v738
        %v1312 = vpop.f32.mrb[0].mxu0
        %v1313 = vadd.f32 %v1077, %v1312
        %v1314 = vpop.f32.mrb[0].mxu0
        %v1315 = vpop.f32.mrb[0].mxu0
        %v1316 = vadd.f32 %v1080, %v1315
        %v1317 = vpop.f32.mrb[0].mxu0
        %1318 = vmatprep.mubr.bf16.mxu0 %v935
        %1319 = vmatmul.mubr.bf16.gmra.mrb[0].mxu0 %v741
        %v1320 = vpop.f32.mrb[0].mxu0
        %v1321 = vadd.f32 %v1085, %v1320
        %v1322 = vpop.f32.mrb[0].mxu0
        %v1323 = vpop.f32.mrb[0].mxu0
        %v1324 = vadd.f32 %v1088, %v1323
        %v1325 = vpop.f32.mrb[0].mxu0
        %1326 = vmatprep.mubr.bf16.mxu0 %v938
        %1327 = vmatmul.mubr.bf16.gmra.mrb[0].mxu0 %v744
        %v1328 = vpop.f32.mrb[0].mxu0
        %v1329 = vadd.f32 %v1093, %v1328
        %v1330 = vpop.f32.mrb[0].mxu0
        %v1331 = vpop.f32.mrb[0].mxu0
        %v1332 = vadd.f32 %v1096, %v1331
        %v1333 = vpop.f32.mrb[0].mxu0
        %1334 = vmatprep.mubr.bf16.mxu0 %v941
        %1335 = vmatmul.mubr.bf16.gmra.mrb[0].mxu0 %v747
        %v1336 = vpop.f32.mrb[0].mxu0
        %v1337 = vadd.f32 %v1101, %v1336
        %v1338 = vpop.f32.mrb[0].mxu0
        %v1339 = vpop.f32.mrb[0].mxu0
        %v1340 = vadd.f32 %v1104, %v1339
        %v1341 = vpop.f32.mrb[0].mxu0
        %1342 = vdwg.mxu0
        %v1345 = vunpack.c.l.b16 %v295
        %v1346 = vunpack.c.l.b16 %v296
        %v1347 = vpack.c.b16 %v1346, %v1345
        %v1349 = vunpack.c.l.b16 %v297
        %v1350 = vpack.c.b16 %v1349, %v1349
        %v1352 = vshrl.u32 %v1347, 16
        %v1354 = vshll.u32 %v1347, 16
        %v1356 = vrot.slane %v1354, 1
        %v1357 = vor.u32 %v1352, %v1356
        %v1359 = vshll.u32 %v1350, 16
        %v1361 = vrot.slane %v1359, 1
        %v1362 = vsel %vm426, %v1357, %v1361
        %1363 = vrot.lane.b32.xlu0 %v1362, 64
        %v1364 = vpop.permute.xlu0 %1363
        %v1365 = vrot.slane %v1347, 1
        %v1366 = vrot.slane %v1350, 1
        %v1367 = vsel %vm651, %v1365, %v1366
        %v1369 = vsel %vm700, %v1347, %v1364
        %s1371 = scalar_lea.vmem %s1, 192
        %v1372 = vld [vmem:[%s1371] sm:$0xf]
        %v1373 = vld [vmem:[%s1371 + $0x4] sm:$0xf]
        %v1374 = vld [vmem:[%s1371 + $0x8] sm:$0xf]
        %v1375 = vld [vmem:[%s1371 + $0xc] sm:$0xf]
        %v1376 = vld [vmem:[%s1371 + $0x10] sm:$0xf]
        %v1377 = vld [vmem:[%s1371 + $0x14] sm:$0xf]
        %v1378 = vld [vmem:[%s1371 + $0x18] sm:$0xf]
        %v1379 = vld [vmem:[%s1371 + $0x1c] sm:$0xf]
        %v1380 = vld [vmem:[%s1371 + $0x20] sm:$0xf]
        %v1381 = vld [vmem:[%s1371 + $0x24] sm:$0xf]
        %v1382 = vld [vmem:[%s1371 + $0x28] sm:$0xf]
        %v1383 = vld [vmem:[%s1371 + $0x2c] sm:$0xf]
        %v1384 = vld [vmem:[%s1371 + $0x30] sm:$0xf]
        %v1385 = vld [vmem:[%s1371 + $0x34] sm:$0xf]
        %v1386 = vld [vmem:[%s1371 + $0x38] sm:$0xf]
        %v1387 = vld [vmem:[%s1371 + $0x3c] sm:$0xf]
        %v1388 = vld [vmem:[%s1371 + $0x40] sm:$0xf]
        %v1389 = vld [vmem:[%s1371 + $0x44] sm:$0xf]
        %v1390 = vld [vmem:[%s1371 + $0x48] sm:$0xf]
        %v1391 = vld [vmem:[%s1371 + $0x4c] sm:$0xf]
        %v1392 = vld [vmem:[%s1371 + $0x50] sm:$0xf]
        %v1393 = vld [vmem:[%s1371 + $0x54] sm:$0xf]
        %v1394 = vld [vmem:[%s1371 + $0x58] sm:$0xf]
        %v1395 = vld [vmem:[%s1371 + $0x5c] sm:$0xf]
        %v1420 = vunpack.c.l.b16 %v1372
        %v1421 = vunpack.c.l.b16 %v1373
        %v1422 = vunpack.c.l.b16 %v1374
        %v1423 = vunpack.c.l.b16 %v1375
        %v1424 = vunpack.c.l.b16 %v1376
        %v1425 = vunpack.c.l.b16 %v1377
        %v1426 = vunpack.c.l.b16 %v1378
        %v1427 = vunpack.c.l.b16 %v1379
        %v1428 = vunpack.c.l.b16 %v1380
        %v1429 = vunpack.c.l.b16 %v1381
        %v1430 = vunpack.c.l.b16 %v1382
        %v1431 = vunpack.c.l.b16 %v1383
        %v1432 = vunpack.c.l.b16 %v1384
        %v1433 = vunpack.c.l.b16 %v1385
        %v1434 = vunpack.c.l.b16 %v1386
        %v1435 = vunpack.c.l.b16 %v1387
        %v1436 = vunpack.c.l.b16 %v1388
        %v1437 = vunpack.c.l.b16 %v1389
        %v1438 = vunpack.c.l.b16 %v1390
        %v1439 = vunpack.c.l.b16 %v1391
        %v1440 = vunpack.c.l.b16 %v1392
        %v1441 = vunpack.c.l.b16 %v1393
        %v1442 = vunpack.c.l.b16 %v1394
        %v1443 = vunpack.c.l.b16 %v1395
        %v1444 = vpack.c.b16 %v1421, %v1420
        %v1445 = vpack.c.b16 %v1423, %v1422
        %v1446 = vpack.c.b16 %v1425, %v1424
        %v1447 = vpack.c.b16 %v1427, %v1426
        %v1448 = vpack.c.b16 %v1429, %v1428
        %v1449 = vpack.c.b16 %v1431, %v1430
        %v1450 = vpack.c.b16 %v1433, %v1432
        %v1451 = vpack.c.b16 %v1435, %v1434
        %v1452 = vpack.c.b16 %v1437, %v1436
        %v1453 = vpack.c.b16 %v1439, %v1438
        %v1454 = vpack.c.b16 %v1441, %v1440
        %v1455 = vpack.c.b16 %v1443, %v1442
        %v1469 = vsel %vm700, %v1367, 0
        %1471 = vmatprep.subr.bf16.mxu0 0
        %1472 = vmatpush1.bf16.msra.mxu0 %v1444
        %1473 = vmatprep.subr.bf16.mxu0 0
        %1474 = vmatpush1.bf16.msra.mxu0 %v1445
        %1475 = vmatprep.subr.bf16.mxu0 0
        %1476 = vmatpush1.bf16.msra.mxu0 %v1446
        %1477 = vmatprep.subr.bf16.mxu0 0
        %1478 = vmatpush1.bf16.msra.mxu0 %v1447
        %1479 = vmatprep.subr.bf16.mxu0 0
        %1480 = vmatpush1.bf16.msra.mxu0 %v1448
        %1481 = vmatprep.subr.bf16.mxu0 0
        %1482 = vmatpush1.bf16.msra.mxu0 %v1449
        %1483 = vmatprep.subr.bf16.mxu0 0
        %1484 = vmatpush1.bf16.msra.mxu0 %v1450
        %1485 = vmatprep.subr.bf16.mxu0 0
        %1486 = vmatpush1.bf16.msra.mxu0 %v1451
        %1487 = vmatprep.subr.bf16.mxu0 0
        %1488 = vmatpush1.bf16.msra.mxu0 %v1452
        %1489 = vmatprep.subr.bf16.mxu0 0
        %1490 = vmatpush1.bf16.msra.mxu0 %v1453
        %1491 = vmatprep.subr.bf16.mxu0 0
        %1492 = vmatpush1.bf16.msra.mxu0 %v1454
        %1493 = vmatprep.subr.bf16.mxu0 0
        %1494 = vmatpush1.bf16.msra.mxu0 %v1455
        %1495 = vmatprep.subr.bf16.mxu0 0
        %1496 = vmatpush1.bf16.msra.mxu0 0
        %1497 = vmatprep.subr.bf16.mxu0 0
        %1498 = vmatpush1.bf16.msra.mxu0 0
        %1499 = vmatprep.subr.bf16.mxu0 0
        %1500 = vmatpush1.bf16.msra.mxu0 0
        %1501 = vmatprep.subr.bf16.mxu0 0
        %1502 = vmatpush1.bf16.msra.mxu0 0
        %1503 = vmatprep.mubr.bf16.mxu0 %v902
        %1504 = vmatmul.mubr.bf16.gmra.mrb[0].mxu0 %v708
        %v1505 = vpop.f32.mrb[0].mxu0
        %v1506 = vadd.f32 0.0, %v1505
        %v1507 = vpop.f32.mrb[0].mxu0
        %v1508 = vpop.f32.mrb[0].mxu0
        %v1509 = vadd.f32 0.0, %v1508
        %v1510 = vpop.f32.mrb[0].mxu0
        %1511 = vmatprep.mubr.bf16.mxu0 %v905
        %1512 = vmatmul.mubr.bf16.gmra.mrb[0].mxu0 %v711
        %v1513 = vpop.f32.mrb[0].mxu0
        %v1514 = vadd.f32 0.0, %v1513
        %v1515 = vpop.f32.mrb[0].mxu0
        %v1516 = vpop.f32.mrb[0].mxu0
        %v1517 = vadd.f32 0.0, %v1516
        %v1518 = vpop.f32.mrb[0].mxu0
        %1519 = vmatprep.mubr.bf16.mxu0 %v908
        %1520 = vmatmul.mubr.bf16.gmra.mrb[0].mxu0 %v714
        %v1521 = vpop.f32.mrb[0].mxu0
        %v1522 = vadd.f32 0.0, %v1521
        %v1523 = vpop.f32.mrb[0].mxu0
        %v1524 = vpop.f32.mrb[0].mxu0
        %v1525 = vadd.f32 0.0, %v1524
        %v1526 = vpop.f32.mrb[0].mxu0
        %1527 = vmatprep.mubr.bf16.mxu0 %v911
        %1528 = vmatmul.mubr.bf16.gmra.mrb[0].mxu0 %v717
        %v1529 = vpop.f32.mrb[0].mxu0
        %v1530 = vadd.f32 0.0, %v1529
        %v1531 = vpop.f32.mrb[0].mxu0
        %v1532 = vpop.f32.mrb[0].mxu0
        %v1533 = vadd.f32 0.0, %v1532
        %v1534 = vpop.f32.mrb[0].mxu0
        %1535 = vmatprep.mubr.bf16.mxu0 %v914
        %1536 = vmatmul.mubr.bf16.gmra.mrb[0].mxu0 %v720
        %v1537 = vpop.f32.mrb[0].mxu0
        %v1538 = vadd.f32 0.0, %v1537
        %v1539 = vpop.f32.mrb[0].mxu0
        %v1540 = vpop.f32.mrb[0].mxu0
        %v1541 = vadd.f32 0.0, %v1540
        %v1542 = vpop.f32.mrb[0].mxu0
        %1543 = vmatprep.mubr.bf16.mxu0 %v917
        %1544 = vmatmul.mubr.bf16.gmra.mrb[0].mxu0 %v723
        %v1545 = vpop.f32.mrb[0].mxu0
        %v1546 = vadd.f32 0.0, %v1545
        %v1547 = vpop.f32.mrb[0].mxu0
        %v1548 = vpop.f32.mrb[0].mxu0
        %v1549 = vadd.f32 0.0, %v1548
        %v1550 = vpop.f32.mrb[0].mxu0
        %1551 = vmatprep.mubr.bf16.mxu0 %v920
        %1552 = vmatmul.mubr.bf16.gmra.mrb[0].mxu0 %v726
        %v1553 = vpop.f32.mrb[0].mxu0
        %v1554 = vadd.f32 0.0, %v1553
        %v1555 = vpop.f32.mrb[0].mxu0
        %v1556 = vpop.f32.mrb[0].mxu0
        %v1557 = vadd.f32 0.0, %v1556
        %v1558 = vpop.f32.mrb[0].mxu0
        %1559 = vmatprep.mubr.bf16.mxu0 %v923
        %1560 = vmatmul.mubr.bf16.gmra.mrb[0].mxu0 %v729
        %v1561 = vpop.f32.mrb[0].mxu0
        %v1562 = vadd.f32 0.0, %v1561
        %v1563 = vpop.f32.mrb[0].mxu0
        %v1564 = vpop.f32.mrb[0].mxu0
        %v1565 = vadd.f32 0.0, %v1564
        %v1566 = vpop.f32.mrb[0].mxu0
        %1567 = vmatprep.mubr.bf16.mxu0 %v926
        %1568 = vmatmul.mubr.bf16.gmra.mrb[0].mxu0 %v732
        %v1569 = vpop.f32.mrb[0].mxu0
        %v1570 = vadd.f32 0.0, %v1569
        %v1571 = vpop.f32.mrb[0].mxu0
        %v1572 = vpop.f32.mrb[0].mxu0
        %v1573 = vadd.f32 0.0, %v1572
        %v1574 = vpop.f32.mrb[0].mxu0
        %1575 = vmatprep.mubr.bf16.mxu0 %v929
        %1576 = vmatmul.mubr.bf16.gmra.mrb[0].mxu0 %v735
        %v1577 = vpop.f32.mrb[0].mxu0
        %v1578 = vadd.f32 0.0, %v1577
        %v1579 = vpop.f32.mrb[0].mxu0
        %v1580 = vpop.f32.mrb[0].mxu0
        %v1581 = vadd.f32 0.0, %v1580
        %v1582 = vpop.f32.mrb[0].mxu0
        %1583 = vmatprep.mubr.bf16.mxu0 %v932
        %1584 = vmatmul.mubr.bf16.gmra.mrb[0].mxu0 %v738
        %v1585 = vpop.f32.mrb[0].mxu0
        %v1586 = vadd.f32 0.0, %v1585
        %v1587 = vpop.f32.mrb[0].mxu0
        %v1588 = vpop.f32.mrb[0].mxu0
        %v1589 = vadd.f32 0.0, %v1588
        %v1590 = vpop.f32.mrb[0].mxu0
        %1591 = vmatprep.mubr.bf16.mxu0 %v935
        %1592 = vmatmul.mubr.bf16.gmra.mrb[0].mxu0 %v741
        %v1593 = vpop.f32.mrb[0].mxu0
        %v1594 = vadd.f32 0.0, %v1593
        %v1595 = vpop.f32.mrb[0].mxu0
        %v1596 = vpop.f32.mrb[0].mxu0
        %v1597 = vadd.f32 0.0, %v1596
        %v1598 = vpop.f32.mrb[0].mxu0
        %1599 = vmatprep.mubr.bf16.mxu0 %v938
        %1600 = vmatmul.mubr.bf16.gmra.mrb[0].mxu0 %v744
        %v1601 = vpop.f32.mrb[0].mxu0
        %v1602 = vadd.f32 0.0, %v1601
        %v1603 = vpop.f32.mrb[0].mxu0
        %v1604 = vpop.f32.mrb[0].mxu0
        %v1605 = vadd.f32 0.0, %v1604
        %v1606 = vpop.f32.mrb[0].mxu0
        %1607 = vmatprep.mubr.bf16.mxu0 %v941
        %1608 = vmatmul.mubr.bf16.gmra.mrb[0].mxu0 %v747
        %v1609 = vpop.f32.mrb[0].mxu0
        %v1610 = vadd.f32 0.0, %v1609
        %v1611 = vpop.f32.mrb[0].mxu0
        %v1612 = vpop.f32.mrb[0].mxu0
        %v1613 = vadd.f32 0.0, %v1612
        %v1614 = vpop.f32.mrb[0].mxu0
        %1615 = vmatprep.mubr.bf16.mxu0 %v944
        %1616 = vmatmul.mubr.bf16.gmra.mrb[0].mxu0 %v799
        %v1617 = vpop.f32.mrb[0].mxu0
        %v1618 = vadd.f32 0.0, %v1617
        %v1619 = vpop.f32.mrb[0].mxu0
        %v1620 = vpop.f32.mrb[0].mxu0
        %v1621 = vadd.f32 0.0, %v1620
        %v1622 = vpop.f32.mrb[0].mxu0
        %1623 = vmatprep.mubr.bf16.mxu0 %v1469
        %1624 = vmatmul.mubr.bf16.gmra.mrb[0].mxu0 %v1369
        %v1625 = vpop.f32.mrb[0].mxu0
        %v1626 = vadd.f32 0.0, %v1625
        %v1627 = vpop.f32.mrb[0].mxu0
        %v1628 = vpop.f32.mrb[0].mxu0
        %v1629 = vadd.f32 0.0, %v1628
        %v1630 = vpop.f32.mrb[0].mxu0
        %1631 = vdwg.mxu0
        %v1632 = vadd.f32 %v1217, %v1506
        %v1633 = vadd.f32 %v1220, %v1509
        %v1634 = vadd.f32 %v1225, %v1514
        %v1635 = vadd.f32 %v1228, %v1517
        %v1636 = vadd.f32 %v1233, %v1522
        %v1637 = vadd.f32 %v1236, %v1525
        %v1638 = vadd.f32 %v1241, %v1530
        %v1639 = vadd.f32 %v1244, %v1533
        %v1640 = vadd.f32 %v1249, %v1538
        %v1641 = vadd.f32 %v1252, %v1541
        %v1642 = vadd.f32 %v1257, %v1546
        %v1643 = vadd.f32 %v1260, %v1549
        %v1644 = vadd.f32 %v1265, %v1554
        %v1645 = vadd.f32 %v1268, %v1557
        %v1646 = vadd.f32 %v1273, %v1562
        %v1647 = vadd.f32 %v1276, %v1565
        %v1648 = vadd.f32 %v1281, %v1570
        %v1649 = vadd.f32 %v1284, %v1573
        %v1650 = vadd.f32 %v1289, %v1578
        %v1651 = vadd.f32 %v1292, %v1581
        %v1652 = vadd.f32 %v1297, %v1586
        %v1653 = vadd.f32 %v1300, %v1589
        %v1654 = vadd.f32 %v1305, %v1594
        %v1655 = vadd.f32 %v1308, %v1597
        %v1656 = vadd.f32 %v1313, %v1602
        %v1657 = vadd.f32 %v1316, %v1605
        %v1658 = vadd.f32 %v1321, %v1610
        %v1659 = vadd.f32 %v1324, %v1613
        %v1660 = vadd.f32 %v1329, %v1618
        %v1661 = vadd.f32 %v1332, %v1621
        %v1662 = vadd.f32 %v1337, %v1626
        %v1663 = vadd.f32 %v1340, %v1629
        %v1664 = vld [vmem:[%s2] sm:$0x1]
        %v1666 = vlaneseq
        %v1667 = vshrl.u32 %v1666, 7
        %v1668 = vsub.s32 0, %v1667
        %v1669 = vrot.slane %v1664, %v1668
        %v1671 = vmul.f32 %v1632, %v1669
        %v1672 = vmul.f32 %v1633, %v1669
        %v1673 = vmul.f32 %v1634, %v1669
        %v1674 = vmul.f32 %v1635, %v1669
        %v1675 = vmul.f32 %v1636, %v1669
        %v1676 = vmul.f32 %v1637, %v1669
        %v1677 = vmul.f32 %v1638, %v1669
        %v1678 = vmul.f32 %v1639, %v1669
        %v1679 = vmul.f32 %v1640, %v1669
        %v1680 = vmul.f32 %v1641, %v1669
        %v1681 = vmul.f32 %v1642, %v1669
        %v1682 = vmul.f32 %v1643, %v1669
        %v1683 = vmul.f32 %v1644, %v1669
        %v1684 = vmul.f32 %v1645, %v1669
        %v1685 = vmul.f32 %v1646, %v1669
        %v1686 = vmul.f32 %v1647, %v1669
        %v1687 = vmul.f32 %v1648, %v1669
        %v1688 = vmul.f32 %v1649, %v1669
        %v1689 = vmul.f32 %v1650, %v1669
        %v1690 = vmul.f32 %v1651, %v1669
        %v1691 = vmul.f32 %v1652, %v1669
        %v1692 = vmul.f32 %v1653, %v1669
        %v1693 = vmul.f32 %v1654, %v1669
        %v1694 = vmul.f32 %v1655, %v1669
        %v1695 = vmul.f32 %v1656, %v1669
        %v1696 = vmul.f32 %v1657, %v1669
        %v1697 = vmul.f32 %v1658, %v1669
        %v1698 = vmul.f32 %v1659, %v1669
        %v1699 = vmul.f32 %v1660, %v1669
        %v1700 = vmul.f32 %v1661, %v1669
        %v1701 = vmul.f32 %v1662, %v1669
        %v1702 = vmul.f32 %v1663, %v1669
        %v1703 = vld [vmem:[%s3] sm:$0x1]
        %v1705 = vlaneseq
        %v1706 = vshrl.u32 %v1705, 7
        %v1707 = vsub.s32 0, %v1706
        %v1708 = vrot.slane %v1703, %v1707
        %v1710 = vadd.f32 %v1671, %v1708
        %v1711 = vadd.f32 %v1672, %v1708
        %v1712 = vadd.f32 %v1673, %v1708
        %v1713 = vadd.f32 %v1674, %v1708
        %v1714 = vadd.f32 %v1675, %v1708
        %v1715 = vadd.f32 %v1676, %v1708
        %v1716 = vadd.f32 %v1677, %v1708
        %v1717 = vadd.f32 %v1678, %v1708
        %v1718 = vadd.f32 %v1679, %v1708
        %v1719 = vadd.f32 %v1680, %v1708
        %v1720 = vadd.f32 %v1681, %v1708
        %v1721 = vadd.f32 %v1682, %v1708
        %v1722 = vadd.f32 %v1683, %v1708
        %v1723 = vadd.f32 %v1684, %v1708
        %v1724 = vadd.f32 %v1685, %v1708
        %v1725 = vadd.f32 %v1686, %v1708
        %v1726 = vadd.f32 %v1687, %v1708
        %v1727 = vadd.f32 %v1688, %v1708
        %v1728 = vadd.f32 %v1689, %v1708
        %v1729 = vadd.f32 %v1690, %v1708
        %v1730 = vadd.f32 %v1691, %v1708
        %v1731 = vadd.f32 %v1692, %v1708
        %v1732 = vadd.f32 %v1693, %v1708
        %v1733 = vadd.f32 %v1694, %v1708
        %v1734 = vadd.f32 %v1695, %v1708
        %v1735 = vadd.f32 %v1696, %v1708
        %v1736 = vadd.f32 %v1697, %v1708
        %v1737 = vadd.f32 %v1698, %v1708
        %v1738 = vadd.f32 %v1699, %v1708
        %v1739 = vadd.f32 %v1700, %v1708
        %v1740 = vadd.f32 %v1701, %v1708
        %v1741 = vadd.f32 %v1702, %v1708
        %v1742 = vld [vmem:[%s242] sm:$0xff]
        %v1743 = vld [vmem:[%s242 + $0x8] sm:$0xff]
        %v1744 = vld [vmem:[%s242 + $0x10] sm:$0xff]
        %v1745 = vld [vmem:[%s242 + $0x18] sm:$0xff]
        %v1746 = vld [vmem:[%s242 + $0x20] sm:$0xff]
        %v1747 = vld [vmem:[%s242 + $0x28] sm:$0xff]
        %v1748 = vld [vmem:[%s242 + $0x30] sm:$0xff]
        %v1749 = vld [vmem:[%s242 + $0x38] sm:$0xff]
        %v1750 = vld [vmem:[%s242 + $0x40] sm:$0xff]
        %v1751 = vld [vmem:[%s242 + $0x48] sm:$0xff]
        %v1752 = vld [vmem:[%s242 + $0x50] sm:$0xff]
        %v1753 = vld [vmem:[%s242 + $0x58] sm:$0xff]
        %v1754 = vld [vmem:[%s242 + $0x60] sm:$0xff]
        %v1755 = vld [vmem:[%s242 + $0x68] sm:$0xff]
        %v1756 = vld [vmem:[%s242 + $0x70] sm:$0xff]
        %v1757 = vld [vmem:[%s242 + $0x78] sm:$0xff]
        %v1758 = vld [vmem:[%s242 + $0x80] sm:$0xff]
        %v1759 = vld [vmem:[%s242 + $0x88] sm:$0xff]
        %v1760 = vld [vmem:[%s242 + $0x90] sm:$0xff]
        %v1761 = vld [vmem:[%s242 + $0x98] sm:$0xff]
        %v1762 = vld [vmem:[%s242 + $0xa0] sm:$0xff]
        %v1763 = vld [vmem:[%s242 + $0xa8] sm:$0xff]
        %v1764 = vld [vmem:[%s242 + $0xb0] sm:$0xff]
        %v1765 = vld [vmem:[%s242 + $0xb8] sm:$0xff]
        %v1766 = vld [vmem:[%s242 + $0xc0] sm:$0xff]
        %v1767 = vld [vmem:[%s242 + $0xc8] sm:$0xff]
        %v1768 = vld [vmem:[%s242 + $0xd0] sm:$0xff]
        %v1769 = vld [vmem:[%s242 + $0xd8] sm:$0xff]
        %v1770 = vld [vmem:[%s242 + $0xe0] sm:$0xff]
        %v1771 = vld [vmem:[%s242 + $0xe8] sm:$0xff]
        %v1772 = vld [vmem:[%s242 + $0xf0] sm:$0xff]
        %v1773 = vld [vmem:[%s242 + $0xf8] sm:$0xff]
        %v1774 = vadd.f32 %v1710, %v1742
        %v1775 = vadd.f32 %v1711, %v1743
        %v1776 = vadd.f32 %v1712, %v1744
        %v1777 = vadd.f32 %v1713, %v1745
        %v1778 = vadd.f32 %v1714, %v1746
        %v1779 = vadd.f32 %v1715, %v1747
        %v1780 = vadd.f32 %v1716, %v1748
        %v1781 = vadd.f32 %v1717, %v1749
        %v1782 = vadd.f32 %v1718, %v1750
        %v1783 = vadd.f32 %v1719, %v1751
        %v1784 = vadd.f32 %v1720, %v1752
        %v1785 = vadd.f32 %v1721, %v1753
        %v1786 = vadd.f32 %v1722, %v1754
        %v1787 = vadd.f32 %v1723, %v1755
        %v1788 = vadd.f32 %v1724, %v1756
        %v1789 = vadd.f32 %v1725, %v1757
        %v1790 = vadd.f32 %v1726, %v1758
        %v1791 = vadd.f32 %v1727, %v1759
        %v1792 = vadd.f32 %v1728, %v1760
        %v1793 = vadd.f32 %v1729, %v1761
        %v1794 = vadd.f32 %v1730, %v1762
        %v1795 = vadd.f32 %v1731, %v1763
        %v1796 = vadd.f32 %v1732, %v1764
        %v1797 = vadd.f32 %v1733, %v1765
        %v1798 = vadd.f32 %v1734, %v1766
        %v1799 = vadd.f32 %v1735, %v1767
        %v1800 = vadd.f32 %v1736, %v1768
        %v1801 = vadd.f32 %v1737, %v1769
        %v1802 = vadd.f32 %v1738, %v1770
        %v1803 = vadd.f32 %v1739, %v1771
        %v1804 = vadd.f32 %v1740, %v1772
        %v1805 = vadd.f32 %v1741, %v1773
        %v1806 = vmax.f32 %v1774, 0.0
        %v1807 = vmax.f32 %v1775, 0.0
        %v1808 = vmax.f32 %v1776, 0.0
        %v1809 = vmax.f32 %v1777, 0.0
        %v1810 = vmax.f32 %v1778, 0.0
        %v1811 = vmax.f32 %v1779, 0.0
        %v1812 = vmax.f32 %v1780, 0.0
        %v1813 = vmax.f32 %v1781, 0.0
        %v1814 = vmax.f32 %v1782, 0.0
        %v1815 = vmax.f32 %v1783, 0.0
        %v1816 = vmax.f32 %v1784, 0.0
        %v1817 = vmax.f32 %v1785, 0.0
        %v1818 = vmax.f32 %v1786, 0.0
        %v1819 = vmax.f32 %v1787, 0.0
        %v1820 = vmax.f32 %v1788, 0.0
        %v1821 = vmax.f32 %v1789, 0.0
        %v1822 = vmax.f32 %v1790, 0.0
        %v1823 = vmax.f32 %v1791, 0.0
        %v1824 = vmax.f32 %v1792, 0.0
        %v1825 = vmax.f32 %v1793, 0.0
        %v1826 = vmax.f32 %v1794, 0.0
        %v1827 = vmax.f32 %v1795, 0.0
        %v1828 = vmax.f32 %v1796, 0.0
        %v1829 = vmax.f32 %v1797, 0.0
        %v1830 = vmax.f32 %v1798, 0.0
        %v1831 = vmax.f32 %v1799, 0.0
        %v1832 = vmax.f32 %v1800, 0.0
        %v1833 = vmax.f32 %v1801, 0.0
        %v1834 = vmax.f32 %v1802, 0.0
        %v1835 = vmax.f32 %v1803, 0.0
        %v1836 = vmax.f32 %v1804, 0.0
        %v1837 = vmax.f32 %v1805, 0.0
        %1838 = vst.msk [vmem:[%s232] sm:$0xff] %vm700, %v1806
        %1839 = vst.msk [vmem:[%s232 + $0x8] sm:$0xff] %vm700, %v1807
        %1840 = vst.msk [vmem:[%s232 + $0x10] sm:$0xff] %vm700, %v1808
        %1841 = vst.msk [vmem:[%s232 + $0x18] sm:$0xff] %vm700, %v1809
        %1842 = vst.msk [vmem:[%s232 + $0x20] sm:$0xff] %vm700, %v1810
        %1843 = vst.msk [vmem:[%s232 + $0x28] sm:$0xff] %vm700, %v1811
        %1844 = vst.msk [vmem:[%s232 + $0x30] sm:$0xff] %vm700, %v1812
        %1845 = vst.msk [vmem:[%s232 + $0x38] sm:$0xff] %vm700, %v1813
        %1846 = vst.msk [vmem:[%s232 + $0x40] sm:$0xff] %vm700, %v1814
        %1847 = vst.msk [vmem:[%s232 + $0x48] sm:$0xff] %vm700, %v1815
        %1848 = vst.msk [vmem:[%s232 + $0x50] sm:$0xff] %vm700, %v1816
        %1849 = vst.msk [vmem:[%s232 + $0x58] sm:$0xff] %vm700, %v1817
        %1850 = vst.msk [vmem:[%s232 + $0x60] sm:$0xff] %vm700, %v1818
        %1851 = vst.msk [vmem:[%s232 + $0x68] sm:$0xff] %vm700, %v1819
        %1852 = vst.msk [vmem:[%s232 + $0x70] sm:$0xff] %vm700, %v1820
        %1853 = vst.msk [vmem:[%s232 + $0x78] sm:$0xff] %vm700, %v1821
        %1854 = vst.msk [vmem:[%s232 + $0x80] sm:$0xff] %vm700, %v1822
        %1855 = vst.msk [vmem:[%s232 + $0x88] sm:$0xff] %vm700, %v1823
        %1856 = vst.msk [vmem:[%s232 + $0x90] sm:$0xff] %vm700, %v1824
        %1857 = vst.msk [vmem:[%s232 + $0x98] sm:$0xff] %vm700, %v1825
        %1858 = vst.msk [vmem:[%s232 + $0xa0] sm:$0xff] %vm700, %v1826
        %1859 = vst.msk [vmem:[%s232 + $0xa8] sm:$0xff] %vm700, %v1827
        %1860 = vst.msk [vmem:[%s232 + $0xb0] sm:$0xff] %vm700, %v1828
        %1861 = vst.msk [vmem:[%s232 + $0xb8] sm:$0xff] %vm700, %v1829
        %1862 = vst.msk [vmem:[%s232 + $0xc0] sm:$0xff] %vm700, %v1830
        %1863 = vst.msk [vmem:[%s232 + $0xc8] sm:$0xff] %vm700, %v1831
        %1864 = vst.msk [vmem:[%s232 + $0xd0] sm:$0xff] %vm700, %v1832
        %1865 = vst.msk [vmem:[%s232 + $0xd8] sm:$0xff] %vm700, %v1833
        %1866 = vst.msk [vmem:[%s232 + $0xe0] sm:$0xff] %vm700, %v1834
        %1867 = vst.msk [vmem:[%s232 + $0xe8] sm:$0xff] %vm700, %v1835
        %1868 = vst.msk [vmem:[%s232 + $0xf0] sm:$0xff] %vm700, %v1836
        %1869 = vst.msk [vmem:[%s232 + $0xf8] sm:$0xff] %vm700, %v1837
        %s1870 = sand.u32 %s142, 1
        %s1871 = scalar_lea.sflag [#allocation3], %s1870
        %s1872 = sand.u32 %s142, 1
        %s1873 = smul.addr %s1872, 256
        %s1874 = scalar_lea.vmem [#allocation2], %s1873
        // Predicated region
        $region41: #{_lambda_.3} parent=39 // pred_check
          %p1875 = pneg %p152
        $region42: #{_lambda_.3} parent=39 // pred_check_branch
          %1877 = sbr.rel (%p1875) target = $region44
        $region43: #{_lambda_.3} parent=39 // pred_region
          %s1879 = ssub.s32 4096, 4096
          %1880 = vsyncadd %s1871, %s1879
          %s1881 = smul.addr %s19, 32
          %s1882 = smul.addr %s1881, 128
          %s1883 = scalar_lea.hbm %s5, %s1882
          %s1884 = sshll.u32 %s1874, 4
          %s1885 = int_to_ptr.vmem [resolvable:$true] %s1884
          %1890 = dma.vmem_to_hbm [thread:$0]  %s1885, 4096, %s1883, %s1871, 128, 128, 8
        $region44: #{_lambda_.3} parent=39 // pred_fallthru
          _
      $region40: #{_lambda_.3} parent=5 // pred_fallthru
        _
      %p1891 = scmp.le.s32.totalorder 2, %s14
      // Predicated region
      $region45: #{_lambda_.3} parent=5 // pred_check
        %p1892 = pneg %p1891
      $region46: #{_lambda_.3} parent=5 // pred_check_branch
        %1894 = sbr.rel (%p1892) target = $region48
      $region47: #{_lambda_.3} parent=5 // pred_region
        %s1895 = ssub.s32 %s14, 2
        // Predicated region
        $region49: #{_lambda_.3} parent=47 // pred_check
          %p1896 = pneg %p158
        $region50: #{_lambda_.3} parent=47 // pred_check_branch
          %1898 = sbr.rel (%p1896) target = $region52
        $region51: #{_lambda_.3} parent=47 // pred_region
          %s1899 = sand.u32 %s143, 1
          %s1900 = scalar_lea.sflag [#allocation3], %s1899
          %s1901 = sand.u32 %s143, 1
          %s1902 = smul.addr %s1901, 256
          %s1903 = scalar_lea.vmem [#allocation2], %s1902
          %1904 = dma.done %s1900, 4096
        $region52: #{_lambda_.3} parent=47 // pred_fallthru
          _
      $region48: #{_lambda_.3} parent=5 // pred_fallthru
        _
    $region6: #{_lambda_.3} parent=1 // loop_footer
      %s18 = sadd.s32 1, %s14
    $region7: #{_lambda_.3} parent=1 // loop_footer_branch
      %13 = sbr.rel target = $region3
    $region8: #{_lambda_.3} parent=1 // loop_exit
      _
    %1905 = vsyncpa [#allocation3], 1
    %s1906 = scalar_lea.sflag [#allocation3], 1
    %1907 = vsyncpa %s1906, 1

</llo_original>
